<compile_context>
chip_gen: v6e
topology: v6e:2x2x1
jax: 0.10.0
libtpu: 0.0.40
codegen_flags: <defaults>
</compile_context>

<pallas_src>
import jax
import jax.numpy as jnp
from jax.experimental import pallas as pl
from jax.experimental.pallas import tpu as pltpu


def decoder_lstm_kernel(xw0_ref, whh0_ref, wih1_ref, whh1_ref, b1_ref,
                        wlin_ref, blin_ref, out_ref, h2_ref):
    """xw0_ref: (T+1, B, 4H) precomputed x@Wih0 + b0 (time-major).
       whh0/wih1/whh1: (H, 4H); b1: (B, 4H); wlin: (H, tv); blin: (1, tv).
       out_ref: (T*B, tv) logits for this V tile.  h2_ref: (T1*B, H) scratch."""
    T1, B, H4 = xw0_ref.shape
    H = H4 // 4
    T = T1 - 1

    # ---- phase 1: the serial LSTM recurrence (only at the first grid step;
    #      its h2 scratch persists across the V-tile grid) ----
    @pl.when(pl.program_id(0) == 0)
    def _recurrence():
        whh0 = whh0_ref[...]
        wih1 = wih1_ref[...]
        whh1 = whh1_ref[...]
        b1 = b1_ref[...]                      # (B, 4H), pre-broadcast in wrapper

        # lane mask selecting the g-gate lanes (PyTorch gate order i, f, g, o)
        lane = jax.lax.broadcasted_iota(jnp.int32, (B, H4), dimension=1)
        g_lanes = (lane >= 2 * H) & (lane < 3 * H)

        def act_and_update(gates, c):
            # full-width activation pass (tanh on g lanes, sigmoid elsewhere)
            a = jnp.where(g_lanes, jnp.tanh(gates), jax.nn.sigmoid(gates))
            i = a[:, 0 * H:1 * H]
            f = a[:, 1 * H:2 * H]
            g = a[:, 2 * H:3 * H]
            o = a[:, 3 * H:4 * H]
            c_new = f * c + i * g
            h_new = o * jnp.tanh(c_new)
            return h_new, c_new

        def step(t, carry):
            h1, c1, h2, c2 = carry
            # layer 0: input projection was precomputed; only the recurrent
            # matmul sits on the critical path.
            g0 = xw0_ref[t] + jnp.dot(h1, whh0,
                                      preferred_element_type=jnp.float32)
            h1, c1 = act_and_update(g0, c1)
            # inter-layer dropout(0.5) -> identity (eval mode)
            # layer 1
            g1 = (jnp.dot(h1, wih1, preferred_element_type=jnp.float32)
                  + jnp.dot(h2, whh1, preferred_element_type=jnp.float32)
                  + b1)
            h2, c2 = act_and_update(g1, c2)
            # stage h2 for the batched post-loop projection
            row = pl.multiple_of(t * B, B)
            h2_ref[pl.ds(row, B), :] = h2
            return (h1, c1, h2, c2)

        z = jnp.zeros((B, H), jnp.float32)
        jax.lax.fori_loop(0, T1, step, (z, z, z, z), unroll=True)

    # ---- phase 2: batched output projection for this V tile ----
    # self.dropout(0.4) -> identity (eval mode).  Skip the t=0 step entirely
    # (it is discarded by output[:, 1:]).
    h2_kept = h2_ref[pl.ds(B, T * B), :]                     # (T*B, H)
    logits = (jnp.dot(h2_kept, wlin_ref[...],
                      preferred_element_type=jnp.float32)
              + blin_ref[...])
    out_ref[...] = logits.astype(out_ref.dtype)


def _pick_v_tile(V):
    """V tile for streaming the projection/output (multiple of 128, <= 2048)."""
    if V % 128 != 0:
        return V
    tv = 128
    while tv * 2 <= 2048 and V % (tv * 2) == 0:
        tv *= 2
    return tv


@jax.jit
def decoder_rnn_forward(features, captions, params):
    """features: (B, E) f32, captions: (B, T) int32 -> (B, T, V) f32."""
    B, E = features.shape
    T = captions.shape[1]
    T1 = T + 1
    H = params["whh0"].shape[1]          # whh0 is (4H, H)
    V = params["lin_w"].shape[0]         # lin_w is (V, H)

    # --- glue in plain JAX: embedding gather + concat + time-major layout ---
    emb = jnp.take(params["embed_w"], captions, axis=0)              # (B, T, E)
    inputs = jnp.concatenate([features[:, None, :], emb], axis=1)    # (B, T1, E)
    x_tm = jnp.transpose(inputs, (1, 0, 2)).astype(jnp.float32)      # (T1, B, E)

    # Hoisted layer-0 input projection: one batched matmul for all timesteps,
    # with the layer-0 bias folded in (removes T+1 tiny matmuls + bias adds
    # from the serial recurrence inside the kernel).
    b0 = (params["bih0"] + params["bhh0"]).astype(jnp.float32)        # (4H,)
    xw0 = (x_tm @ params["wih0"].T.astype(jnp.float32)) + b0          # (T1, B, 4H)

    # Pre-transposed recurrent / projection weights (feature dim on lanes).
    whh0T = params["whh0"].T.astype(jnp.float32)                      # (H, 4H)
    wih1T = params["wih1"].T.astype(jnp.float32)                      # (H, 4H)
    whh1T = params["whh1"].T.astype(jnp.float32)                      # (H, 4H)
    b1 = jnp.broadcast_to((params["bih1"] + params["bhh1"]).astype(jnp.float32),
                          (B, 4 * H))                                 # (B, 4H)
    wlinT = params["lin_w"].T.astype(jnp.float32)                     # (H, V)
    blin = params["lin_b"].reshape(1, V).astype(jnp.float32)          # (1, V)

    tv = _pick_v_tile(V)
    nv = V // tv

    out2d = pl.pallas_call(
        decoder_lstm_kernel,
        out_shape=jax.ShapeDtypeStruct((T * B, V), jnp.float32),
        grid=(nv,),
        in_specs=[
            pl.BlockSpec((T1, B, 4 * H), lambda j: (0, 0, 0)),   # xw0 (resident)
            pl.BlockSpec((H, 4 * H), lambda j: (0, 0)),          # whh0
            pl.BlockSpec((H, 4 * H), lambda j: (0, 0)),          # wih1
            pl.BlockSpec((H, 4 * H), lambda j: (0, 0)),          # whh1
            pl.BlockSpec((B, 4 * H), lambda j: (0, 0)),          # b1
            pl.BlockSpec((H, tv), lambda j: (0, j)),             # wlin V tile
            pl.BlockSpec((1, tv), lambda j: (0, j)),             # blin V tile
        ],
        out_specs=pl.BlockSpec((T * B, tv), lambda j: (0, j)),
        scratch_shapes=[pltpu.VMEM((T1 * B, H), jnp.float32)],   # staged h2
        compiler_params=pltpu.CompilerParams(
            dimension_semantics=("arbitrary",)),
    )(xw0, whh0T, wih1T, whh1T, b1, wlinT, blin)

    out = out2d.reshape(T, B, V)              # free (metadata) reshape
    return jnp.transpose(out, (1, 0, 2))      # (B, T, V) == output[:, 1:]


def _reference_forward(features, captions, params):
    """Pure-JAX reference of the same eval-mode forward pass."""
    B, E = features.shape
    T = captions.shape[1]
    H = params["whh0"].shape[1]
    emb = jnp.take(params["embed_w"], captions, axis=0)
    x = jnp.concatenate([features[:, None, :], emb], axis=1)    # (B, T+1, E)

    def cell(x_t, h, c, wih, whh, bih, bhh):
        gates = x_t @ wih.T + bih + h @ whh.T + bhh
        i = jax.nn.sigmoid(gates[:, 0 * H:1 * H])
        f = jax.nn.sigmoid(gates[:, 1 * H:2 * H])
        g = jnp.tanh(gates[:, 2 * H:3 * H])
        o = jax.nn.sigmoid(gates[:, 3 * H:4 * H])
        c = f * c + i * g
        return o * jnp.tanh(c), c

    h1 = c1 = h2 = c2 = jnp.zeros((B, H), jnp.float32)
    outs = []
    for t in range(T + 1):
        h1, c1 = cell(x[:, t], h1, c1, params["wih0"], params["whh0"],
                      params["bih0"], params["bhh0"])
        h2, c2 = cell(h1, h2, c2, params["wih1"], params["whh1"],
                      params["bih1"], params["bhh1"])
        outs.append(h2 @ params["lin_w"].T + params["lin_b"])
    out = jnp.stack(outs, axis=1)
    return out[:, 1:]


def init_params(key, embed_size, hidden_size, vocab_size):
    """Deterministic init mirroring DecoderRNN.__init__ / init_weights shapes."""
    E, H, V = embed_size, hidden_size, vocab_size
    ks = jax.random.split(key, 12)
    initrange = 0.1
    stdv = 1.0 / (H ** 0.5)   # PyTorch nn.LSTM default init range

    def u(k, shape, lo, hi):
        return jax.random.uniform(k, shape, jnp.float32, lo, hi)

    return {
        "embed_w": u(ks[0], (V, E), -initrange, initrange),
        # LSTM layer 0
        "wih0": u(ks[1], (4 * H, E), -stdv, stdv),
        "whh0": u(ks[2], (4 * H, H), -stdv, stdv),
        "bih0": u(ks[3], (4 * H,), -stdv, stdv),
        "bhh0": u(ks[4], (4 * H,), -stdv, stdv),
        # LSTM layer 1
        "wih1": u(ks[5], (4 * H, H), -stdv, stdv),
        "whh1": u(ks[6], (4 * H, H), -stdv, stdv),
        "bih1": u(ks[7], (4 * H,), -stdv, stdv),
        "bhh1": u(ks[8], (4 * H,), -stdv, stdv),
        # Linear
        "lin_w": u(ks[9], (V, H), -initrange, initrange),
        "lin_b": jnp.zeros((V,), jnp.float32),
    }


if __name__ == "__main__":
    B, T = 8, 8
    E, H, V = 32, 32, 128   # embed_size, hidden_size, vocab_size

    key = jax.random.PRNGKey(0)
    kp, kf, kc = jax.random.split(key, 3)
    params = init_params(kp, E, H, V)
    features = jax.random.normal(kf, (B, E), jnp.float32)
    captions = jax.random.randint(kc, (B, T), 0, V, jnp.int32)

    out = decoder_rnn_forward(features, captions, params)
    out = jax.block_until_ready(out)
    assert out.shape == (B, T, V), out.shape

    ref = _reference_forward(features, captions, params)
    assert jnp.allclose(out, ref, atol=1e-4, rtol=1e-4), "mismatch vs reference"

    print("KERNEL_OK")
</pallas_src>

<mosaic_0001>
module attributes {stable_mosaic.version = 11 : i64} {
  func.func @decoder_lstm_kernel(%arg0: i32, %arg1: memref<9x8x128xf32, #tpu.memory_space<vmem>>, %arg2: memref<32x128xf32, #tpu.memory_space<vmem>>, %arg3: memref<32x128xf32, #tpu.memory_space<vmem>>, %arg4: memref<32x128xf32, #tpu.memory_space<vmem>>, %arg5: memref<8x128xf32, #tpu.memory_space<vmem>>, %arg6: memref<32x128xf32, #tpu.memory_space<vmem>>, %arg7: memref<1x128xf32, #tpu.memory_space<vmem>>, %arg8: memref<64x128xf32, #tpu.memory_space<vmem>>, %arg9: memref<72x32xf32, #tpu.memory_space<vmem>>) attributes {dimension_semantics = [#tpu.dimension_semantics<arbitrary>], iteration_bounds = array<i64: 1>, scalar_prefetch = 0 : i64, scratch_operands = 1 : i64, tpu.core_type = #tpu.core_type<tc>, window_params = [{pipeline_mode = #tpu.pipeline_mode<synchronous>, transform_indices = @transform_0, window_bounds = array<i64: 9, 8, 128>}, {pipeline_mode = #tpu.pipeline_mode<synchronous>, transform_indices = @transform_1, window_bounds = array<i64: 32, 128>}, {pipeline_mode = #tpu.pipeline_mode<synchronous>, transform_indices = @transform_2, window_bounds = array<i64: 32, 128>}, {pipeline_mode = #tpu.pipeline_mode<synchronous>, transform_indices = @transform_3, window_bounds = array<i64: 32, 128>}, {pipeline_mode = #tpu.pipeline_mode<synchronous>, transform_indices = @transform_4, window_bounds = array<i64: 8, 128>}, {transform_indices = @transform_5, window_bounds = array<i64: 32, 128>}, {transform_indices = @transform_6, window_bounds = array<i64: 1, 128>}, {transform_indices = @transform_7, window_bounds = array<i64: 64, 128>}]} {
    %c0_i32 = arith.constant 0 : i32
    %0 = arith.cmpi eq, %arg0, %c0_i32 : i32
    %1 = arith.extui %0 : i1 to i32
    %c0_i32_0 = arith.constant 0 : i32
    %2 = arith.cmpi ne, %1, %c0_i32_0 : i32
    scf.if %2 {
      %c0_7 = arith.constant 0 : index
      %c0_8 = arith.constant 0 : index
      %10 = vector.load %arg2[%c0_7, %c0_8] : memref<32x128xf32, #tpu.memory_space<vmem>>, vector<32x128xf32>
      %c0_9 = arith.constant 0 : index
      %c0_10 = arith.constant 0 : index
      %11 = vector.load %arg3[%c0_9, %c0_10] : memref<32x128xf32, #tpu.memory_space<vmem>>, vector<32x128xf32>
      %c0_11 = arith.constant 0 : index
      %c0_12 = arith.constant 0 : index
      %12 = vector.load %arg4[%c0_11, %c0_12] : memref<32x128xf32, #tpu.memory_space<vmem>>, vector<32x128xf32>
      %c0_13 = arith.constant 0 : index
      %c0_14 = arith.constant 0 : index
      %13 = vector.load %arg5[%c0_13, %c0_14] : memref<8x128xf32, #tpu.memory_space<vmem>>, vector<8x128xf32>
      %14 = tpu.iota {dimensions = array<i32: 1>} : vector<8x128xi32>
      %c64_i32 = arith.constant 64 : i32
      %15 = vector.broadcast %c64_i32 : i32 to vector<8x128xi32>
      %16 = arith.cmpi sge, %14, %15 : vector<8x128xi32>
      %c96_i32 = arith.constant 96 : i32
      %17 = vector.broadcast %c96_i32 : i32 to vector<8x128xi32>
      %18 = arith.cmpi slt, %14, %17 : vector<8x128xi32>
      %19 = arith.andi %16, %18 : vector<8x128xi1>
      %cst_15 = arith.constant 0.000000e+00 : f32
      %20 = vector.broadcast %cst_15 : f32 to vector<8x32xf32>
      %c0_i32_16 = arith.constant 0 : i32
      %21 = arith.index_cast %c0_i32_16 : i32 to index
      %c0_17 = arith.constant 0 : index
      %c0_18 = arith.constant 0 : index
      %22 = vector.load %arg1[%21, %c0_17, %c0_18] : memref<9x8x128xf32, #tpu.memory_space<vmem>>, vector<1x8x128xf32>
      %23 = vector.shape_cast %22 : vector<1x8x128xf32> to vector<8x128xf32>
      %cst_19 = arith.constant dense<0.000000e+00> : vector<8x128xf32>
      %24 = tpu.matmul %20, %10, %cst_19 {dimension_numbers = #tpu.dot_dimension_numbers<[1], [0], [0], [1], [0, 0, 1, 1], [], []>} : vector<8x32xf32>, vector<32x128xf32>, vector<8x128xf32> -> vector<8x128xf32>
      %25 = arith.addf %23, %24 : vector<8x128xf32>
      %26 = math.tanh %25 : vector<8x128xf32>
      %27 = arith.negf %25 : vector<8x128xf32>
      %28 = math.exp %27 : vector<8x128xf32>
      %cst_20 = arith.constant 1.000000e+00 : f32
      %29 = vector.broadcast %cst_20 : f32 to vector<8x128xf32>
      %30 = arith.addf %29, %28 : vector<8x128xf32>
      %31 = arith.divf %29, %30 : vector<8x128xf32>
      %32 = arith.select %19, %26, %31 : vector<8x128xi1>, vector<8x128xf32>
      %33 = vector.extract_strided_slice %32 {offsets = [0, 0], sizes = [8, 32], strides = [1, 1]} : vector<8x128xf32> to vector<8x32xf32>
      %34 = vector.extract_strided_slice %32 {offsets = [0, 32], sizes = [8, 32], strides = [1, 1]} : vector<8x128xf32> to vector<8x32xf32>
      %35 = vector.extract_strided_slice %32 {offsets = [0, 64], sizes = [8, 32], strides = [1, 1]} : vector<8x128xf32> to vector<8x32xf32>
      %36 = vector.extract_strided_slice %32 {offsets = [0, 96], sizes = [8, 32], strides = [1, 1]} : vector<8x128xf32> to vector<8x32xf32>
      %37 = arith.mulf %34, %20 : vector<8x32xf32>
      %38 = arith.mulf %33, %35 : vector<8x32xf32>
      %39 = arith.addf %37, %38 : vector<8x32xf32>
      %40 = math.tanh %39 : vector<8x32xf32>
      %41 = arith.mulf %36, %40 : vector<8x32xf32>
      %cst_21 = arith.constant dense<0.000000e+00> : vector<8x128xf32>
      %42 = tpu.matmul %41, %11, %cst_21 {dimension_numbers = #tpu.dot_dimension_numbers<[1], [0], [0], [1], [0, 0, 1, 1], [], []>} : vector<8x32xf32>, vector<32x128xf32>, vector<8x128xf32> -> vector<8x128xf32>
      %cst_22 = arith.constant dense<0.000000e+00> : vector<8x128xf32>
      %43 = tpu.matmul %20, %12, %cst_22 {dimension_numbers = #tpu.dot_dimension_numbers<[1], [0], [0], [1], [0, 0, 1, 1], [], []>} : vector<8x32xf32>, vector<32x128xf32>, vector<8x128xf32> -> vector<8x128xf32>
      %44 = arith.addf %42, %43 : vector<8x128xf32>
      %45 = arith.addf %44, %13 : vector<8x128xf32>
      %46 = math.tanh %45 : vector<8x128xf32>
      %47 = arith.negf %45 : vector<8x128xf32>
      %48 = math.exp %47 : vector<8x128xf32>
      %cst_23 = arith.constant 1.000000e+00 : f32
      %49 = vector.broadcast %cst_23 : f32 to vector<8x128xf32>
      %50 = arith.addf %49, %48 : vector<8x128xf32>
      %51 = arith.divf %49, %50 : vector<8x128xf32>
      %52 = arith.select %19, %46, %51 : vector<8x128xi1>, vector<8x128xf32>
      %53 = vector.extract_strided_slice %52 {offsets = [0, 0], sizes = [8, 32], strides = [1, 1]} : vector<8x128xf32> to vector<8x32xf32>
      %54 = vector.extract_strided_slice %52 {offsets = [0, 32], sizes = [8, 32], strides = [1, 1]} : vector<8x128xf32> to vector<8x32xf32>
      %55 = vector.extract_strided_slice %52 {offsets = [0, 64], sizes = [8, 32], strides = [1, 1]} : vector<8x128xf32> to vector<8x32xf32>
      %56 = vector.extract_strided_slice %52 {offsets = [0, 96], sizes = [8, 32], strides = [1, 1]} : vector<8x128xf32> to vector<8x32xf32>
      %57 = arith.mulf %54, %20 : vector<8x32xf32>
      %58 = arith.mulf %53, %55 : vector<8x32xf32>
      %59 = arith.addf %57, %58 : vector<8x32xf32>
      %60 = math.tanh %59 : vector<8x32xf32>
      %61 = arith.mulf %56, %60 : vector<8x32xf32>
      %c8_i32 = arith.constant 8 : i32
      %62 = arith.muli %c0_i32_16, %c8_i32 : i32
      %63 = tpu.assume_multiple %62, 8 : i32
      %64 = arith.index_cast %63 : i32 to index
      %c0_24 = arith.constant 0 : index
      %65 = vector.load %arg9[%64, %c0_24] : memref<72x32xf32, #tpu.memory_space<vmem>>, vector<8x32xf32>
      tpu.vector_store %arg9[%64, %c0_24], %61 {strides = array<i32>} : memref<72x32xf32, #tpu.memory_space<vmem>>, vector<8x32xf32>,
      %c1_i32 = arith.constant 1 : i32
      %66 = arith.index_cast %c1_i32 : i32 to index
      %c0_25 = arith.constant 0 : index
      %c0_26 = arith.constant 0 : index
      %67 = vector.load %arg1[%66, %c0_25, %c0_26] : memref<9x8x128xf32, #tpu.memory_space<vmem>>, vector<1x8x128xf32>
      %68 = vector.shape_cast %67 : vector<1x8x128xf32> to vector<8x128xf32>
      %cst_27 = arith.constant dense<0.000000e+00> : vector<8x128xf32>
      %69 = tpu.matmul %41, %10, %cst_27 {dimension_numbers = #tpu.dot_dimension_numbers<[1], [0], [0], [1], [0, 0, 1, 1], [], []>} : vector<8x32xf32>, vector<32x128xf32>, vector<8x128xf32> -> vector<8x128xf32>
      %70 = arith.addf %68, %69 : vector<8x128xf32>
      %71 = math.tanh %70 : vector<8x128xf32>
      %72 = arith.negf %70 : vector<8x128xf32>
      %73 = math.exp %72 : vector<8x128xf32>
      %cst_28 = arith.constant 1.000000e+00 : f32
      %74 = vector.broadcast %cst_28 : f32 to vector<8x128xf32>
      %75 = arith.addf %74, %73 : vector<8x128xf32>
      %76 = arith.divf %74, %75 : vector<8x128xf32>
      %77 = arith.select %19, %71, %76 : vector<8x128xi1>, vector<8x128xf32>
      %78 = vector.extract_strided_slice %77 {offsets = [0, 0], sizes = [8, 32], strides = [1, 1]} : vector<8x128xf32> to vector<8x32xf32>
      %79 = vector.extract_strided_slice %77 {offsets = [0, 32], sizes = [8, 32], strides = [1, 1]} : vector<8x128xf32> to vector<8x32xf32>
      %80 = vector.extract_strided_slice %77 {offsets = [0, 64], sizes = [8, 32], strides = [1, 1]} : vector<8x128xf32> to vector<8x32xf32>
      %81 = vector.extract_strided_slice %77 {offsets = [0, 96], sizes = [8, 32], strides = [1, 1]} : vector<8x128xf32> to vector<8x32xf32>
      %82 = arith.mulf %79, %39 : vector<8x32xf32>
      %83 = arith.mulf %78, %80 : vector<8x32xf32>
      %84 = arith.addf %82, %83 : vector<8x32xf32>
      %85 = math.tanh %84 : vector<8x32xf32>
      %86 = arith.mulf %81, %85 : vector<8x32xf32>
      %cst_29 = arith.constant dense<0.000000e+00> : vector<8x128xf32>
      %87 = tpu.matmul %86, %11, %cst_29 {dimension_numbers = #tpu.dot_dimension_numbers<[1], [0], [0], [1], [0, 0, 1, 1], [], []>} : vector<8x32xf32>, vector<32x128xf32>, vector<8x128xf32> -> vector<8x128xf32>
      %cst_30 = arith.constant dense<0.000000e+00> : vector<8x128xf32>
      %88 = tpu.matmul %61, %12, %cst_30 {dimension_numbers = #tpu.dot_dimension_numbers<[1], [0], [0], [1], [0, 0, 1, 1], [], []>} : vector<8x32xf32>, vector<32x128xf32>, vector<8x128xf32> -> vector<8x128xf32>
      %89 = arith.addf %87, %88 : vector<8x128xf32>
      %90 = arith.addf %89, %13 : vector<8x128xf32>
      %91 = math.tanh %90 : vector<8x128xf32>
      %92 = arith.negf %90 : vector<8x128xf32>
      %93 = math.exp %92 : vector<8x128xf32>
      %cst_31 = arith.constant 1.000000e+00 : f32
      %94 = vector.broadcast %cst_31 : f32 to vector<8x128xf32>
      %95 = arith.addf %94, %93 : vector<8x128xf32>
      %96 = arith.divf %94, %95 : vector<8x128xf32>
      %97 = arith.select %19, %91, %96 : vector<8x128xi1>, vector<8x128xf32>
      %98 = vector.extract_strided_slice %97 {offsets = [0, 0], sizes = [8, 32], strides = [1, 1]} : vector<8x128xf32> to vector<8x32xf32>
      %99 = vector.extract_strided_slice %97 {offsets = [0, 32], sizes = [8, 32], strides = [1, 1]} : vector<8x128xf32> to vector<8x32xf32>
      %100 = vector.extract_strided_slice %97 {offsets = [0, 64], sizes = [8, 32], strides = [1, 1]} : vector<8x128xf32> to vector<8x32xf32>
      %101 = vector.extract_strided_slice %97 {offsets = [0, 96], sizes = [8, 32], strides = [1, 1]} : vector<8x128xf32> to vector<8x32xf32>
      %102 = arith.mulf %99, %59 : vector<8x32xf32>
      %103 = arith.mulf %98, %100 : vector<8x32xf32>
      %104 = arith.addf %102, %103 : vector<8x32xf32>
      %105 = math.tanh %104 : vector<8x32xf32>
      %106 = arith.mulf %101, %105 : vector<8x32xf32>
      %c8_i32_32 = arith.constant 8 : i32
      %107 = arith.muli %c1_i32, %c8_i32_32 : i32
      %108 = tpu.assume_multiple %107, 8 : i32
      %109 = arith.index_cast %108 : i32 to index
      %c0_33 = arith.constant 0 : index
      %110 = vector.load %arg9[%109, %c0_33] : memref<72x32xf32, #tpu.memory_space<vmem>>, vector<8x32xf32>
      tpu.vector_store %arg9[%109, %c0_33], %106 {strides = array<i32>} : memref<72x32xf32, #tpu.memory_space<vmem>>, vector<8x32xf32>,
      %c2_i32 = arith.constant 2 : i32
      %111 = arith.index_cast %c2_i32 : i32 to index
      %c0_34 = arith.constant 0 : index
      %c0_35 = arith.constant 0 : index
      %112 = vector.load %arg1[%111, %c0_34, %c0_35] : memref<9x8x128xf32, #tpu.memory_space<vmem>>, vector<1x8x128xf32>
      %113 = vector.shape_cast %112 : vector<1x8x128xf32> to vector<8x128xf32>
      %cst_36 = arith.constant dense<0.000000e+00> : vector<8x128xf32>
      %114 = tpu.matmul %86, %10, %cst_36 {dimension_numbers = #tpu.dot_dimension_numbers<[1], [0], [0], [1], [0, 0, 1, 1], [], []>} : vector<8x32xf32>, vector<32x128xf32>, vector<8x128xf32> -> vector<8x128xf32>
      %115 = arith.addf %113, %114 : vector<8x128xf32>
      %116 = math.tanh %115 : vector<8x128xf32>
      %117 = arith.negf %115 : vector<8x128xf32>
      %118 = math.exp %117 : vector<8x128xf32>
      %cst_37 = arith.constant 1.000000e+00 : f32
      %119 = vector.broadcast %cst_37 : f32 to vector<8x128xf32>
      %120 = arith.addf %119, %118 : vector<8x128xf32>
      %121 = arith.divf %119, %120 : vector<8x128xf32>
      %122 = arith.select %19, %116, %121 : vector<8x128xi1>, vector<8x128xf32>
      %123 = vector.extract_strided_slice %122 {offsets = [0, 0], sizes = [8, 32], strides = [1, 1]} : vector<8x128xf32> to vector<8x32xf32>
      %124 = vector.extract_strided_slice %122 {offsets = [0, 32], sizes = [8, 32], strides = [1, 1]} : vector<8x128xf32> to vector<8x32xf32>
      %125 = vector.extract_strided_slice %122 {offsets = [0, 64], sizes = [8, 32], strides = [1, 1]} : vector<8x128xf32> to vector<8x32xf32>
      %126 = vector.extract_strided_slice %122 {offsets = [0, 96], sizes = [8, 32], strides = [1, 1]} : vector<8x128xf32> to vector<8x32xf32>
      %127 = arith.mulf %124, %84 : vector<8x32xf32>
      %128 = arith.mulf %123, %125 : vector<8x32xf32>
      %129 = arith.addf %127, %128 : vector<8x32xf32>
      %130 = math.tanh %129 : vector<8x32xf32>
      %131 = arith.mulf %126, %130 : vector<8x32xf32>
      %cst_38 = arith.constant dense<0.000000e+00> : vector<8x128xf32>
      %132 = tpu.matmul %131, %11, %cst_38 {dimension_numbers = #tpu.dot_dimension_numbers<[1], [0], [0], [1], [0, 0, 1, 1], [], []>} : vector<8x32xf32>, vector<32x128xf32>, vector<8x128xf32> -> vector<8x128xf32>
      %cst_39 = arith.constant dense<0.000000e+00> : vector<8x128xf32>
      %133 = tpu.matmul %106, %12, %cst_39 {dimension_numbers = #tpu.dot_dimension_numbers<[1], [0], [0], [1], [0, 0, 1, 1], [], []>} : vector<8x32xf32>, vector<32x128xf32>, vector<8x128xf32> -> vector<8x128xf32>
      %134 = arith.addf %132, %133 : vector<8x128xf32>
      %135 = arith.addf %134, %13 : vector<8x128xf32>
      %136 = math.tanh %135 : vector<8x128xf32>
      %137 = arith.negf %135 : vector<8x128xf32>
      %138 = math.exp %137 : vector<8x128xf32>
      %cst_40 = arith.constant 1.000000e+00 : f32
      %139 = vector.broadcast %cst_40 : f32 to vector<8x128xf32>
      %140 = arith.addf %139, %138 : vector<8x128xf32>
      %141 = arith.divf %139, %140 : vector<8x128xf32>
      %142 = arith.select %19, %136, %141 : vector<8x128xi1>, vector<8x128xf32>
      %143 = vector.extract_strided_slice %142 {offsets = [0, 0], sizes = [8, 32], strides = [1, 1]} : vector<8x128xf32> to vector<8x32xf32>
      %144 = vector.extract_strided_slice %142 {offsets = [0, 32], sizes = [8, 32], strides = [1, 1]} : vector<8x128xf32> to vector<8x32xf32>
      %145 = vector.extract_strided_slice %142 {offsets = [0, 64], sizes = [8, 32], strides = [1, 1]} : vector<8x128xf32> to vector<8x32xf32>
      %146 = vector.extract_strided_slice %142 {offsets = [0, 96], sizes = [8, 32], strides = [1, 1]} : vector<8x128xf32> to vector<8x32xf32>
      %147 = arith.mulf %144, %104 : vector<8x32xf32>
      %148 = arith.mulf %143, %145 : vector<8x32xf32>
      %149 = arith.addf %147, %148 : vector<8x32xf32>
      %150 = math.tanh %149 : vector<8x32xf32>
      %151 = arith.mulf %146, %150 : vector<8x32xf32>
      %c8_i32_41 = arith.constant 8 : i32
      %152 = arith.muli %c2_i32, %c8_i32_41 : i32
      %153 = tpu.assume_multiple %152, 8 : i32
      %154 = arith.index_cast %153 : i32 to index
      %c0_42 = arith.constant 0 : index
      %155 = vector.load %arg9[%154, %c0_42] : memref<72x32xf32, #tpu.memory_space<vmem>>, vector<8x32xf32>
      tpu.vector_store %arg9[%154, %c0_42], %151 {strides = array<i32>} : memref<72x32xf32, #tpu.memory_space<vmem>>, vector<8x32xf32>,
      %c3_i32 = arith.constant 3 : i32
      %156 = arith.index_cast %c3_i32 : i32 to index
      %c0_43 = arith.constant 0 : index
      %c0_44 = arith.constant 0 : index
      %157 = vector.load %arg1[%156, %c0_43, %c0_44] : memref<9x8x128xf32, #tpu.memory_space<vmem>>, vector<1x8x128xf32>
      %158 = vector.shape_cast %157 : vector<1x8x128xf32> to vector<8x128xf32>
      %cst_45 = arith.constant dense<0.000000e+00> : vector<8x128xf32>
      %159 = tpu.matmul %131, %10, %cst_45 {dimension_numbers = #tpu.dot_dimension_numbers<[1], [0], [0], [1], [0, 0, 1, 1], [], []>} : vector<8x32xf32>, vector<32x128xf32>, vector<8x128xf32> -> vector<8x128xf32>
      %160 = arith.addf %158, %159 : vector<8x128xf32>
      %161 = math.tanh %160 : vector<8x128xf32>
      %162 = arith.negf %160 : vector<8x128xf32>
      %163 = math.exp %162 : vector<8x128xf32>
      %cst_46 = arith.constant 1.000000e+00 : f32
      %164 = vector.broadcast %cst_46 : f32 to vector<8x128xf32>
      %165 = arith.addf %164, %163 : vector<8x128xf32>
      %166 = arith.divf %164, %165 : vector<8x128xf32>
      %167 = arith.select %19, %161, %166 : vector<8x128xi1>, vector<8x128xf32>
      %168 = vector.extract_strided_slice %167 {offsets = [0, 0], sizes = [8, 32], strides = [1, 1]} : vector<8x128xf32> to vector<8x32xf32>
      %169 = vector.extract_strided_slice %167 {offsets = [0, 32], sizes = [8, 32], strides = [1, 1]} : vector<8x128xf32> to vector<8x32xf32>
      %170 = vector.extract_strided_slice %167 {offsets = [0, 64], sizes = [8, 32], strides = [1, 1]} : vector<8x128xf32> to vector<8x32xf32>
      %171 = vector.extract_strided_slice %167 {offsets = [0, 96], sizes = [8, 32], strides = [1, 1]} : vector<8x128xf32> to vector<8x32xf32>
      %172 = arith.mulf %169, %129 : vector<8x32xf32>
      %173 = arith.mulf %168, %170 : vector<8x32xf32>
      %174 = arith.addf %172, %173 : vector<8x32xf32>
      %175 = math.tanh %174 : vector<8x32xf32>
      %176 = arith.mulf %171, %175 : vector<8x32xf32>
      %cst_47 = arith.constant dense<0.000000e+00> : vector<8x128xf32>
      %177 = tpu.matmul %176, %11, %cst_47 {dimension_numbers = #tpu.dot_dimension_numbers<[1], [0], [0], [1], [0, 0, 1, 1], [], []>} : vector<8x32xf32>, vector<32x128xf32>, vector<8x128xf32> -> vector<8x128xf32>
      %cst_48 = arith.constant dense<0.000000e+00> : vector<8x128xf32>
      %178 = tpu.matmul %151, %12, %cst_48 {dimension_numbers = #tpu.dot_dimension_numbers<[1], [0], [0], [1], [0, 0, 1, 1], [], []>} : vector<8x32xf32>, vector<32x128xf32>, vector<8x128xf32> -> vector<8x128xf32>
      %179 = arith.addf %177, %178 : vector<8x128xf32>
      %180 = arith.addf %179, %13 : vector<8x128xf32>
      %181 = math.tanh %180 : vector<8x128xf32>
      %182 = arith.negf %180 : vector<8x128xf32>
      %183 = math.exp %182 : vector<8x128xf32>
      %cst_49 = arith.constant 1.000000e+00 : f32
      %184 = vector.broadcast %cst_49 : f32 to vector<8x128xf32>
      %185 = arith.addf %184, %183 : vector<8x128xf32>
      %186 = arith.divf %184, %185 : vector<8x128xf32>
      %187 = arith.select %19, %181, %186 : vector<8x128xi1>, vector<8x128xf32>
      %188 = vector.extract_strided_slice %187 {offsets = [0, 0], sizes = [8, 32], strides = [1, 1]} : vector<8x128xf32> to vector<8x32xf32>
      %189 = vector.extract_strided_slice %187 {offsets = [0, 32], sizes = [8, 32], strides = [1, 1]} : vector<8x128xf32> to vector<8x32xf32>
      %190 = vector.extract_strided_slice %187 {offsets = [0, 64], sizes = [8, 32], strides = [1, 1]} : vector<8x128xf32> to vector<8x32xf32>
      %191 = vector.extract_strided_slice %187 {offsets = [0, 96], sizes = [8, 32], strides = [1, 1]} : vector<8x128xf32> to vector<8x32xf32>
      %192 = arith.mulf %189, %149 : vector<8x32xf32>
      %193 = arith.mulf %188, %190 : vector<8x32xf32>
      %194 = arith.addf %192, %193 : vector<8x32xf32>
      %195 = math.tanh %194 : vector<8x32xf32>
      %196 = arith.mulf %191, %195 : vector<8x32xf32>
      %c8_i32_50 = arith.constant 8 : i32
      %197 = arith.muli %c3_i32, %c8_i32_50 : i32
      %198 = tpu.assume_multiple %197, 8 : i32
      %199 = arith.index_cast %198 : i32 to index
      %c0_51 = arith.constant 0 : index
      %200 = vector.load %arg9[%199, %c0_51] : memref<72x32xf32, #tpu.memory_space<vmem>>, vector<8x32xf32>
      tpu.vector_store %arg9[%199, %c0_51], %196 {strides = array<i32>} : memref<72x32xf32, #tpu.memory_space<vmem>>, vector<8x32xf32>,
      %c4_i32 = arith.constant 4 : i32
      %201 = arith.index_cast %c4_i32 : i32 to index
      %c0_52 = arith.constant 0 : index
      %c0_53 = arith.constant 0 : index
      %202 = vector.load %arg1[%201, %c0_52, %c0_53] : memref<9x8x128xf32, #tpu.memory_space<vmem>>, vector<1x8x128xf32>
      %203 = vector.shape_cast %202 : vector<1x8x128xf32> to vector<8x128xf32>
      %cst_54 = arith.constant dense<0.000000e+00> : vector<8x128xf32>
      %204 = tpu.matmul %176, %10, %cst_54 {dimension_numbers = #tpu.dot_dimension_numbers<[1], [0], [0], [1], [0, 0, 1, 1], [], []>} : vector<8x32xf32>, vector<32x128xf32>, vector<8x128xf32> -> vector<8x128xf32>
      %205 = arith.addf %203, %204 : vector<8x128xf32>
      %206 = math.tanh %205 : vector<8x128xf32>
      %207 = arith.negf %205 : vector<8x128xf32>
      %208 = math.exp %207 : vector<8x128xf32>
      %cst_55 = arith.constant 1.000000e+00 : f32
      %209 = vector.broadcast %cst_55 : f32 to vector<8x128xf32>
      %210 = arith.addf %209, %208 : vector<8x128xf32>
      %211 = arith.divf %209, %210 : vector<8x128xf32>
      %212 = arith.select %19, %206, %211 : vector<8x128xi1>, vector<8x128xf32>
      %213 = vector.extract_strided_slice %212 {offsets = [0, 0], sizes = [8, 32], strides = [1, 1]} : vector<8x128xf32> to vector<8x32xf32>
      %214 = vector.extract_strided_slice %212 {offsets = [0, 32], sizes = [8, 32], strides = [1, 1]} : vector<8x128xf32> to vector<8x32xf32>
      %215 = vector.extract_strided_slice %212 {offsets = [0, 64], sizes = [8, 32], strides = [1, 1]} : vector<8x128xf32> to vector<8x32xf32>
      %216 = vector.extract_strided_slice %212 {offsets = [0, 96], sizes = [8, 32], strides = [1, 1]} : vector<8x128xf32> to vector<8x32xf32>
      %217 = arith.mulf %214, %174 : vector<8x32xf32>
      %218 = arith.mulf %213, %215 : vector<8x32xf32>
      %219 = arith.addf %217, %218 : vector<8x32xf32>
      %220 = math.tanh %219 : vector<8x32xf32>
      %221 = arith.mulf %216, %220 : vector<8x32xf32>
      %cst_56 = arith.constant dense<0.000000e+00> : vector<8x128xf32>
      %222 = tpu.matmul %221, %11, %cst_56 {dimension_numbers = #tpu.dot_dimension_numbers<[1], [0], [0], [1], [0, 0, 1, 1], [], []>} : vector<8x32xf32>, vector<32x128xf32>, vector<8x128xf32> -> vector<8x128xf32>
      %cst_57 = arith.constant dense<0.000000e+00> : vector<8x128xf32>
      %223 = tpu.matmul %196, %12, %cst_57 {dimension_numbers = #tpu.dot_dimension_numbers<[1], [0], [0], [1], [0, 0, 1, 1], [], []>} : vector<8x32xf32>, vector<32x128xf32>, vector<8x128xf32> -> vector<8x128xf32>
      %224 = arith.addf %222, %223 : vector<8x128xf32>
      %225 = arith.addf %224, %13 : vector<8x128xf32>
      %226 = math.tanh %225 : vector<8x128xf32>
      %227 = arith.negf %225 : vector<8x128xf32>
      %228 = math.exp %227 : vector<8x128xf32>
      %cst_58 = arith.constant 1.000000e+00 : f32
      %229 = vector.broadcast %cst_58 : f32 to vector<8x128xf32>
      %230 = arith.addf %229, %228 : vector<8x128xf32>
      %231 = arith.divf %229, %230 : vector<8x128xf32>
      %232 = arith.select %19, %226, %231 : vector<8x128xi1>, vector<8x128xf32>
      %233 = vector.extract_strided_slice %232 {offsets = [0, 0], sizes = [8, 32], strides = [1, 1]} : vector<8x128xf32> to vector<8x32xf32>
      %234 = vector.extract_strided_slice %232 {offsets = [0, 32], sizes = [8, 32], strides = [1, 1]} : vector<8x128xf32> to vector<8x32xf32>
      %235 = vector.extract_strided_slice %232 {offsets = [0, 64], sizes = [8, 32], strides = [1, 1]} : vector<8x128xf32> to vector<8x32xf32>
      %236 = vector.extract_strided_slice %232 {offsets = [0, 96], sizes = [8, 32], strides = [1, 1]} : vector<8x128xf32> to vector<8x32xf32>
      %237 = arith.mulf %234, %194 : vector<8x32xf32>
      %238 = arith.mulf %233, %235 : vector<8x32xf32>
      %239 = arith.addf %237, %238 : vector<8x32xf32>
      %240 = math.tanh %239 : vector<8x32xf32>
      %241 = arith.mulf %236, %240 : vector<8x32xf32>
      %c8_i32_59 = arith.constant 8 : i32
      %242 = arith.muli %c4_i32, %c8_i32_59 : i32
      %243 = tpu.assume_multiple %242, 8 : i32
      %244 = arith.index_cast %243 : i32 to index
      %c0_60 = arith.constant 0 : index
      %245 = vector.load %arg9[%244, %c0_60] : memref<72x32xf32, #tpu.memory_space<vmem>>, vector<8x32xf32>
      tpu.vector_store %arg9[%244, %c0_60], %241 {strides = array<i32>} : memref<72x32xf32, #tpu.memory_space<vmem>>, vector<8x32xf32>,
      %c5_i32 = arith.constant 5 : i32
      %246 = arith.index_cast %c5_i32 : i32 to index
      %c0_61 = arith.constant 0 : index
      %c0_62 = arith.constant 0 : index
      %247 = vector.load %arg1[%246, %c0_61, %c0_62] : memref<9x8x128xf32, #tpu.memory_space<vmem>>, vector<1x8x128xf32>
      %248 = vector.shape_cast %247 : vector<1x8x128xf32> to vector<8x128xf32>
      %cst_63 = arith.constant dense<0.000000e+00> : vector<8x128xf32>
      %249 = tpu.matmul %221, %10, %cst_63 {dimension_numbers = #tpu.dot_dimension_numbers<[1], [0], [0], [1], [0, 0, 1, 1], [], []>} : vector<8x32xf32>, vector<32x128xf32>, vector<8x128xf32> -> vector<8x128xf32>
      %250 = arith.addf %248, %249 : vector<8x128xf32>
      %251 = math.tanh %250 : vector<8x128xf32>
      %252 = arith.negf %250 : vector<8x128xf32>
      %253 = math.exp %252 : vector<8x128xf32>
      %cst_64 = arith.constant 1.000000e+00 : f32
      %254 = vector.broadcast %cst_64 : f32 to vector<8x128xf32>
      %255 = arith.addf %254, %253 : vector<8x128xf32>
      %256 = arith.divf %254, %255 : vector<8x128xf32>
      %257 = arith.select %19, %251, %256 : vector<8x128xi1>, vector<8x128xf32>
      %258 = vector.extract_strided_slice %257 {offsets = [0, 0], sizes = [8, 32], strides = [1, 1]} : vector<8x128xf32> to vector<8x32xf32>
      %259 = vector.extract_strided_slice %257 {offsets = [0, 32], sizes = [8, 32], strides = [1, 1]} : vector<8x128xf32> to vector<8x32xf32>
      %260 = vector.extract_strided_slice %257 {offsets = [0, 64], sizes = [8, 32], strides = [1, 1]} : vector<8x128xf32> to vector<8x32xf32>
      %261 = vector.extract_strided_slice %257 {offsets = [0, 96], sizes = [8, 32], strides = [1, 1]} : vector<8x128xf32> to vector<8x32xf32>
      %262 = arith.mulf %259, %219 : vector<8x32xf32>
      %263 = arith.mulf %258, %260 : vector<8x32xf32>
      %264 = arith.addf %262, %263 : vector<8x32xf32>
      %265 = math.tanh %264 : vector<8x32xf32>
      %266 = arith.mulf %261, %265 : vector<8x32xf32>
      %cst_65 = arith.constant dense<0.000000e+00> : vector<8x128xf32>
      %267 = tpu.matmul %266, %11, %cst_65 {dimension_numbers = #tpu.dot_dimension_numbers<[1], [0], [0], [1], [0, 0, 1, 1], [], []>} : vector<8x32xf32>, vector<32x128xf32>, vector<8x128xf32> -> vector<8x128xf32>
      %cst_66 = arith.constant dense<0.000000e+00> : vector<8x128xf32>
      %268 = tpu.matmul %241, %12, %cst_66 {dimension_numbers = #tpu.dot_dimension_numbers<[1], [0], [0], [1], [0, 0, 1, 1], [], []>} : vector<8x32xf32>, vector<32x128xf32>, vector<8x128xf32> -> vector<8x128xf32>
      %269 = arith.addf %267, %268 : vector<8x128xf32>
      %270 = arith.addf %269, %13 : vector<8x128xf32>
      %271 = math.tanh %270 : vector<8x128xf32>
      %272 = arith.negf %270 : vector<8x128xf32>
      %273 = math.exp %272 : vector<8x128xf32>
      %cst_67 = arith.constant 1.000000e+00 : f32
      %274 = vector.broadcast %cst_67 : f32 to vector<8x128xf32>
      %275 = arith.addf %274, %273 : vector<8x128xf32>
      %276 = arith.divf %274, %275 : vector<8x128xf32>
      %277 = arith.select %19, %271, %276 : vector<8x128xi1>, vector<8x128xf32>
      %278 = vector.extract_strided_slice %277 {offsets = [0, 0], sizes = [8, 32], strides = [1, 1]} : vector<8x128xf32> to vector<8x32xf32>
      %279 = vector.extract_strided_slice %277 {offsets = [0, 32], sizes = [8, 32], strides = [1, 1]} : vector<8x128xf32> to vector<8x32xf32>
      %280 = vector.extract_strided_slice %277 {offsets = [0, 64], sizes = [8, 32], strides = [1, 1]} : vector<8x128xf32> to vector<8x32xf32>
      %281 = vector.extract_strided_slice %277 {offsets = [0, 96], sizes = [8, 32], strides = [1, 1]} : vector<8x128xf32> to vector<8x32xf32>
      %282 = arith.mulf %279, %239 : vector<8x32xf32>
      %283 = arith.mulf %278, %280 : vector<8x32xf32>
      %284 = arith.addf %282, %283 : vector<8x32xf32>
      %285 = math.tanh %284 : vector<8x32xf32>
      %286 = arith.mulf %281, %285 : vector<8x32xf32>
      %c8_i32_68 = arith.constant 8 : i32
      %287 = arith.muli %c5_i32, %c8_i32_68 : i32
      %288 = tpu.assume_multiple %287, 8 : i32
      %289 = arith.index_cast %288 : i32 to index
      %c0_69 = arith.constant 0 : index
      %290 = vector.load %arg9[%289, %c0_69] : memref<72x32xf32, #tpu.memory_space<vmem>>, vector<8x32xf32>
      tpu.vector_store %arg9[%289, %c0_69], %286 {strides = array<i32>} : memref<72x32xf32, #tpu.memory_space<vmem>>, vector<8x32xf32>,
      %c6_i32 = arith.constant 6 : i32
      %291 = arith.index_cast %c6_i32 : i32 to index
      %c0_70 = arith.constant 0 : index
      %c0_71 = arith.constant 0 : index
      %292 = vector.load %arg1[%291, %c0_70, %c0_71] : memref<9x8x128xf32, #tpu.memory_space<vmem>>, vector<1x8x128xf32>
      %293 = vector.shape_cast %292 : vector<1x8x128xf32> to vector<8x128xf32>
      %cst_72 = arith.constant dense<0.000000e+00> : vector<8x128xf32>
      %294 = tpu.matmul %266, %10, %cst_72 {dimension_numbers = #tpu.dot_dimension_numbers<[1], [0], [0], [1], [0, 0, 1, 1], [], []>} : vector<8x32xf32>, vector<32x128xf32>, vector<8x128xf32> -> vector<8x128xf32>
      %295 = arith.addf %293, %294 : vector<8x128xf32>
      %296 = math.tanh %295 : vector<8x128xf32>
      %297 = arith.negf %295 : vector<8x128xf32>
      %298 = math.exp %297 : vector<8x128xf32>
      %cst_73 = arith.constant 1.000000e+00 : f32
      %299 = vector.broadcast %cst_73 : f32 to vector<8x128xf32>
      %300 = arith.addf %299, %298 : vector<8x128xf32>
      %301 = arith.divf %299, %300 : vector<8x128xf32>
      %302 = arith.select %19, %296, %301 : vector<8x128xi1>, vector<8x128xf32>
      %303 = vector.extract_strided_slice %302 {offsets = [0, 0], sizes = [8, 32], strides = [1, 1]} : vector<8x128xf32> to vector<8x32xf32>
      %304 = vector.extract_strided_slice %302 {offsets = [0, 32], sizes = [8, 32], strides = [1, 1]} : vector<8x128xf32> to vector<8x32xf32>
      %305 = vector.extract_strided_slice %302 {offsets = [0, 64], sizes = [8, 32], strides = [1, 1]} : vector<8x128xf32> to vector<8x32xf32>
      %306 = vector.extract_strided_slice %302 {offsets = [0, 96], sizes = [8, 32], strides = [1, 1]} : vector<8x128xf32> to vector<8x32xf32>
      %307 = arith.mulf %304, %264 : vector<8x32xf32>
      %308 = arith.mulf %303, %305 : vector<8x32xf32>
      %309 = arith.addf %307, %308 : vector<8x32xf32>
      %310 = math.tanh %309 : vector<8x32xf32>
      %311 = arith.mulf %306, %310 : vector<8x32xf32>
      %cst_74 = arith.constant dense<0.000000e+00> : vector<8x128xf32>
      %312 = tpu.matmul %311, %11, %cst_74 {dimension_numbers = #tpu.dot_dimension_numbers<[1], [0], [0], [1], [0, 0, 1, 1], [], []>} : vector<8x32xf32>, vector<32x128xf32>, vector<8x128xf32> -> vector<8x128xf32>
      %cst_75 = arith.constant dense<0.000000e+00> : vector<8x128xf32>
      %313 = tpu.matmul %286, %12, %cst_75 {dimension_numbers = #tpu.dot_dimension_numbers<[1], [0], [0], [1], [0, 0, 1, 1], [], []>} : vector<8x32xf32>, vector<32x128xf32>, vector<8x128xf32> -> vector<8x128xf32>
      %314 = arith.addf %312, %313 : vector<8x128xf32>
      %315 = arith.addf %314, %13 : vector<8x128xf32>
      %316 = math.tanh %315 : vector<8x128xf32>
      %317 = arith.negf %315 : vector<8x128xf32>
      %318 = math.exp %317 : vector<8x128xf32>
      %cst_76 = arith.constant 1.000000e+00 : f32
      %319 = vector.broadcast %cst_76 : f32 to vector<8x128xf32>
      %320 = arith.addf %319, %318 : vector<8x128xf32>
      %321 = arith.divf %319, %320 : vector<8x128xf32>
      %322 = arith.select %19, %316, %321 : vector<8x128xi1>, vector<8x128xf32>
      %323 = vector.extract_strided_slice %322 {offsets = [0, 0], sizes = [8, 32], strides = [1, 1]} : vector<8x128xf32> to vector<8x32xf32>
      %324 = vector.extract_strided_slice %322 {offsets = [0, 32], sizes = [8, 32], strides = [1, 1]} : vector<8x128xf32> to vector<8x32xf32>
      %325 = vector.extract_strided_slice %322 {offsets = [0, 64], sizes = [8, 32], strides = [1, 1]} : vector<8x128xf32> to vector<8x32xf32>
      %326 = vector.extract_strided_slice %322 {offsets = [0, 96], sizes = [8, 32], strides = [1, 1]} : vector<8x128xf32> to vector<8x32xf32>
      %327 = arith.mulf %324, %284 : vector<8x32xf32>
      %328 = arith.mulf %323, %325 : vector<8x32xf32>
      %329 = arith.addf %327, %328 : vector<8x32xf32>
      %330 = math.tanh %329 : vector<8x32xf32>
      %331 = arith.mulf %326, %330 : vector<8x32xf32>
      %c8_i32_77 = arith.constant 8 : i32
      %332 = arith.muli %c6_i32, %c8_i32_77 : i32
      %333 = tpu.assume_multiple %332, 8 : i32
      %334 = arith.index_cast %333 : i32 to index
      %c0_78 = arith.constant 0 : index
      %335 = vector.load %arg9[%334, %c0_78] : memref<72x32xf32, #tpu.memory_space<vmem>>, vector<8x32xf32>
      tpu.vector_store %arg9[%334, %c0_78], %331 {strides = array<i32>} : memref<72x32xf32, #tpu.memory_space<vmem>>, vector<8x32xf32>,
      %c7_i32 = arith.constant 7 : i32
      %336 = arith.index_cast %c7_i32 : i32 to index
      %c0_79 = arith.constant 0 : index
      %c0_80 = arith.constant 0 : index
      %337 = vector.load %arg1[%336, %c0_79, %c0_80] : memref<9x8x128xf32, #tpu.memory_space<vmem>>, vector<1x8x128xf32>
      %338 = vector.shape_cast %337 : vector<1x8x128xf32> to vector<8x128xf32>
      %cst_81 = arith.constant dense<0.000000e+00> : vector<8x128xf32>
      %339 = tpu.matmul %311, %10, %cst_81 {dimension_numbers = #tpu.dot_dimension_numbers<[1], [0], [0], [1], [0, 0, 1, 1], [], []>} : vector<8x32xf32>, vector<32x128xf32>, vector<8x128xf32> -> vector<8x128xf32>
      %340 = arith.addf %338, %339 : vector<8x128xf32>
      %341 = math.tanh %340 : vector<8x128xf32>
      %342 = arith.negf %340 : vector<8x128xf32>
      %343 = math.exp %342 : vector<8x128xf32>
      %cst_82 = arith.constant 1.000000e+00 : f32
      %344 = vector.broadcast %cst_82 : f32 to vector<8x128xf32>
      %345 = arith.addf %344, %343 : vector<8x128xf32>
      %346 = arith.divf %344, %345 : vector<8x128xf32>
      %347 = arith.select %19, %341, %346 : vector<8x128xi1>, vector<8x128xf32>
      %348 = vector.extract_strided_slice %347 {offsets = [0, 0], sizes = [8, 32], strides = [1, 1]} : vector<8x128xf32> to vector<8x32xf32>
      %349 = vector.extract_strided_slice %347 {offsets = [0, 32], sizes = [8, 32], strides = [1, 1]} : vector<8x128xf32> to vector<8x32xf32>
      %350 = vector.extract_strided_slice %347 {offsets = [0, 64], sizes = [8, 32], strides = [1, 1]} : vector<8x128xf32> to vector<8x32xf32>
      %351 = vector.extract_strided_slice %347 {offsets = [0, 96], sizes = [8, 32], strides = [1, 1]} : vector<8x128xf32> to vector<8x32xf32>
      %352 = arith.mulf %349, %309 : vector<8x32xf32>
      %353 = arith.mulf %348, %350 : vector<8x32xf32>
      %354 = arith.addf %352, %353 : vector<8x32xf32>
      %355 = math.tanh %354 : vector<8x32xf32>
      %356 = arith.mulf %351, %355 : vector<8x32xf32>
      %cst_83 = arith.constant dense<0.000000e+00> : vector<8x128xf32>
      %357 = tpu.matmul %356, %11, %cst_83 {dimension_numbers = #tpu.dot_dimension_numbers<[1], [0], [0], [1], [0, 0, 1, 1], [], []>} : vector<8x32xf32>, vector<32x128xf32>, vector<8x128xf32> -> vector<8x128xf32>
      %cst_84 = arith.constant dense<0.000000e+00> : vector<8x128xf32>
      %358 = tpu.matmul %331, %12, %cst_84 {dimension_numbers = #tpu.dot_dimension_numbers<[1], [0], [0], [1], [0, 0, 1, 1], [], []>} : vector<8x32xf32>, vector<32x128xf32>, vector<8x128xf32> -> vector<8x128xf32>
      %359 = arith.addf %357, %358 : vector<8x128xf32>
      %360 = arith.addf %359, %13 : vector<8x128xf32>
      %361 = math.tanh %360 : vector<8x128xf32>
      %362 = arith.negf %360 : vector<8x128xf32>
      %363 = math.exp %362 : vector<8x128xf32>
      %cst_85 = arith.constant 1.000000e+00 : f32
      %364 = vector.broadcast %cst_85 : f32 to vector<8x128xf32>
      %365 = arith.addf %364, %363 : vector<8x128xf32>
      %366 = arith.divf %364, %365 : vector<8x128xf32>
      %367 = arith.select %19, %361, %366 : vector<8x128xi1>, vector<8x128xf32>
      %368 = vector.extract_strided_slice %367 {offsets = [0, 0], sizes = [8, 32], strides = [1, 1]} : vector<8x128xf32> to vector<8x32xf32>
      %369 = vector.extract_strided_slice %367 {offsets = [0, 32], sizes = [8, 32], strides = [1, 1]} : vector<8x128xf32> to vector<8x32xf32>
      %370 = vector.extract_strided_slice %367 {offsets = [0, 64], sizes = [8, 32], strides = [1, 1]} : vector<8x128xf32> to vector<8x32xf32>
      %371 = vector.extract_strided_slice %367 {offsets = [0, 96], sizes = [8, 32], strides = [1, 1]} : vector<8x128xf32> to vector<8x32xf32>
      %372 = arith.mulf %369, %329 : vector<8x32xf32>
      %373 = arith.mulf %368, %370 : vector<8x32xf32>
      %374 = arith.addf %372, %373 : vector<8x32xf32>
      %375 = math.tanh %374 : vector<8x32xf32>
      %376 = arith.mulf %371, %375 : vector<8x32xf32>
      %c8_i32_86 = arith.constant 8 : i32
      %377 = arith.muli %c7_i32, %c8_i32_86 : i32
      %378 = tpu.assume_multiple %377, 8 : i32
      %379 = arith.index_cast %378 : i32 to index
      %c0_87 = arith.constant 0 : index
      %380 = vector.load %arg9[%379, %c0_87] : memref<72x32xf32, #tpu.memory_space<vmem>>, vector<8x32xf32>
      tpu.vector_store %arg9[%379, %c0_87], %376 {strides = array<i32>} : memref<72x32xf32, #tpu.memory_space<vmem>>, vector<8x32xf32>,
      %c8_i32_88 = arith.constant 8 : i32
      %381 = arith.index_cast %c8_i32_88 : i32 to index
      %c0_89 = arith.constant 0 : index
      %c0_90 = arith.constant 0 : index
      %382 = vector.load %arg1[%381, %c0_89, %c0_90] : memref<9x8x128xf32, #tpu.memory_space<vmem>>, vector<1x8x128xf32>
      %383 = vector.shape_cast %382 : vector<1x8x128xf32> to vector<8x128xf32>
      %cst_91 = arith.constant dense<0.000000e+00> : vector<8x128xf32>
      %384 = tpu.matmul %356, %10, %cst_91 {dimension_numbers = #tpu.dot_dimension_numbers<[1], [0], [0], [1], [0, 0, 1, 1], [], []>} : vector<8x32xf32>, vector<32x128xf32>, vector<8x128xf32> -> vector<8x128xf32>
      %385 = arith.addf %383, %384 : vector<8x128xf32>
      %386 = math.tanh %385 : vector<8x128xf32>
      %387 = arith.negf %385 : vector<8x128xf32>
      %388 = math.exp %387 : vector<8x128xf32>
      %cst_92 = arith.constant 1.000000e+00 : f32
      %389 = vector.broadcast %cst_92 : f32 to vector<8x128xf32>
      %390 = arith.addf %389, %388 : vector<8x128xf32>
      %391 = arith.divf %389, %390 : vector<8x128xf32>
      %392 = arith.select %19, %386, %391 : vector<8x128xi1>, vector<8x128xf32>
      %393 = vector.extract_strided_slice %392 {offsets = [0, 0], sizes = [8, 32], strides = [1, 1]} : vector<8x128xf32> to vector<8x32xf32>
      %394 = vector.extract_strided_slice %392 {offsets = [0, 32], sizes = [8, 32], strides = [1, 1]} : vector<8x128xf32> to vector<8x32xf32>
      %395 = vector.extract_strided_slice %392 {offsets = [0, 64], sizes = [8, 32], strides = [1, 1]} : vector<8x128xf32> to vector<8x32xf32>
      %396 = vector.extract_strided_slice %392 {offsets = [0, 96], sizes = [8, 32], strides = [1, 1]} : vector<8x128xf32> to vector<8x32xf32>
      %397 = arith.mulf %394, %354 : vector<8x32xf32>
      %398 = arith.mulf %393, %395 : vector<8x32xf32>
      %399 = arith.addf %397, %398 : vector<8x32xf32>
      %400 = math.tanh %399 : vector<8x32xf32>
      %401 = arith.mulf %396, %400 : vector<8x32xf32>
      %cst_93 = arith.constant dense<0.000000e+00> : vector<8x128xf32>
      %402 = tpu.matmul %401, %11, %cst_93 {dimension_numbers = #tpu.dot_dimension_numbers<[1], [0], [0], [1], [0, 0, 1, 1], [], []>} : vector<8x32xf32>, vector<32x128xf32>, vector<8x128xf32> -> vector<8x128xf32>
      %cst_94 = arith.constant dense<0.000000e+00> : vector<8x128xf32>
      %403 = tpu.matmul %376, %12, %cst_94 {dimension_numbers = #tpu.dot_dimension_numbers<[1], [0], [0], [1], [0, 0, 1, 1], [], []>} : vector<8x32xf32>, vector<32x128xf32>, vector<8x128xf32> -> vector<8x128xf32>
      %404 = arith.addf %402, %403 : vector<8x128xf32>
      %405 = arith.addf %404, %13 : vector<8x128xf32>
      %406 = math.tanh %405 : vector<8x128xf32>
      %407 = arith.negf %405 : vector<8x128xf32>
      %408 = math.exp %407 : vector<8x128xf32>
      %cst_95 = arith.constant 1.000000e+00 : f32
      %409 = vector.broadcast %cst_95 : f32 to vector<8x128xf32>
      %410 = arith.addf %409, %408 : vector<8x128xf32>
      %411 = arith.divf %409, %410 : vector<8x128xf32>
      %412 = arith.select %19, %406, %411 : vector<8x128xi1>, vector<8x128xf32>
      %413 = vector.extract_strided_slice %412 {offsets = [0, 0], sizes = [8, 32], strides = [1, 1]} : vector<8x128xf32> to vector<8x32xf32>
      %414 = vector.extract_strided_slice %412 {offsets = [0, 32], sizes = [8, 32], strides = [1, 1]} : vector<8x128xf32> to vector<8x32xf32>
      %415 = vector.extract_strided_slice %412 {offsets = [0, 64], sizes = [8, 32], strides = [1, 1]} : vector<8x128xf32> to vector<8x32xf32>
      %416 = vector.extract_strided_slice %412 {offsets = [0, 96], sizes = [8, 32], strides = [1, 1]} : vector<8x128xf32> to vector<8x32xf32>
      %417 = arith.mulf %414, %374 : vector<8x32xf32>
      %418 = arith.mulf %413, %415 : vector<8x32xf32>
      %419 = arith.addf %417, %418 : vector<8x32xf32>
      %420 = math.tanh %419 : vector<8x32xf32>
      %421 = arith.mulf %416, %420 : vector<8x32xf32>
      %c8_i32_96 = arith.constant 8 : i32
      %422 = arith.muli %c8_i32_88, %c8_i32_96 : i32
      %423 = tpu.assume_multiple %422, 8 : i32
      %424 = arith.index_cast %423 : i32 to index
      %c0_97 = arith.constant 0 : index
      %425 = vector.load %arg9[%424, %c0_97] : memref<72x32xf32, #tpu.memory_space<vmem>>, vector<8x32xf32>
      tpu.vector_store %arg9[%424, %c0_97], %421 {strides = array<i32>} : memref<72x32xf32, #tpu.memory_space<vmem>>, vector<8x32xf32>,
      %c9_i32 = arith.constant 9 : i32
    } else {
    }
    %c8 = arith.constant 8 : index
    %c0 = arith.constant 0 : index
    %3 = vector.load %arg9[%c8, %c0] : memref<72x32xf32, #tpu.memory_space<vmem>>, vector<64x32xf32>
    %c0_1 = arith.constant 0 : index
    %c0_2 = arith.constant 0 : index
    %4 = vector.load %arg6[%c0_1, %c0_2] : memref<32x128xf32, #tpu.memory_space<vmem>>, vector<32x128xf32>
    %cst = arith.constant dense<0.000000e+00> : vector<64x128xf32>
    %5 = tpu.matmul %3, %4, %cst {dimension_numbers = #tpu.dot_dimension_numbers<[1], [0], [0], [1], [0, 0, 1, 1], [], []>} : vector<64x32xf32>, vector<32x128xf32>, vector<64x128xf32> -> vector<64x128xf32>
    %c0_3 = arith.constant 0 : index
    %c0_4 = arith.constant 0 : index
    %6 = vector.load %arg7[%c0_3, %c0_4] : memref<1x128xf32, #tpu.memory_space<vmem>>, vector<1x128xf32>
    %7 = vector.broadcast %6 : vector<1x128xf32> to vector<64x128xf32>
    %8 = arith.addf %5, %7 : vector<64x128xf32>
    %c0_5 = arith.constant 0 : index
    %c0_6 = arith.constant 0 : index
    %9 = vector.load %arg8[%c0_5, %c0_6] : memref<64x128xf32, #tpu.memory_space<vmem>>, vector<64x128xf32>
    tpu.vector_store %arg8[%c0_5, %c0_6], %8 {strides = array<i32>} : memref<64x128xf32, #tpu.memory_space<vmem>>, vector<64x128xf32>,
    return
  }
  func.func @transform_0(%arg0: i32) -> (i32, i32, i32) {
    %c0_i32 = arith.constant 0 : i32
    %c0_i32_0 = arith.constant 0 : i32
    %c0_i32_1 = arith.constant 0 : i32
    %c0_i32_2 = arith.constant 0 : i32
    return %c0_i32, %c0_i32_0, %c0_i32_1 : i32, i32, i32
  }
  func.func @transform_1(%arg0: i32) -> (i32, i32) {
    %c0_i32 = arith.constant 0 : i32
    %c0_i32_0 = arith.constant 0 : i32
    %c0_i32_1 = arith.constant 0 : i32
    return %c0_i32, %c0_i32_0 : i32, i32
  }
  func.func @transform_2(%arg0: i32) -> (i32, i32) {
    %c0_i32 = arith.constant 0 : i32
    %c0_i32_0 = arith.constant 0 : i32
    %c0_i32_1 = arith.constant 0 : i32
    return %c0_i32, %c0_i32_0 : i32, i32
  }
  func.func @transform_3(%arg0: i32) -> (i32, i32) {
    %c0_i32 = arith.constant 0 : i32
    %c0_i32_0 = arith.constant 0 : i32
    %c0_i32_1 = arith.constant 0 : i32
    return %c0_i32, %c0_i32_0 : i32, i32
  }
  func.func @transform_4(%arg0: i32) -> (i32, i32) {
    %c0_i32 = arith.constant 0 : i32
    %c0_i32_0 = arith.constant 0 : i32
    %c0_i32_1 = arith.constant 0 : i32
    return %c0_i32, %c0_i32_0 : i32, i32
  }
  func.func @transform_5(%arg0: i32) -> (i32, i32) {
    %c0_i32 = arith.constant 0 : i32
    %c0_i32_0 = arith.constant 0 : i32
    return %c0_i32, %arg0 : i32, i32
  }
  func.func @transform_6(%arg0: i32) -> (i32, i32) {
    %c0_i32 = arith.constant 0 : i32
    %c0_i32_0 = arith.constant 0 : i32
    return %c0_i32, %arg0 : i32, i32
  }
  func.func @transform_7(%arg0: i32) -> (i32, i32) {
    %c0_i32 = arith.constant 0 : i32
    %c0_i32_0 = arith.constant 0 : i32
    return %c0_i32, %arg0 : i32, i32
  }
}

</mosaic_0001>

<llo_original>
// kernel: decoder_rnn_forward.1
$region0: #{decoder_rnn_forward.1}
  #allocation0 [shape = 'u32[]', space=smem, size = 0x4, offset = 0x4, fixed_abs, tag = 'smem constant byte address 0x4 - core index']
  #allocation1 [shape = 'u32[144,128]{1,0:T(1,128)}', space=vmem, size = 0x12000, scoped, tag = 'internal scratch']
  #allocation2 [shape = 'f32[72,32]{1,0:T(8,128)}', space=vmem, size = 0x9000, scoped, tag = 'scratch operand']
  %s0 = inlined_call_operand.vmem [shape: f32[9,8,128], index: 0, kind: input, shape index: {}]
  %s1 = inlined_call_operand.vmem [shape: f32[32,128], index: 1, kind: input, shape index: {}]
  %s2 = inlined_call_operand.vmem [shape: f32[32,128], index: 2, kind: input, shape index: {}]
  %s3 = inlined_call_operand.vmem [shape: f32[32,128], index: 3, kind: input, shape index: {}]
  %s4 = inlined_call_operand.vmem [shape: f32[8,128], index: 4, kind: input, shape index: {}]
  %s5 = inlined_call_operand.vmem [shape: f32[32,128], index: 5, kind: input, shape index: {}]
  %s6 = inlined_call_operand.vmem [shape: f32[1,128], index: 6, kind: input, shape index: {}]
  %s7 = inlined_call_operand.vmem [shape: f32[64,128], index: 7, kind: output, shape index: {}]
  %s8 = sld [smem:[#allocation0]]
  $region42: #{decoder_rnn_forward.1} parent=0
    _
  %s10 = ssub.s32 1, %s8
  %s11 = scalar_select 0, %s10, %s8
  // Predicated region
  $region2: #{decoder_rnn_forward.1} parent=0 // pred_check
    _
  $region3: #{decoder_rnn_forward.1} parent=0 // pred_check_branch
    %13 = sbr.rel (0) target = $region5
  $region4: #{decoder_rnn_forward.1} parent=0 // pred_region
    _
  $region5: #{decoder_rnn_forward.1} parent=0 // pred_fallthru
    _
  // Predicated region
  $region6: #{decoder_rnn_forward.1} parent=0 // pred_check
    _
  $region7: #{decoder_rnn_forward.1} parent=0 // pred_check_branch
    %15 = sbr.rel (0) target = $region9
  $region8: #{decoder_rnn_forward.1} parent=0 // pred_region
    _
  $region9: #{decoder_rnn_forward.1} parent=0 // pred_fallthru
    _
  // Predicated region
  $region10: #{decoder_rnn_forward.1} parent=0 // pred_check
    _
  $region11: #{decoder_rnn_forward.1} parent=0 // pred_check_branch
    %17 = sbr.rel (0) target = $region13
  $region12: #{decoder_rnn_forward.1} parent=0 // pred_region
    _
  $region13: #{decoder_rnn_forward.1} parent=0 // pred_fallthru
    _
  // Predicated region
  $region14: #{decoder_rnn_forward.1} parent=0 // pred_check
    _
  $region15: #{decoder_rnn_forward.1} parent=0 // pred_check_branch
    %19 = sbr.rel (0) target = $region17
  $region16: #{decoder_rnn_forward.1} parent=0 // pred_region
    _
  $region17: #{decoder_rnn_forward.1} parent=0 // pred_fallthru
    _
  // Predicated region
  $region18: #{decoder_rnn_forward.1} parent=0 // pred_check
    _
  $region19: #{decoder_rnn_forward.1} parent=0 // pred_check_branch
    %21 = sbr.rel (0) target = $region21
  $region20: #{decoder_rnn_forward.1} parent=0 // pred_region
    _
  $region21: #{decoder_rnn_forward.1} parent=0 // pred_fallthru
    _
  // Predicated region
  $region22: #{decoder_rnn_forward.1} parent=0 // pred_check
    _
  $region23: #{decoder_rnn_forward.1} parent=0 // pred_check_branch
    %23 = sbr.rel (0) target = $region25
  $region24: #{decoder_rnn_forward.1} parent=0 // pred_region
    _
  $region25: #{decoder_rnn_forward.1} parent=0 // pred_fallthru
    _
  // Predicated region
  $region26: #{decoder_rnn_forward.1} parent=0 // pred_check
    _
  $region27: #{decoder_rnn_forward.1} parent=0 // pred_check_branch
    %25 = sbr.rel (0) target = $region29
  $region28: #{decoder_rnn_forward.1} parent=0 // pred_region
    _
  $region29: #{decoder_rnn_forward.1} parent=0 // pred_fallthru
    _
  %p26 = scmp.eq.s32.totalorder 0, 0
  // Predicated region
  $region30: #{decoder_rnn_forward.1} parent=0 // pred_check
    %p27 = pneg %p26
  $region31: #{decoder_rnn_forward.1} parent=0 // pred_check_branch
    %29 = sbr.rel (%p27) target = $region33
  $region32: #{decoder_rnn_forward.1} parent=0 // pred_region
    %v30 = vld [vmem:[%s1] sm:$0xff]
    %v31 = vld [vmem:[%s1 + $0x8] sm:$0xff]
    %v32 = vld [vmem:[%s1 + $0x10] sm:$0xff]
    %v33 = vld [vmem:[%s1 + $0x18] sm:$0xff]
    %v34 = vld [vmem:[%s2] sm:$0xff]
    %v35 = vld [vmem:[%s2 + $0x8] sm:$0xff]
    %v36 = vld [vmem:[%s2 + $0x10] sm:$0xff]
    %v37 = vld [vmem:[%s2 + $0x18] sm:$0xff]
    %v38 = vld [vmem:[%s3] sm:$0xff]
    %v39 = vld [vmem:[%s3 + $0x8] sm:$0xff]
    %v40 = vld [vmem:[%s3 + $0x10] sm:$0xff]
    %v41 = vld [vmem:[%s3 + $0x18] sm:$0xff]
    %v42 = vld [vmem:[%s4] sm:$0xff]
    %v43 = vlaneseq
    %v44 = vand.u32 %v43, 127
    %vm45 = vcmp.ge.s32.totalorder %v44, 64
    %vm46 = vcmp.lt.s32.totalorder %v44, 96
    %vm47 = vmand %vm45, %vm46
    %v48 = vld [vmem:[%s0] sm:$0xff]
    %vm49 = vcmask 261120
    %v51 = vsel %vm49, 0.0, 0
    %53 = vmatprep.subr.mxu0 0.0
    %54 = vmatpush1.msra.mxu0 0.0
    %55 = vmatprep.subr.mxu0 0.0
    %56 = vmatpush1.msra.mxu0 0.0
    %57 = vmatprep.subr.mxu0 0.0
    %58 = vmatpush1.msra.mxu0 0.0
    %59 = vmatprep.subr.mxu0 0.0
    %60 = vmatpush1.msra.mxu0 0.0
    %61 = vmatprep.subr.mxu0 0.0
    %62 = vmatpush1.msra.mxu0 0.0
    %63 = vmatprep.subr.mxu0 0.0
    %64 = vmatpush1.msra.mxu0 0.0
    %65 = vmatprep.subr.mxu0 0.0
    %66 = vmatpush1.msra.mxu0 0.0
    %67 = vmatprep.subr.mxu0 0.0
    %68 = vmatpush1.msra.mxu0 0.0
    %69 = vmatprep.subr.mxu0 0.0
    %70 = vmatpush1.msra.mxu0 0.0
    %71 = vmatprep.subr.mxu0 0.0
    %72 = vmatpush1.msra.mxu0 0.0
    %73 = vmatprep.subr.mxu0 0.0
    %74 = vmatpush1.msra.mxu0 0.0
    %75 = vmatprep.subr.mxu0 0.0
    %76 = vmatpush1.msra.mxu0 0.0
    %77 = vmatprep.subr.mxu0 0.0
    %78 = vmatpush1.msra.mxu0 %v33
    %79 = vmatprep.subr.mxu0 0.0
    %80 = vmatpush1.msra.mxu0 %v32
    %81 = vmatprep.subr.mxu0 0.0
    %82 = vmatpush1.msra.mxu0 %v31
    %83 = vmatprep.subr.mxu0 0.0
    %84 = vmatpush1.msra.mxu0 %v30
    %85 = vmatprep.subr.mxu0 0.0
    %86 = vmatpush2.msra.mxu0 0.0
    %87 = vmatprep.subr.mxu0 0.0
    %88 = vmatpush2.msra.mxu0 0.0
    %89 = vmatprep.subr.mxu0 0.0
    %90 = vmatpush2.msra.mxu0 0.0
    %91 = vmatprep.subr.mxu0 0.0
    %92 = vmatpush2.msra.mxu0 0.0
    %93 = vmatprep.subr.mxu0 0.0
    %94 = vmatpush2.msra.mxu0 0.0
    %95 = vmatprep.subr.mxu0 0.0
    %96 = vmatpush2.msra.mxu0 0.0
    %97 = vmatprep.subr.mxu0 0.0
    %98 = vmatpush2.msra.mxu0 0.0
    %99 = vmatprep.subr.mxu0 0.0
    %100 = vmatpush2.msra.mxu0 0.0
    %101 = vmatprep.subr.mxu0 0.0
    %102 = vmatpush2.msra.mxu0 0.0
    %103 = vmatprep.subr.mxu0 0.0
    %104 = vmatpush2.msra.mxu0 0.0
    %105 = vmatprep.subr.mxu0 0.0
    %106 = vmatpush2.msra.mxu0 0.0
    %107 = vmatprep.subr.mxu0 0.0
    %108 = vmatpush2.msra.mxu0 0.0
    %109 = vmatprep.subr.mxu0 0.0
    %110 = vmatpush2.msra.mxu0 0.0
    %111 = vmatprep.subr.mxu0 0.0
    %112 = vmatpush2.msra.mxu0 0.0
    %113 = vmatprep.subr.mxu0 0.0
    %114 = vmatpush2.msra.mxu0 0.0
    %115 = vmatprep.subr.mxu0 0.0
    %116 = vmatpush2.msra.mxu0 0.0
    %117 = vmatprep.mubr.f32.mxu0 0.0
    %118 = vmatmul.mubr.f32.gmra.mxu0 %v51
    %v119 = vpop.f32.mrf.mxu0
    %v120 = vadd.f32 0.0, %v119
    %v121 = vpop.f32.mrf.mxu0
    %122 = vdwg.mxu0
    %v123 = vadd.f32 %v48, %v120
    %v124 = vtanh.pop %v123
    %v125 = vxor.u32 %v123, 2147483648
    %v126 = vmul.f32 %v125, 1.442695
    %v127 = vpow.pop %v126
    %v128 = vadd.f32 %v127, 1.0
    %v129 = vrcp.pop %v128
    %v130 = vmul.f32 1.0, %v129
    %v131 = vsel %vm47, %v124, %v130
    %v132 = vmul.f32 %v131, 0.0
    %134 = vrot.lane.b32.xlu0 %v131, 64
    %v135 = vpop.permute.xlu0 %134
    %v137 = vmul.f32 %v131, %v135
    %139 = vrot.lane.b32.xlu0 %v137, 32
    %v140 = vpop.permute.xlu0 %139
    %v142 = vadd.f32 %v132, %v140
    %v143 = vtanh.pop %v142
    %145 = vrot.lane.b32.xlu0 %v143, 64
    %v146 = vpop.permute.xlu0 %145
    %v148 = vmul.f32 %v131, %v146
    %149 = vmatprep.subr.mxu0 0.0
    %150 = vmatpush1.msra.mxu0 0.0
    %151 = vmatprep.subr.mxu0 0.0
    %152 = vmatpush1.msra.mxu0 0.0
    %153 = vmatprep.subr.mxu0 0.0
    %154 = vmatpush1.msra.mxu0 0.0
    %155 = vmatprep.subr.mxu0 0.0
    %156 = vmatpush1.msra.mxu0 0.0
    %157 = vmatprep.subr.mxu0 0.0
    %158 = vmatpush1.msra.mxu0 0.0
    %159 = vmatprep.subr.mxu0 0.0
    %160 = vmatpush1.msra.mxu0 0.0
    %161 = vmatprep.subr.mxu0 0.0
    %162 = vmatpush1.msra.mxu0 0.0
    %163 = vmatprep.subr.mxu0 0.0
    %164 = vmatpush1.msra.mxu0 0.0
    %165 = vmatprep.subr.mxu0 0.0
    %166 = vmatpush1.msra.mxu0 0.0
    %167 = vmatprep.subr.mxu0 0.0
    %168 = vmatpush1.msra.mxu0 0.0
    %169 = vmatprep.subr.mxu0 0.0
    %170 = vmatpush1.msra.mxu0 0.0
    %171 = vmatprep.subr.mxu0 0.0
    %172 = vmatpush1.msra.mxu0 0.0
    %173 = vmatprep.subr.mxu0 0.0
    %174 = vmatpush1.msra.mxu0 %v41
    %175 = vmatprep.subr.mxu0 0.0
    %176 = vmatpush1.msra.mxu0 %v40
    %177 = vmatprep.subr.mxu0 0.0
    %178 = vmatpush1.msra.mxu0 %v39
    %179 = vmatprep.subr.mxu0 0.0
    %180 = vmatpush1.msra.mxu0 %v38
    %181 = vmatprep.subr.mxu0 0.0
    %182 = vmatpush2.msra.mxu0 0.0
    %183 = vmatprep.subr.mxu0 0.0
    %184 = vmatpush2.msra.mxu0 0.0
    %185 = vmatprep.subr.mxu0 0.0
    %186 = vmatpush2.msra.mxu0 0.0
    %187 = vmatprep.subr.mxu0 0.0
    %188 = vmatpush2.msra.mxu0 0.0
    %189 = vmatprep.subr.mxu0 0.0
    %190 = vmatpush2.msra.mxu0 0.0
    %191 = vmatprep.subr.mxu0 0.0
    %192 = vmatpush2.msra.mxu0 0.0
    %193 = vmatprep.subr.mxu0 0.0
    %194 = vmatpush2.msra.mxu0 0.0
    %195 = vmatprep.subr.mxu0 0.0
    %196 = vmatpush2.msra.mxu0 0.0
    %197 = vmatprep.subr.mxu0 0.0
    %198 = vmatpush2.msra.mxu0 0.0
    %199 = vmatprep.subr.mxu0 0.0
    %200 = vmatpush2.msra.mxu0 0.0
    %201 = vmatprep.subr.mxu0 0.0
    %202 = vmatpush2.msra.mxu0 0.0
    %203 = vmatprep.subr.mxu0 0.0
    %204 = vmatpush2.msra.mxu0 0.0
    %205 = vmatprep.subr.mxu0 0.0
    %206 = vmatpush2.msra.mxu0 0.0
    %207 = vmatprep.subr.mxu0 0.0
    %208 = vmatpush2.msra.mxu0 0.0
    %209 = vmatprep.subr.mxu0 0.0
    %210 = vmatpush2.msra.mxu0 0.0
    %211 = vmatprep.subr.mxu0 0.0
    %212 = vmatpush2.msra.mxu0 0.0
    %213 = vmatprep.mubr.f32.mxu0 0.0
    %214 = vmatmul.mubr.f32.gmra.mxu0 %v51
    %v215 = vpop.f32.mrf.mxu0
    %v216 = vadd.f32 0.0, %v215
    %v217 = vpop.f32.mrf.mxu0
    %218 = vdwg.mxu0
    %220 = vrot.lane.b32.xlu0 %v148, 32
    %v221 = vpop.permute.xlu0 %220
    %v222 = vsel %vm49, %v221, 0
    %224 = vmatprep.subr.mxu0 0.0
    %225 = vmatpush1.msra.mxu0 0.0
    %226 = vmatprep.subr.mxu0 0.0
    %227 = vmatpush1.msra.mxu0 0.0
    %228 = vmatprep.subr.mxu0 0.0
    %229 = vmatpush1.msra.mxu0 0.0
    %230 = vmatprep.subr.mxu0 0.0
    %231 = vmatpush1.msra.mxu0 0.0
    %232 = vmatprep.subr.mxu0 0.0
    %233 = vmatpush1.msra.mxu0 0.0
    %234 = vmatprep.subr.mxu0 0.0
    %235 = vmatpush1.msra.mxu0 0.0
    %236 = vmatprep.subr.mxu0 0.0
    %237 = vmatpush1.msra.mxu0 0.0
    %238 = vmatprep.subr.mxu0 0.0
    %239 = vmatpush1.msra.mxu0 0.0
    %240 = vmatprep.subr.mxu0 0.0
    %241 = vmatpush1.msra.mxu0 0.0
    %242 = vmatprep.subr.mxu0 0.0
    %243 = vmatpush1.msra.mxu0 0.0
    %244 = vmatprep.subr.mxu0 0.0
    %245 = vmatpush1.msra.mxu0 0.0
    %246 = vmatprep.subr.mxu0 0.0
    %247 = vmatpush1.msra.mxu0 0.0
    %248 = vmatprep.subr.mxu0 0.0
    %249 = vmatpush1.msra.mxu0 %v37
    %250 = vmatprep.subr.mxu0 0.0
    %251 = vmatpush1.msra.mxu0 %v36
    %252 = vmatprep.subr.mxu0 0.0
    %253 = vmatpush1.msra.mxu0 %v35
    %254 = vmatprep.subr.mxu0 0.0
    %255 = vmatpush1.msra.mxu0 %v34
    %256 = vmatprep.subr.mxu0 0.0
    %257 = vmatpush2.msra.mxu0 0.0
    %258 = vmatprep.subr.mxu0 0.0
    %259 = vmatpush2.msra.mxu0 0.0
    %260 = vmatprep.subr.mxu0 0.0
    %261 = vmatpush2.msra.mxu0 0.0
    %262 = vmatprep.subr.mxu0 0.0
    %263 = vmatpush2.msra.mxu0 0.0
    %264 = vmatprep.subr.mxu0 0.0
    %265 = vmatpush2.msra.mxu0 0.0
    %266 = vmatprep.subr.mxu0 0.0
    %267 = vmatpush2.msra.mxu0 0.0
    %268 = vmatprep.subr.mxu0 0.0
    %269 = vmatpush2.msra.mxu0 0.0
    %270 = vmatprep.subr.mxu0 0.0
    %271 = vmatpush2.msra.mxu0 0.0
    %272 = vmatprep.subr.mxu0 0.0
    %273 = vmatpush2.msra.mxu0 0.0
    %274 = vmatprep.subr.mxu0 0.0
    %275 = vmatpush2.msra.mxu0 0.0
    %276 = vmatprep.subr.mxu0 0.0
    %277 = vmatpush2.msra.mxu0 0.0
    %278 = vmatprep.subr.mxu0 0.0
    %279 = vmatpush2.msra.mxu0 0.0
    %280 = vmatprep.subr.mxu0 0.0
    %281 = vmatpush2.msra.mxu0 0.0
    %282 = vmatprep.subr.mxu0 0.0
    %283 = vmatpush2.msra.mxu0 0.0
    %284 = vmatprep.subr.mxu0 0.0
    %285 = vmatpush2.msra.mxu0 0.0
    %286 = vmatprep.subr.mxu0 0.0
    %287 = vmatpush2.msra.mxu0 0.0
    %288 = vmatprep.mubr.f32.mxu0 0.0
    %289 = vmatmul.mubr.f32.gmra.mxu0 %v222
    %v290 = vpop.f32.mrf.mxu0
    %v291 = vadd.f32 %v216, %v290
    %v292 = vpop.f32.mrf.mxu0
    %293 = vdwg.mxu0
    %v294 = vadd.f32 %v291, %v42
    %v295 = vtanh.pop %v294
    %v296 = vxor.u32 %v294, 2147483648
    %v297 = vmul.f32 %v296, 1.442695
    %v298 = vpow.pop %v297
    %v299 = vadd.f32 %v298, 1.0
    %v300 = vrcp.pop %v299
    %v301 = vmul.f32 1.0, %v300
    %v302 = vsel %vm47, %v295, %v301
    %v303 = vmul.f32 %v302, 0.0
    %305 = vrot.lane.b32.xlu0 %v302, 64
    %v306 = vpop.permute.xlu0 %305
    %v308 = vmul.f32 %v302, %v306
    %310 = vrot.lane.b32.xlu0 %v308, 32
    %v311 = vpop.permute.xlu0 %310
    %v313 = vadd.f32 %v303, %v311
    %v314 = vtanh.pop %v313
    %316 = vrot.lane.b32.xlu0 %v314, 64
    %v317 = vpop.permute.xlu0 %316
    %v319 = vmul.f32 %v302, %v317
    %321 = vrot.lane.b32.xlu0 %v319, 32
    %v322 = vpop.permute.xlu0 %321
    %324 = vst.msk [vmem:[#allocation2] sm:$0xff] %vm49, %v322
    %s325 = scalar_lea.vmem %s0, 8
    %v326 = vld [vmem:[%s325] sm:$0xff]
    %327 = vmatprep.subr.mxu0 0.0
    %328 = vmatpush1.msra.mxu0 0.0
    %329 = vmatprep.subr.mxu0 0.0
    %330 = vmatpush1.msra.mxu0 0.0
    %331 = vmatprep.subr.mxu0 0.0
    %332 = vmatpush1.msra.mxu0 0.0
    %333 = vmatprep.subr.mxu0 0.0
    %334 = vmatpush1.msra.mxu0 0.0
    %335 = vmatprep.subr.mxu0 0.0
    %336 = vmatpush1.msra.mxu0 0.0
    %337 = vmatprep.subr.mxu0 0.0
    %338 = vmatpush1.msra.mxu0 0.0
    %339 = vmatprep.subr.mxu0 0.0
    %340 = vmatpush1.msra.mxu0 0.0
    %341 = vmatprep.subr.mxu0 0.0
    %342 = vmatpush1.msra.mxu0 0.0
    %343 = vmatprep.subr.mxu0 0.0
    %344 = vmatpush1.msra.mxu0 0.0
    %345 = vmatprep.subr.mxu0 0.0
    %346 = vmatpush1.msra.mxu0 0.0
    %347 = vmatprep.subr.mxu0 0.0
    %348 = vmatpush1.msra.mxu0 0.0
    %349 = vmatprep.subr.mxu0 0.0
    %350 = vmatpush1.msra.mxu0 0.0
    %351 = vmatprep.subr.mxu0 0.0
    %352 = vmatpush1.msra.mxu0 %v33
    %353 = vmatprep.subr.mxu0 0.0
    %354 = vmatpush1.msra.mxu0 %v32
    %355 = vmatprep.subr.mxu0 0.0
    %356 = vmatpush1.msra.mxu0 %v31
    %357 = vmatprep.subr.mxu0 0.0
    %358 = vmatpush1.msra.mxu0 %v30
    %359 = vmatprep.subr.mxu0 0.0
    %360 = vmatpush2.msra.mxu0 0.0
    %361 = vmatprep.subr.mxu0 0.0
    %362 = vmatpush2.msra.mxu0 0.0
    %363 = vmatprep.subr.mxu0 0.0
    %364 = vmatpush2.msra.mxu0 0.0
    %365 = vmatprep.subr.mxu0 0.0
    %366 = vmatpush2.msra.mxu0 0.0
    %367 = vmatprep.subr.mxu0 0.0
    %368 = vmatpush2.msra.mxu0 0.0
    %369 = vmatprep.subr.mxu0 0.0
    %370 = vmatpush2.msra.mxu0 0.0
    %371 = vmatprep.subr.mxu0 0.0
    %372 = vmatpush2.msra.mxu0 0.0
    %373 = vmatprep.subr.mxu0 0.0
    %374 = vmatpush2.msra.mxu0 0.0
    %375 = vmatprep.subr.mxu0 0.0
    %376 = vmatpush2.msra.mxu0 0.0
    %377 = vmatprep.subr.mxu0 0.0
    %378 = vmatpush2.msra.mxu0 0.0
    %379 = vmatprep.subr.mxu0 0.0
    %380 = vmatpush2.msra.mxu0 0.0
    %381 = vmatprep.subr.mxu0 0.0
    %382 = vmatpush2.msra.mxu0 0.0
    %383 = vmatprep.subr.mxu0 0.0
    %384 = vmatpush2.msra.mxu0 0.0
    %385 = vmatprep.subr.mxu0 0.0
    %386 = vmatpush2.msra.mxu0 0.0
    %387 = vmatprep.subr.mxu0 0.0
    %388 = vmatpush2.msra.mxu0 0.0
    %389 = vmatprep.subr.mxu0 0.0
    %390 = vmatpush2.msra.mxu0 0.0
    %391 = vmatprep.mubr.f32.mxu0 0.0
    %392 = vmatmul.mubr.f32.gmra.mxu0 %v222
    %v393 = vpop.f32.mrf.mxu0
    %v394 = vadd.f32 0.0, %v393
    %v395 = vpop.f32.mrf.mxu0
    %396 = vdwg.mxu0
    %v397 = vadd.f32 %v326, %v394
    %v398 = vtanh.pop %v397
    %v399 = vxor.u32 %v397, 2147483648
    %v400 = vmul.f32 %v399, 1.442695
    %v401 = vpow.pop %v400
    %v402 = vadd.f32 %v401, 1.0
    %v403 = vrcp.pop %v402
    %v404 = vmul.f32 1.0, %v403
    %v405 = vsel %vm47, %v398, %v404
    %v406 = vmul.f32 %v405, %v142
    %408 = vrot.lane.b32.xlu0 %v405, 64
    %v409 = vpop.permute.xlu0 %408
    %v411 = vmul.f32 %v405, %v409
    %413 = vrot.lane.b32.xlu0 %v411, 32
    %v414 = vpop.permute.xlu0 %413
    %v416 = vadd.f32 %v406, %v414
    %v417 = vtanh.pop %v416
    %419 = vrot.lane.b32.xlu0 %v417, 64
    %v420 = vpop.permute.xlu0 %419
    %v422 = vmul.f32 %v405, %v420
    %v423 = vsel %vm49, %v322, 0
    %425 = vmatprep.subr.mxu0 0.0
    %426 = vmatpush1.msra.mxu0 0.0
    %427 = vmatprep.subr.mxu0 0.0
    %428 = vmatpush1.msra.mxu0 0.0
    %429 = vmatprep.subr.mxu0 0.0
    %430 = vmatpush1.msra.mxu0 0.0
    %431 = vmatprep.subr.mxu0 0.0
    %432 = vmatpush1.msra.mxu0 0.0
    %433 = vmatprep.subr.mxu0 0.0
    %434 = vmatpush1.msra.mxu0 0.0
    %435 = vmatprep.subr.mxu0 0.0
    %436 = vmatpush1.msra.mxu0 0.0
    %437 = vmatprep.subr.mxu0 0.0
    %438 = vmatpush1.msra.mxu0 0.0
    %439 = vmatprep.subr.mxu0 0.0
    %440 = vmatpush1.msra.mxu0 0.0
    %441 = vmatprep.subr.mxu0 0.0
    %442 = vmatpush1.msra.mxu0 0.0
    %443 = vmatprep.subr.mxu0 0.0
    %444 = vmatpush1.msra.mxu0 0.0
    %445 = vmatprep.subr.mxu0 0.0
    %446 = vmatpush1.msra.mxu0 0.0
    %447 = vmatprep.subr.mxu0 0.0
    %448 = vmatpush1.msra.mxu0 0.0
    %449 = vmatprep.subr.mxu0 0.0
    %450 = vmatpush1.msra.mxu0 %v41
    %451 = vmatprep.subr.mxu0 0.0
    %452 = vmatpush1.msra.mxu0 %v40
    %453 = vmatprep.subr.mxu0 0.0
    %454 = vmatpush1.msra.mxu0 %v39
    %455 = vmatprep.subr.mxu0 0.0
    %456 = vmatpush1.msra.mxu0 %v38
    %457 = vmatprep.subr.mxu0 0.0
    %458 = vmatpush2.msra.mxu0 0.0
    %459 = vmatprep.subr.mxu0 0.0
    %460 = vmatpush2.msra.mxu0 0.0
    %461 = vmatprep.subr.mxu0 0.0
    %462 = vmatpush2.msra.mxu0 0.0
    %463 = vmatprep.subr.mxu0 0.0
    %464 = vmatpush2.msra.mxu0 0.0
    %465 = vmatprep.subr.mxu0 0.0
    %466 = vmatpush2.msra.mxu0 0.0
    %467 = vmatprep.subr.mxu0 0.0
    %468 = vmatpush2.msra.mxu0 0.0
    %469 = vmatprep.subr.mxu0 0.0
    %470 = vmatpush2.msra.mxu0 0.0
    %471 = vmatprep.subr.mxu0 0.0
    %472 = vmatpush2.msra.mxu0 0.0
    %473 = vmatprep.subr.mxu0 0.0
    %474 = vmatpush2.msra.mxu0 0.0
    %475 = vmatprep.subr.mxu0 0.0
    %476 = vmatpush2.msra.mxu0 0.0
    %477 = vmatprep.subr.mxu0 0.0
    %478 = vmatpush2.msra.mxu0 0.0
    %479 = vmatprep.subr.mxu0 0.0
    %480 = vmatpush2.msra.mxu0 0.0
    %481 = vmatprep.subr.mxu0 0.0
    %482 = vmatpush2.msra.mxu0 0.0
    %483 = vmatprep.subr.mxu0 0.0
    %484 = vmatpush2.msra.mxu0 0.0
    %485 = vmatprep.subr.mxu0 0.0
    %486 = vmatpush2.msra.mxu0 0.0
    %487 = vmatprep.subr.mxu0 0.0
    %488 = vmatpush2.msra.mxu0 0.0
    %489 = vmatprep.mubr.f32.mxu0 0.0
    %490 = vmatmul.mubr.f32.gmra.mxu0 %v423
    %v491 = vpop.f32.mrf.mxu0
    %v492 = vadd.f32 0.0, %v491
    %v493 = vpop.f32.mrf.mxu0
    %494 = vdwg.mxu0
    %496 = vrot.lane.b32.xlu0 %v422, 32
    %v497 = vpop.permute.xlu0 %496
    %v498 = vsel %vm49, %v497, 0
    %500 = vmatprep.subr.mxu0 0.0
    %501 = vmatpush1.msra.mxu0 0.0
    %502 = vmatprep.subr.mxu0 0.0
    %503 = vmatpush1.msra.mxu0 0.0
    %504 = vmatprep.subr.mxu0 0.0
    %505 = vmatpush1.msra.mxu0 0.0
    %506 = vmatprep.subr.mxu0 0.0
    %507 = vmatpush1.msra.mxu0 0.0
    %508 = vmatprep.subr.mxu0 0.0
    %509 = vmatpush1.msra.mxu0 0.0
    %510 = vmatprep.subr.mxu0 0.0
    %511 = vmatpush1.msra.mxu0 0.0
    %512 = vmatprep.subr.mxu0 0.0
    %513 = vmatpush1.msra.mxu0 0.0
    %514 = vmatprep.subr.mxu0 0.0
    %515 = vmatpush1.msra.mxu0 0.0
    %516 = vmatprep.subr.mxu0 0.0
    %517 = vmatpush1.msra.mxu0 0.0
    %518 = vmatprep.subr.mxu0 0.0
    %519 = vmatpush1.msra.mxu0 0.0
    %520 = vmatprep.subr.mxu0 0.0
    %521 = vmatpush1.msra.mxu0 0.0
    %522 = vmatprep.subr.mxu0 0.0
    %523 = vmatpush1.msra.mxu0 0.0
    %524 = vmatprep.subr.mxu0 0.0
    %525 = vmatpush1.msra.mxu0 %v37
    %526 = vmatprep.subr.mxu0 0.0
    %527 = vmatpush1.msra.mxu0 %v36
    %528 = vmatprep.subr.mxu0 0.0
    %529 = vmatpush1.msra.mxu0 %v35
    %530 = vmatprep.subr.mxu0 0.0
    %531 = vmatpush1.msra.mxu0 %v34
    %532 = vmatprep.subr.mxu0 0.0
    %533 = vmatpush2.msra.mxu0 0.0
    %534 = vmatprep.subr.mxu0 0.0
    %535 = vmatpush2.msra.mxu0 0.0
    %536 = vmatprep.subr.mxu0 0.0
    %537 = vmatpush2.msra.mxu0 0.0
    %538 = vmatprep.subr.mxu0 0.0
    %539 = vmatpush2.msra.mxu0 0.0
    %540 = vmatprep.subr.mxu0 0.0
    %541 = vmatpush2.msra.mxu0 0.0
    %542 = vmatprep.subr.mxu0 0.0
    %543 = vmatpush2.msra.mxu0 0.0
    %544 = vmatprep.subr.mxu0 0.0
    %545 = vmatpush2.msra.mxu0 0.0
    %546 = vmatprep.subr.mxu0 0.0
    %547 = vmatpush2.msra.mxu0 0.0
    %548 = vmatprep.subr.mxu0 0.0
    %549 = vmatpush2.msra.mxu0 0.0
    %550 = vmatprep.subr.mxu0 0.0
    %551 = vmatpush2.msra.mxu0 0.0
    %552 = vmatprep.subr.mxu0 0.0
    %553 = vmatpush2.msra.mxu0 0.0
    %554 = vmatprep.subr.mxu0 0.0
    %555 = vmatpush2.msra.mxu0 0.0
    %556 = vmatprep.subr.mxu0 0.0
    %557 = vmatpush2.msra.mxu0 0.0
    %558 = vmatprep.subr.mxu0 0.0
    %559 = vmatpush2.msra.mxu0 0.0
    %560 = vmatprep.subr.mxu0 0.0
    %561 = vmatpush2.msra.mxu0 0.0
    %562 = vmatprep.subr.mxu0 0.0
    %563 = vmatpush2.msra.mxu0 0.0
    %564 = vmatprep.mubr.f32.mxu0 0.0
    %565 = vmatmul.mubr.f32.gmra.mxu0 %v498
    %v566 = vpop.f32.mrf.mxu0
    %v567 = vadd.f32 %v492, %v566
    %v568 = vpop.f32.mrf.mxu0
    %569 = vdwg.mxu0
    %v570 = vadd.f32 %v567, %v42
    %v571 = vtanh.pop %v570
    %v572 = vxor.u32 %v570, 2147483648
    %v573 = vmul.f32 %v572, 1.442695
    %v574 = vpow.pop %v573
    %v575 = vadd.f32 %v574, 1.0
    %v576 = vrcp.pop %v575
    %v577 = vmul.f32 1.0, %v576
    %v578 = vsel %vm47, %v571, %v577
    %v579 = vmul.f32 %v578, %v313
    %581 = vrot.lane.b32.xlu0 %v578, 64
    %v582 = vpop.permute.xlu0 %581
    %v584 = vmul.f32 %v578, %v582
    %586 = vrot.lane.b32.xlu0 %v584, 32
    %v587 = vpop.permute.xlu0 %586
    %v589 = vadd.f32 %v579, %v587
    %v590 = vtanh.pop %v589
    %592 = vrot.lane.b32.xlu0 %v590, 64
    %v593 = vpop.permute.xlu0 %592
    %v595 = vmul.f32 %v578, %v593
    %597 = vrot.lane.b32.xlu0 %v595, 32
    %v598 = vpop.permute.xlu0 %597
    %s600 = scalar_lea.vmem [#allocation2], 8
    %601 = vst.msk [vmem:[%s600] sm:$0xff] %vm49, %v598
    %s602 = scalar_lea.vmem %s0, 16
    %v603 = vld [vmem:[%s602] sm:$0xff]
    %604 = vmatprep.subr.mxu0 0.0
    %605 = vmatpush1.msra.mxu0 0.0
    %606 = vmatprep.subr.mxu0 0.0
    %607 = vmatpush1.msra.mxu0 0.0
    %608 = vmatprep.subr.mxu0 0.0
    %609 = vmatpush1.msra.mxu0 0.0
    %610 = vmatprep.subr.mxu0 0.0
    %611 = vmatpush1.msra.mxu0 0.0
    %612 = vmatprep.subr.mxu0 0.0
    %613 = vmatpush1.msra.mxu0 0.0
    %614 = vmatprep.subr.mxu0 0.0
    %615 = vmatpush1.msra.mxu0 0.0
    %616 = vmatprep.subr.mxu0 0.0
    %617 = vmatpush1.msra.mxu0 0.0
    %618 = vmatprep.subr.mxu0 0.0
    %619 = vmatpush1.msra.mxu0 0.0
    %620 = vmatprep.subr.mxu0 0.0
    %621 = vmatpush1.msra.mxu0 0.0
    %622 = vmatprep.subr.mxu0 0.0
    %623 = vmatpush1.msra.mxu0 0.0
    %624 = vmatprep.subr.mxu0 0.0
    %625 = vmatpush1.msra.mxu0 0.0
    %626 = vmatprep.subr.mxu0 0.0
    %627 = vmatpush1.msra.mxu0 0.0
    %628 = vmatprep.subr.mxu0 0.0
    %629 = vmatpush1.msra.mxu0 %v33
    %630 = vmatprep.subr.mxu0 0.0
    %631 = vmatpush1.msra.mxu0 %v32
    %632 = vmatprep.subr.mxu0 0.0
    %633 = vmatpush1.msra.mxu0 %v31
    %634 = vmatprep.subr.mxu0 0.0
    %635 = vmatpush1.msra.mxu0 %v30
    %636 = vmatprep.subr.mxu0 0.0
    %637 = vmatpush2.msra.mxu0 0.0
    %638 = vmatprep.subr.mxu0 0.0
    %639 = vmatpush2.msra.mxu0 0.0
    %640 = vmatprep.subr.mxu0 0.0
    %641 = vmatpush2.msra.mxu0 0.0
    %642 = vmatprep.subr.mxu0 0.0
    %643 = vmatpush2.msra.mxu0 0.0
    %644 = vmatprep.subr.mxu0 0.0
    %645 = vmatpush2.msra.mxu0 0.0
    %646 = vmatprep.subr.mxu0 0.0
    %647 = vmatpush2.msra.mxu0 0.0
    %648 = vmatprep.subr.mxu0 0.0
    %649 = vmatpush2.msra.mxu0 0.0
    %650 = vmatprep.subr.mxu0 0.0
    %651 = vmatpush2.msra.mxu0 0.0
    %652 = vmatprep.subr.mxu0 0.0
    %653 = vmatpush2.msra.mxu0 0.0
    %654 = vmatprep.subr.mxu0 0.0
    %655 = vmatpush2.msra.mxu0 0.0
    %656 = vmatprep.subr.mxu0 0.0
    %657 = vmatpush2.msra.mxu0 0.0
    %658 = vmatprep.subr.mxu0 0.0
    %659 = vmatpush2.msra.mxu0 0.0
    %660 = vmatprep.subr.mxu0 0.0
    %661 = vmatpush2.msra.mxu0 0.0
    %662 = vmatprep.subr.mxu0 0.0
    %663 = vmatpush2.msra.mxu0 0.0
    %664 = vmatprep.subr.mxu0 0.0
    %665 = vmatpush2.msra.mxu0 0.0
    %666 = vmatprep.subr.mxu0 0.0
    %667 = vmatpush2.msra.mxu0 0.0
    %668 = vmatprep.mubr.f32.mxu0 0.0
    %669 = vmatmul.mubr.f32.gmra.mxu0 %v498
    %v670 = vpop.f32.mrf.mxu0
    %v671 = vadd.f32 0.0, %v670
    %v672 = vpop.f32.mrf.mxu0
    %673 = vdwg.mxu0
    %v674 = vadd.f32 %v603, %v671
    %v675 = vtanh.pop %v674
    %v676 = vxor.u32 %v674, 2147483648
    %v677 = vmul.f32 %v676, 1.442695
    %v678 = vpow.pop %v677
    %v679 = vadd.f32 %v678, 1.0
    %v680 = vrcp.pop %v679
    %v681 = vmul.f32 1.0, %v680
    %v682 = vsel %vm47, %v675, %v681
    %v683 = vmul.f32 %v682, %v416
    %685 = vrot.lane.b32.xlu0 %v682, 64
    %v686 = vpop.permute.xlu0 %685
    %v688 = vmul.f32 %v682, %v686
    %690 = vrot.lane.b32.xlu0 %v688, 32
    %v691 = vpop.permute.xlu0 %690
    %v693 = vadd.f32 %v683, %v691
    %v694 = vtanh.pop %v693
    %696 = vrot.lane.b32.xlu0 %v694, 64
    %v697 = vpop.permute.xlu0 %696
    %v699 = vmul.f32 %v682, %v697
    %v700 = vsel %vm49, %v598, 0
    %702 = vmatprep.subr.mxu0 0.0
    %703 = vmatpush1.msra.mxu0 0.0
    %704 = vmatprep.subr.mxu0 0.0
    %705 = vmatpush1.msra.mxu0 0.0
    %706 = vmatprep.subr.mxu0 0.0
    %707 = vmatpush1.msra.mxu0 0.0
    %708 = vmatprep.subr.mxu0 0.0
    %709 = vmatpush1.msra.mxu0 0.0
    %710 = vmatprep.subr.mxu0 0.0
    %711 = vmatpush1.msra.mxu0 0.0
    %712 = vmatprep.subr.mxu0 0.0
    %713 = vmatpush1.msra.mxu0 0.0
    %714 = vmatprep.subr.mxu0 0.0
    %715 = vmatpush1.msra.mxu0 0.0
    %716 = vmatprep.subr.mxu0 0.0
    %717 = vmatpush1.msra.mxu0 0.0
    %718 = vmatprep.subr.mxu0 0.0
    %719 = vmatpush1.msra.mxu0 0.0
    %720 = vmatprep.subr.mxu0 0.0
    %721 = vmatpush1.msra.mxu0 0.0
    %722 = vmatprep.subr.mxu0 0.0
    %723 = vmatpush1.msra.mxu0 0.0
    %724 = vmatprep.subr.mxu0 0.0
    %725 = vmatpush1.msra.mxu0 0.0
    %726 = vmatprep.subr.mxu0 0.0
    %727 = vmatpush1.msra.mxu0 %v41
    %728 = vmatprep.subr.mxu0 0.0
    %729 = vmatpush1.msra.mxu0 %v40
    %730 = vmatprep.subr.mxu0 0.0
    %731 = vmatpush1.msra.mxu0 %v39
    %732 = vmatprep.subr.mxu0 0.0
    %733 = vmatpush1.msra.mxu0 %v38
    %734 = vmatprep.subr.mxu0 0.0
    %735 = vmatpush2.msra.mxu0 0.0
    %736 = vmatprep.subr.mxu0 0.0
    %737 = vmatpush2.msra.mxu0 0.0
    %738 = vmatprep.subr.mxu0 0.0
    %739 = vmatpush2.msra.mxu0 0.0
    %740 = vmatprep.subr.mxu0 0.0
    %741 = vmatpush2.msra.mxu0 0.0
    %742 = vmatprep.subr.mxu0 0.0
    %743 = vmatpush2.msra.mxu0 0.0
    %744 = vmatprep.subr.mxu0 0.0
    %745 = vmatpush2.msra.mxu0 0.0
    %746 = vmatprep.subr.mxu0 0.0
    %747 = vmatpush2.msra.mxu0 0.0
    %748 = vmatprep.subr.mxu0 0.0
    %749 = vmatpush2.msra.mxu0 0.0
    %750 = vmatprep.subr.mxu0 0.0
    %751 = vmatpush2.msra.mxu0 0.0
    %752 = vmatprep.subr.mxu0 0.0
    %753 = vmatpush2.msra.mxu0 0.0
    %754 = vmatprep.subr.mxu0 0.0
    %755 = vmatpush2.msra.mxu0 0.0
    %756 = vmatprep.subr.mxu0 0.0
    %757 = vmatpush2.msra.mxu0 0.0
    %758 = vmatprep.subr.mxu0 0.0
    %759 = vmatpush2.msra.mxu0 0.0
    %760 = vmatprep.subr.mxu0 0.0
    %761 = vmatpush2.msra.mxu0 0.0
    %762 = vmatprep.subr.mxu0 0.0
    %763 = vmatpush2.msra.mxu0 0.0
    %764 = vmatprep.subr.mxu0 0.0
    %765 = vmatpush2.msra.mxu0 0.0
    %766 = vmatprep.mubr.f32.mxu0 0.0
    %767 = vmatmul.mubr.f32.gmra.mxu0 %v700
    %v768 = vpop.f32.mrf.mxu0
    %v769 = vadd.f32 0.0, %v768
    %v770 = vpop.f32.mrf.mxu0
    %771 = vdwg.mxu0
    %773 = vrot.lane.b32.xlu0 %v699, 32
    %v774 = vpop.permute.xlu0 %773
    %v775 = vsel %vm49, %v774, 0
    %777 = vmatprep.subr.mxu0 0.0
    %778 = vmatpush1.msra.mxu0 0.0
    %779 = vmatprep.subr.mxu0 0.0
    %780 = vmatpush1.msra.mxu0 0.0
    %781 = vmatprep.subr.mxu0 0.0
    %782 = vmatpush1.msra.mxu0 0.0
    %783 = vmatprep.subr.mxu0 0.0
    %784 = vmatpush1.msra.mxu0 0.0
    %785 = vmatprep.subr.mxu0 0.0
    %786 = vmatpush1.msra.mxu0 0.0
    %787 = vmatprep.subr.mxu0 0.0
    %788 = vmatpush1.msra.mxu0 0.0
    %789 = vmatprep.subr.mxu0 0.0
    %790 = vmatpush1.msra.mxu0 0.0
    %791 = vmatprep.subr.mxu0 0.0
    %792 = vmatpush1.msra.mxu0 0.0
    %793 = vmatprep.subr.mxu0 0.0
    %794 = vmatpush1.msra.mxu0 0.0
    %795 = vmatprep.subr.mxu0 0.0
    %796 = vmatpush1.msra.mxu0 0.0
    %797 = vmatprep.subr.mxu0 0.0
    %798 = vmatpush1.msra.mxu0 0.0
    %799 = vmatprep.subr.mxu0 0.0
    %800 = vmatpush1.msra.mxu0 0.0
    %801 = vmatprep.subr.mxu0 0.0
    %802 = vmatpush1.msra.mxu0 %v37
    %803 = vmatprep.subr.mxu0 0.0
    %804 = vmatpush1.msra.mxu0 %v36
    %805 = vmatprep.subr.mxu0 0.0
    %806 = vmatpush1.msra.mxu0 %v35
    %807 = vmatprep.subr.mxu0 0.0
    %808 = vmatpush1.msra.mxu0 %v34
    %809 = vmatprep.subr.mxu0 0.0
    %810 = vmatpush2.msra.mxu0 0.0
    %811 = vmatprep.subr.mxu0 0.0
    %812 = vmatpush2.msra.mxu0 0.0
    %813 = vmatprep.subr.mxu0 0.0
    %814 = vmatpush2.msra.mxu0 0.0
    %815 = vmatprep.subr.mxu0 0.0
    %816 = vmatpush2.msra.mxu0 0.0
    %817 = vmatprep.subr.mxu0 0.0
    %818 = vmatpush2.msra.mxu0 0.0
    %819 = vmatprep.subr.mxu0 0.0
    %820 = vmatpush2.msra.mxu0 0.0
    %821 = vmatprep.subr.mxu0 0.0
    %822 = vmatpush2.msra.mxu0 0.0
    %823 = vmatprep.subr.mxu0 0.0
    %824 = vmatpush2.msra.mxu0 0.0
    %825 = vmatprep.subr.mxu0 0.0
    %826 = vmatpush2.msra.mxu0 0.0
    %827 = vmatprep.subr.mxu0 0.0
    %828 = vmatpush2.msra.mxu0 0.0
    %829 = vmatprep.subr.mxu0 0.0
    %830 = vmatpush2.msra.mxu0 0.0
    %831 = vmatprep.subr.mxu0 0.0
    %832 = vmatpush2.msra.mxu0 0.0
    %833 = vmatprep.subr.mxu0 0.0
    %834 = vmatpush2.msra.mxu0 0.0
    %835 = vmatprep.subr.mxu0 0.0
    %836 = vmatpush2.msra.mxu0 0.0
    %837 = vmatprep.subr.mxu0 0.0
    %838 = vmatpush2.msra.mxu0 0.0
    %839 = vmatprep.subr.mxu0 0.0
    %840 = vmatpush2.msra.mxu0 0.0
    %841 = vmatprep.mubr.f32.mxu0 0.0
    %842 = vmatmul.mubr.f32.gmra.mxu0 %v775
    %v843 = vpop.f32.mrf.mxu0
    %v844 = vadd.f32 %v769, %v843
    %v845 = vpop.f32.mrf.mxu0
    %846 = vdwg.mxu0
    %v847 = vadd.f32 %v844, %v42
    %v848 = vtanh.pop %v847
    %v849 = vxor.u32 %v847, 2147483648
    %v850 = vmul.f32 %v849, 1.442695
    %v851 = vpow.pop %v850
    %v852 = vadd.f32 %v851, 1.0
    %v853 = vrcp.pop %v852
    %v854 = vmul.f32 1.0, %v853
    %v855 = vsel %vm47, %v848, %v854
    %v856 = vmul.f32 %v855, %v589
    %858 = vrot.lane.b32.xlu0 %v855, 64
    %v859 = vpop.permute.xlu0 %858
    %v861 = vmul.f32 %v855, %v859
    %863 = vrot.lane.b32.xlu0 %v861, 32
    %v864 = vpop.permute.xlu0 %863
    %v866 = vadd.f32 %v856, %v864
    %v867 = vtanh.pop %v866
    %869 = vrot.lane.b32.xlu0 %v867, 64
    %v870 = vpop.permute.xlu0 %869
    %v872 = vmul.f32 %v855, %v870
    %874 = vrot.lane.b32.xlu0 %v872, 32
    %v875 = vpop.permute.xlu0 %874
    %s877 = scalar_lea.vmem [#allocation2], 16
    %878 = vst.msk [vmem:[%s877] sm:$0xff] %vm49, %v875
    %s879 = scalar_lea.vmem %s0, 24
    %v880 = vld [vmem:[%s879] sm:$0xff]
    %881 = vmatprep.subr.mxu0 0.0
    %882 = vmatpush1.msra.mxu0 0.0
    %883 = vmatprep.subr.mxu0 0.0
    %884 = vmatpush1.msra.mxu0 0.0
    %885 = vmatprep.subr.mxu0 0.0
    %886 = vmatpush1.msra.mxu0 0.0
    %887 = vmatprep.subr.mxu0 0.0
    %888 = vmatpush1.msra.mxu0 0.0
    %889 = vmatprep.subr.mxu0 0.0
    %890 = vmatpush1.msra.mxu0 0.0
    %891 = vmatprep.subr.mxu0 0.0
    %892 = vmatpush1.msra.mxu0 0.0
    %893 = vmatprep.subr.mxu0 0.0
    %894 = vmatpush1.msra.mxu0 0.0
    %895 = vmatprep.subr.mxu0 0.0
    %896 = vmatpush1.msra.mxu0 0.0
    %897 = vmatprep.subr.mxu0 0.0
    %898 = vmatpush1.msra.mxu0 0.0
    %899 = vmatprep.subr.mxu0 0.0
    %900 = vmatpush1.msra.mxu0 0.0
    %901 = vmatprep.subr.mxu0 0.0
    %902 = vmatpush1.msra.mxu0 0.0
    %903 = vmatprep.subr.mxu0 0.0
    %904 = vmatpush1.msra.mxu0 0.0
    %905 = vmatprep.subr.mxu0 0.0
    %906 = vmatpush1.msra.mxu0 %v33
    %907 = vmatprep.subr.mxu0 0.0
    %908 = vmatpush1.msra.mxu0 %v32
    %909 = vmatprep.subr.mxu0 0.0
    %910 = vmatpush1.msra.mxu0 %v31
    %911 = vmatprep.subr.mxu0 0.0
    %912 = vmatpush1.msra.mxu0 %v30
    %913 = vmatprep.subr.mxu0 0.0
    %914 = vmatpush2.msra.mxu0 0.0
    %915 = vmatprep.subr.mxu0 0.0
    %916 = vmatpush2.msra.mxu0 0.0
    %917 = vmatprep.subr.mxu0 0.0
    %918 = vmatpush2.msra.mxu0 0.0
    %919 = vmatprep.subr.mxu0 0.0
    %920 = vmatpush2.msra.mxu0 0.0
    %921 = vmatprep.subr.mxu0 0.0
    %922 = vmatpush2.msra.mxu0 0.0
    %923 = vmatprep.subr.mxu0 0.0
    %924 = vmatpush2.msra.mxu0 0.0
    %925 = vmatprep.subr.mxu0 0.0
    %926 = vmatpush2.msra.mxu0 0.0
    %927 = vmatprep.subr.mxu0 0.0
    %928 = vmatpush2.msra.mxu0 0.0
    %929 = vmatprep.subr.mxu0 0.0
    %930 = vmatpush2.msra.mxu0 0.0
    %931 = vmatprep.subr.mxu0 0.0
    %932 = vmatpush2.msra.mxu0 0.0
    %933 = vmatprep.subr.mxu0 0.0
    %934 = vmatpush2.msra.mxu0 0.0
    %935 = vmatprep.subr.mxu0 0.0
    %936 = vmatpush2.msra.mxu0 0.0
    %937 = vmatprep.subr.mxu0 0.0
    %938 = vmatpush2.msra.mxu0 0.0
    %939 = vmatprep.subr.mxu0 0.0
    %940 = vmatpush2.msra.mxu0 0.0
    %941 = vmatprep.subr.mxu0 0.0
    %942 = vmatpush2.msra.mxu0 0.0
    %943 = vmatprep.subr.mxu0 0.0
    %944 = vmatpush2.msra.mxu0 0.0
    %945 = vmatprep.mubr.f32.mxu0 0.0
    %946 = vmatmul.mubr.f32.gmra.mxu0 %v775
    %v947 = vpop.f32.mrf.mxu0
    %v948 = vadd.f32 0.0, %v947
    %v949 = vpop.f32.mrf.mxu0
    %950 = vdwg.mxu0
    %v951 = vadd.f32 %v880, %v948
    %v952 = vtanh.pop %v951
    %v953 = vxor.u32 %v951, 2147483648
    %v954 = vmul.f32 %v953, 1.442695
    %v955 = vpow.pop %v954
    %v956 = vadd.f32 %v955, 1.0
    %v957 = vrcp.pop %v956
    %v958 = vmul.f32 1.0, %v957
    %v959 = vsel %vm47, %v952, %v958
    %v960 = vmul.f32 %v959, %v693
    %962 = vrot.lane.b32.xlu0 %v959, 64
    %v963 = vpop.permute.xlu0 %962
    %v965 = vmul.f32 %v959, %v963
    %967 = vrot.lane.b32.xlu0 %v965, 32
    %v968 = vpop.permute.xlu0 %967
    %v970 = vadd.f32 %v960, %v968
    %v971 = vtanh.pop %v970
    %973 = vrot.lane.b32.xlu0 %v971, 64
    %v974 = vpop.permute.xlu0 %973
    %v976 = vmul.f32 %v959, %v974
    %v977 = vsel %vm49, %v875, 0
    %979 = vmatprep.subr.mxu0 0.0
    %980 = vmatpush1.msra.mxu0 0.0
    %981 = vmatprep.subr.mxu0 0.0
    %982 = vmatpush1.msra.mxu0 0.0
    %983 = vmatprep.subr.mxu0 0.0
    %984 = vmatpush1.msra.mxu0 0.0
    %985 = vmatprep.subr.mxu0 0.0
    %986 = vmatpush1.msra.mxu0 0.0
    %987 = vmatprep.subr.mxu0 0.0
    %988 = vmatpush1.msra.mxu0 0.0
    %989 = vmatprep.subr.mxu0 0.0
    %990 = vmatpush1.msra.mxu0 0.0
    %991 = vmatprep.subr.mxu0 0.0
    %992 = vmatpush1.msra.mxu0 0.0
    %993 = vmatprep.subr.mxu0 0.0
    %994 = vmatpush1.msra.mxu0 0.0
    %995 = vmatprep.subr.mxu0 0.0
    %996 = vmatpush1.msra.mxu0 0.0
    %997 = vmatprep.subr.mxu0 0.0
    %998 = vmatpush1.msra.mxu0 0.0
    %999 = vmatprep.subr.mxu0 0.0
    %1000 = vmatpush1.msra.mxu0 0.0
    %1001 = vmatprep.subr.mxu0 0.0
    %1002 = vmatpush1.msra.mxu0 0.0
    %1003 = vmatprep.subr.mxu0 0.0
    %1004 = vmatpush1.msra.mxu0 %v41
    %1005 = vmatprep.subr.mxu0 0.0
    %1006 = vmatpush1.msra.mxu0 %v40
    %1007 = vmatprep.subr.mxu0 0.0
    %1008 = vmatpush1.msra.mxu0 %v39
    %1009 = vmatprep.subr.mxu0 0.0
    %1010 = vmatpush1.msra.mxu0 %v38
    %1011 = vmatprep.subr.mxu0 0.0
    %1012 = vmatpush2.msra.mxu0 0.0
    %1013 = vmatprep.subr.mxu0 0.0
    %1014 = vmatpush2.msra.mxu0 0.0
    %1015 = vmatprep.subr.mxu0 0.0
    %1016 = vmatpush2.msra.mxu0 0.0
    %1017 = vmatprep.subr.mxu0 0.0
    %1018 = vmatpush2.msra.mxu0 0.0
    %1019 = vmatprep.subr.mxu0 0.0
    %1020 = vmatpush2.msra.mxu0 0.0
    %1021 = vmatprep.subr.mxu0 0.0
    %1022 = vmatpush2.msra.mxu0 0.0
    %1023 = vmatprep.subr.mxu0 0.0
    %1024 = vmatpush2.msra.mxu0 0.0
    %1025 = vmatprep.subr.mxu0 0.0
    %1026 = vmatpush2.msra.mxu0 0.0
    %1027 = vmatprep.subr.mxu0 0.0
    %1028 = vmatpush2.msra.mxu0 0.0
    %1029 = vmatprep.subr.mxu0 0.0
    %1030 = vmatpush2.msra.mxu0 0.0
    %1031 = vmatprep.subr.mxu0 0.0
    %1032 = vmatpush2.msra.mxu0 0.0
    %1033 = vmatprep.subr.mxu0 0.0
    %1034 = vmatpush2.msra.mxu0 0.0
    %1035 = vmatprep.subr.mxu0 0.0
    %1036 = vmatpush2.msra.mxu0 0.0
    %1037 = vmatprep.subr.mxu0 0.0
    %1038 = vmatpush2.msra.mxu0 0.0
    %1039 = vmatprep.subr.mxu0 0.0
    %1040 = vmatpush2.msra.mxu0 0.0
    %1041 = vmatprep.subr.mxu0 0.0
    %1042 = vmatpush2.msra.mxu0 0.0
    %1043 = vmatprep.mubr.f32.mxu0 0.0
    %1044 = vmatmul.mubr.f32.gmra.mxu0 %v977
    %v1045 = vpop.f32.mrf.mxu0
    %v1046 = vadd.f32 0.0, %v1045
    %v1047 = vpop.f32.mrf.mxu0
    %1048 = vdwg.mxu0
    %1050 = vrot.lane.b32.xlu0 %v976, 32
    %v1051 = vpop.permute.xlu0 %1050
    %v1052 = vsel %vm49, %v1051, 0
    %1054 = vmatprep.subr.mxu0 0.0
    %1055 = vmatpush1.msra.mxu0 0.0
    %1056 = vmatprep.subr.mxu0 0.0
    %1057 = vmatpush1.msra.mxu0 0.0
    %1058 = vmatprep.subr.mxu0 0.0
    %1059 = vmatpush1.msra.mxu0 0.0
    %1060 = vmatprep.subr.mxu0 0.0
    %1061 = vmatpush1.msra.mxu0 0.0
    %1062 = vmatprep.subr.mxu0 0.0
    %1063 = vmatpush1.msra.mxu0 0.0
    %1064 = vmatprep.subr.mxu0 0.0
    %1065 = vmatpush1.msra.mxu0 0.0
    %1066 = vmatprep.subr.mxu0 0.0
    %1067 = vmatpush1.msra.mxu0 0.0
    %1068 = vmatprep.subr.mxu0 0.0
    %1069 = vmatpush1.msra.mxu0 0.0
    %1070 = vmatprep.subr.mxu0 0.0
    %1071 = vmatpush1.msra.mxu0 0.0
    %1072 = vmatprep.subr.mxu0 0.0
    %1073 = vmatpush1.msra.mxu0 0.0
    %1074 = vmatprep.subr.mxu0 0.0
    %1075 = vmatpush1.msra.mxu0 0.0
    %1076 = vmatprep.subr.mxu0 0.0
    %1077 = vmatpush1.msra.mxu0 0.0
    %1078 = vmatprep.subr.mxu0 0.0
    %1079 = vmatpush1.msra.mxu0 %v37
    %1080 = vmatprep.subr.mxu0 0.0
    %1081 = vmatpush1.msra.mxu0 %v36
    %1082 = vmatprep.subr.mxu0 0.0
    %1083 = vmatpush1.msra.mxu0 %v35
    %1084 = vmatprep.subr.mxu0 0.0
    %1085 = vmatpush1.msra.mxu0 %v34
    %1086 = vmatprep.subr.mxu0 0.0
    %1087 = vmatpush2.msra.mxu0 0.0
    %1088 = vmatprep.subr.mxu0 0.0
    %1089 = vmatpush2.msra.mxu0 0.0
    %1090 = vmatprep.subr.mxu0 0.0
    %1091 = vmatpush2.msra.mxu0 0.0
    %1092 = vmatprep.subr.mxu0 0.0
    %1093 = vmatpush2.msra.mxu0 0.0
    %1094 = vmatprep.subr.mxu0 0.0
    %1095 = vmatpush2.msra.mxu0 0.0
    %1096 = vmatprep.subr.mxu0 0.0
    %1097 = vmatpush2.msra.mxu0 0.0
    %1098 = vmatprep.subr.mxu0 0.0
    %1099 = vmatpush2.msra.mxu0 0.0
    %1100 = vmatprep.subr.mxu0 0.0
    %1101 = vmatpush2.msra.mxu0 0.0
    %1102 = vmatprep.subr.mxu0 0.0
    %1103 = vmatpush2.msra.mxu0 0.0
    %1104 = vmatprep.subr.mxu0 0.0
    %1105 = vmatpush2.msra.mxu0 0.0
    %1106 = vmatprep.subr.mxu0 0.0
    %1107 = vmatpush2.msra.mxu0 0.0
    %1108 = vmatprep.subr.mxu0 0.0
    %1109 = vmatpush2.msra.mxu0 0.0
    %1110 = vmatprep.subr.mxu0 0.0
    %1111 = vmatpush2.msra.mxu0 0.0
    %1112 = vmatprep.subr.mxu0 0.0
    %1113 = vmatpush2.msra.mxu0 0.0
    %1114 = vmatprep.subr.mxu0 0.0
    %1115 = vmatpush2.msra.mxu0 0.0
    %1116 = vmatprep.subr.mxu0 0.0
    %1117 = vmatpush2.msra.mxu0 0.0
    %1118 = vmatprep.mubr.f32.mxu0 0.0
    %1119 = vmatmul.mubr.f32.gmra.mxu0 %v1052
    %v1120 = vpop.f32.mrf.mxu0
    %v1121 = vadd.f32 %v1046, %v1120
    %v1122 = vpop.f32.mrf.mxu0
    %1123 = vdwg.mxu0
    %v1124 = vadd.f32 %v1121, %v42
    %v1125 = vtanh.pop %v1124
    %v1126 = vxor.u32 %v1124, 2147483648
    %v1127 = vmul.f32 %v1126, 1.442695
    %v1128 = vpow.pop %v1127
    %v1129 = vadd.f32 %v1128, 1.0
    %v1130 = vrcp.pop %v1129
    %v1131 = vmul.f32 1.0, %v1130
    %v1132 = vsel %vm47, %v1125, %v1131
    %v1133 = vmul.f32 %v1132, %v866
    %1135 = vrot.lane.b32.xlu0 %v1132, 64
    %v1136 = vpop.permute.xlu0 %1135
    %v1138 = vmul.f32 %v1132, %v1136
    %1140 = vrot.lane.b32.xlu0 %v1138, 32
    %v1141 = vpop.permute.xlu0 %1140
    %v1143 = vadd.f32 %v1133, %v1141
    %v1144 = vtanh.pop %v1143
    %1146 = vrot.lane.b32.xlu0 %v1144, 64
    %v1147 = vpop.permute.xlu0 %1146
    %v1149 = vmul.f32 %v1132, %v1147
    %1151 = vrot.lane.b32.xlu0 %v1149, 32
    %v1152 = vpop.permute.xlu0 %1151
    %s1154 = scalar_lea.vmem [#allocation2], 24
    %1155 = vst.msk [vmem:[%s1154] sm:$0xff] %vm49, %v1152
    %s1156 = scalar_lea.vmem %s0, 32
    %v1157 = vld [vmem:[%s1156] sm:$0xff]
    %1158 = vmatprep.subr.mxu0 0.0
    %1159 = vmatpush1.msra.mxu0 0.0
    %1160 = vmatprep.subr.mxu0 0.0
    %1161 = vmatpush1.msra.mxu0 0.0
    %1162 = vmatprep.subr.mxu0 0.0
    %1163 = vmatpush1.msra.mxu0 0.0
    %1164 = vmatprep.subr.mxu0 0.0
    %1165 = vmatpush1.msra.mxu0 0.0
    %1166 = vmatprep.subr.mxu0 0.0
    %1167 = vmatpush1.msra.mxu0 0.0
    %1168 = vmatprep.subr.mxu0 0.0
    %1169 = vmatpush1.msra.mxu0 0.0
    %1170 = vmatprep.subr.mxu0 0.0
    %1171 = vmatpush1.msra.mxu0 0.0
    %1172 = vmatprep.subr.mxu0 0.0
    %1173 = vmatpush1.msra.mxu0 0.0
    %1174 = vmatprep.subr.mxu0 0.0
    %1175 = vmatpush1.msra.mxu0 0.0
    %1176 = vmatprep.subr.mxu0 0.0
    %1177 = vmatpush1.msra.mxu0 0.0
    %1178 = vmatprep.subr.mxu0 0.0
    %1179 = vmatpush1.msra.mxu0 0.0
    %1180 = vmatprep.subr.mxu0 0.0
    %1181 = vmatpush1.msra.mxu0 0.0
    %1182 = vmatprep.subr.mxu0 0.0
    %1183 = vmatpush1.msra.mxu0 %v33
    %1184 = vmatprep.subr.mxu0 0.0
    %1185 = vmatpush1.msra.mxu0 %v32
    %1186 = vmatprep.subr.mxu0 0.0
    %1187 = vmatpush1.msra.mxu0 %v31
    %1188 = vmatprep.subr.mxu0 0.0
    %1189 = vmatpush1.msra.mxu0 %v30
    %1190 = vmatprep.subr.mxu0 0.0
    %1191 = vmatpush2.msra.mxu0 0.0
    %1192 = vmatprep.subr.mxu0 0.0
    %1193 = vmatpush2.msra.mxu0 0.0
    %1194 = vmatprep.subr.mxu0 0.0
    %1195 = vmatpush2.msra.mxu0 0.0
    %1196 = vmatprep.subr.mxu0 0.0
    %1197 = vmatpush2.msra.mxu0 0.0
    %1198 = vmatprep.subr.mxu0 0.0
    %1199 = vmatpush2.msra.mxu0 0.0
    %1200 = vmatprep.subr.mxu0 0.0
    %1201 = vmatpush2.msra.mxu0 0.0
    %1202 = vmatprep.subr.mxu0 0.0
    %1203 = vmatpush2.msra.mxu0 0.0
    %1204 = vmatprep.subr.mxu0 0.0
    %1205 = vmatpush2.msra.mxu0 0.0
    %1206 = vmatprep.subr.mxu0 0.0
    %1207 = vmatpush2.msra.mxu0 0.0
    %1208 = vmatprep.subr.mxu0 0.0
    %1209 = vmatpush2.msra.mxu0 0.0
    %1210 = vmatprep.subr.mxu0 0.0
    %1211 = vmatpush2.msra.mxu0 0.0
    %1212 = vmatprep.subr.mxu0 0.0
    %1213 = vmatpush2.msra.mxu0 0.0
    %1214 = vmatprep.subr.mxu0 0.0
    %1215 = vmatpush2.msra.mxu0 0.0
    %1216 = vmatprep.subr.mxu0 0.0
    %1217 = vmatpush2.msra.mxu0 0.0
    %1218 = vmatprep.subr.mxu0 0.0
    %1219 = vmatpush2.msra.mxu0 0.0
    %1220 = vmatprep.subr.mxu0 0.0
    %1221 = vmatpush2.msra.mxu0 0.0
    %1222 = vmatprep.mubr.f32.mxu0 0.0
    %1223 = vmatmul.mubr.f32.gmra.mxu0 %v1052
    %v1224 = vpop.f32.mrf.mxu0
    %v1225 = vadd.f32 0.0, %v1224
    %v1226 = vpop.f32.mrf.mxu0
    %1227 = vdwg.mxu0
    %v1228 = vadd.f32 %v1157, %v1225
    %v1229 = vtanh.pop %v1228
    %v1230 = vxor.u32 %v1228, 2147483648
    %v1231 = vmul.f32 %v1230, 1.442695
    %v1232 = vpow.pop %v1231
    %v1233 = vadd.f32 %v1232, 1.0
    %v1234 = vrcp.pop %v1233
    %v1235 = vmul.f32 1.0, %v1234
    %v1236 = vsel %vm47, %v1229, %v1235
    %v1237 = vmul.f32 %v1236, %v970
    %1239 = vrot.lane.b32.xlu0 %v1236, 64
    %v1240 = vpop.permute.xlu0 %1239
    %v1242 = vmul.f32 %v1236, %v1240
    %1244 = vrot.lane.b32.xlu0 %v1242, 32
    %v1245 = vpop.permute.xlu0 %1244
    %v1247 = vadd.f32 %v1237, %v1245
    %v1248 = vtanh.pop %v1247
    %1250 = vrot.lane.b32.xlu0 %v1248, 64
    %v1251 = vpop.permute.xlu0 %1250
    %v1253 = vmul.f32 %v1236, %v1251
    %v1254 = vsel %vm49, %v1152, 0
    %1256 = vmatprep.subr.mxu0 0.0
    %1257 = vmatpush1.msra.mxu0 0.0
    %1258 = vmatprep.subr.mxu0 0.0
    %1259 = vmatpush1.msra.mxu0 0.0
    %1260 = vmatprep.subr.mxu0 0.0
    %1261 = vmatpush1.msra.mxu0 0.0
    %1262 = vmatprep.subr.mxu0 0.0
    %1263 = vmatpush1.msra.mxu0 0.0
    %1264 = vmatprep.subr.mxu0 0.0
    %1265 = vmatpush1.msra.mxu0 0.0
    %1266 = vmatprep.subr.mxu0 0.0
    %1267 = vmatpush1.msra.mxu0 0.0
    %1268 = vmatprep.subr.mxu0 0.0
    %1269 = vmatpush1.msra.mxu0 0.0
    %1270 = vmatprep.subr.mxu0 0.0
    %1271 = vmatpush1.msra.mxu0 0.0
    %1272 = vmatprep.subr.mxu0 0.0
    %1273 = vmatpush1.msra.mxu0 0.0
    %1274 = vmatprep.subr.mxu0 0.0
    %1275 = vmatpush1.msra.mxu0 0.0
    %1276 = vmatprep.subr.mxu0 0.0
    %1277 = vmatpush1.msra.mxu0 0.0
    %1278 = vmatprep.subr.mxu0 0.0
    %1279 = vmatpush1.msra.mxu0 0.0
    %1280 = vmatprep.subr.mxu0 0.0
    %1281 = vmatpush1.msra.mxu0 %v41
    %1282 = vmatprep.subr.mxu0 0.0
    %1283 = vmatpush1.msra.mxu0 %v40
    %1284 = vmatprep.subr.mxu0 0.0
    %1285 = vmatpush1.msra.mxu0 %v39
    %1286 = vmatprep.subr.mxu0 0.0
    %1287 = vmatpush1.msra.mxu0 %v38
    %1288 = vmatprep.subr.mxu0 0.0
    %1289 = vmatpush2.msra.mxu0 0.0
    %1290 = vmatprep.subr.mxu0 0.0
    %1291 = vmatpush2.msra.mxu0 0.0
    %1292 = vmatprep.subr.mxu0 0.0
    %1293 = vmatpush2.msra.mxu0 0.0
    %1294 = vmatprep.subr.mxu0 0.0
    %1295 = vmatpush2.msra.mxu0 0.0
    %1296 = vmatprep.subr.mxu0 0.0
    %1297 = vmatpush2.msra.mxu0 0.0
    %1298 = vmatprep.subr.mxu0 0.0
    %1299 = vmatpush2.msra.mxu0 0.0
    %1300 = vmatprep.subr.mxu0 0.0
    %1301 = vmatpush2.msra.mxu0 0.0
    %1302 = vmatprep.subr.mxu0 0.0
    %1303 = vmatpush2.msra.mxu0 0.0
    %1304 = vmatprep.subr.mxu0 0.0
    %1305 = vmatpush2.msra.mxu0 0.0
    %1306 = vmatprep.subr.mxu0 0.0
    %1307 = vmatpush2.msra.mxu0 0.0
    %1308 = vmatprep.subr.mxu0 0.0
    %1309 = vmatpush2.msra.mxu0 0.0
    %1310 = vmatprep.subr.mxu0 0.0
    %1311 = vmatpush2.msra.mxu0 0.0
    %1312 = vmatprep.subr.mxu0 0.0
    %1313 = vmatpush2.msra.mxu0 0.0
    %1314 = vmatprep.subr.mxu0 0.0
    %1315 = vmatpush2.msra.mxu0 0.0
    %1316 = vmatprep.subr.mxu0 0.0
    %1317 = vmatpush2.msra.mxu0 0.0
    %1318 = vmatprep.subr.mxu0 0.0
    %1319 = vmatpush2.msra.mxu0 0.0
    %1320 = vmatprep.mubr.f32.mxu0 0.0
    %1321 = vmatmul.mubr.f32.gmra.mxu0 %v1254
    %v1322 = vpop.f32.mrf.mxu0
    %v1323 = vadd.f32 0.0, %v1322
    %v1324 = vpop.f32.mrf.mxu0
    %1325 = vdwg.mxu0
    %1327 = vrot.lane.b32.xlu0 %v1253, 32
    %v1328 = vpop.permute.xlu0 %1327
    %v1329 = vsel %vm49, %v1328, 0
    %1331 = vmatprep.subr.mxu0 0.0
    %1332 = vmatpush1.msra.mxu0 0.0
    %1333 = vmatprep.subr.mxu0 0.0
    %1334 = vmatpush1.msra.mxu0 0.0
    %1335 = vmatprep.subr.mxu0 0.0
    %1336 = vmatpush1.msra.mxu0 0.0
    %1337 = vmatprep.subr.mxu0 0.0
    %1338 = vmatpush1.msra.mxu0 0.0
    %1339 = vmatprep.subr.mxu0 0.0
    %1340 = vmatpush1.msra.mxu0 0.0
    %1341 = vmatprep.subr.mxu0 0.0
    %1342 = vmatpush1.msra.mxu0 0.0
    %1343 = vmatprep.subr.mxu0 0.0
    %1344 = vmatpush1.msra.mxu0 0.0
    %1345 = vmatprep.subr.mxu0 0.0
    %1346 = vmatpush1.msra.mxu0 0.0
    %1347 = vmatprep.subr.mxu0 0.0
    %1348 = vmatpush1.msra.mxu0 0.0
    %1349 = vmatprep.subr.mxu0 0.0
    %1350 = vmatpush1.msra.mxu0 0.0
    %1351 = vmatprep.subr.mxu0 0.0
    %1352 = vmatpush1.msra.mxu0 0.0
    %1353 = vmatprep.subr.mxu0 0.0
    %1354 = vmatpush1.msra.mxu0 0.0
    %1355 = vmatprep.subr.mxu0 0.0
    %1356 = vmatpush1.msra.mxu0 %v37
    %1357 = vmatprep.subr.mxu0 0.0
    %1358 = vmatpush1.msra.mxu0 %v36
    %1359 = vmatprep.subr.mxu0 0.0
    %1360 = vmatpush1.msra.mxu0 %v35
    %1361 = vmatprep.subr.mxu0 0.0
    %1362 = vmatpush1.msra.mxu0 %v34
    %1363 = vmatprep.subr.mxu0 0.0
    %1364 = vmatpush2.msra.mxu0 0.0
    %1365 = vmatprep.subr.mxu0 0.0
    %1366 = vmatpush2.msra.mxu0 0.0
    %1367 = vmatprep.subr.mxu0 0.0
    %1368 = vmatpush2.msra.mxu0 0.0
    %1369 = vmatprep.subr.mxu0 0.0
    %1370 = vmatpush2.msra.mxu0 0.0
    %1371 = vmatprep.subr.mxu0 0.0
    %1372 = vmatpush2.msra.mxu0 0.0
    %1373 = vmatprep.subr.mxu0 0.0
    %1374 = vmatpush2.msra.mxu0 0.0
    %1375 = vmatprep.subr.mxu0 0.0
    %1376 = vmatpush2.msra.mxu0 0.0
    %1377 = vmatprep.subr.mxu0 0.0
    %1378 = vmatpush2.msra.mxu0 0.0
    %1379 = vmatprep.subr.mxu0 0.0
    %1380 = vmatpush2.msra.mxu0 0.0
    %1381 = vmatprep.subr.mxu0 0.0
    %1382 = vmatpush2.msra.mxu0 0.0
    %1383 = vmatprep.subr.mxu0 0.0
    %1384 = vmatpush2.msra.mxu0 0.0
    %1385 = vmatprep.subr.mxu0 0.0
    %1386 = vmatpush2.msra.mxu0 0.0
    %1387 = vmatprep.subr.mxu0 0.0
    %1388 = vmatpush2.msra.mxu0 0.0
    %1389 = vmatprep.subr.mxu0 0.0
    %1390 = vmatpush2.msra.mxu0 0.0
    %1391 = vmatprep.subr.mxu0 0.0
    %1392 = vmatpush2.msra.mxu0 0.0
    %1393 = vmatprep.subr.mxu0 0.0
    %1394 = vmatpush2.msra.mxu0 0.0
    %1395 = vmatprep.mubr.f32.mxu0 0.0
    %1396 = vmatmul.mubr.f32.gmra.mxu0 %v1329
    %v1397 = vpop.f32.mrf.mxu0
    %v1398 = vadd.f32 %v1323, %v1397
    %v1399 = vpop.f32.mrf.mxu0
    %1400 = vdwg.mxu0
    %v1401 = vadd.f32 %v1398, %v42
    %v1402 = vtanh.pop %v1401
    %v1403 = vxor.u32 %v1401, 2147483648
    %v1404 = vmul.f32 %v1403, 1.442695
    %v1405 = vpow.pop %v1404
    %v1406 = vadd.f32 %v1405, 1.0
    %v1407 = vrcp.pop %v1406
    %v1408 = vmul.f32 1.0, %v1407
    %v1409 = vsel %vm47, %v1402, %v1408
    %v1410 = vmul.f32 %v1409, %v1143
    %1412 = vrot.lane.b32.xlu0 %v1409, 64
    %v1413 = vpop.permute.xlu0 %1412
    %v1415 = vmul.f32 %v1409, %v1413
    %1417 = vrot.lane.b32.xlu0 %v1415, 32
    %v1418 = vpop.permute.xlu0 %1417
    %v1420 = vadd.f32 %v1410, %v1418
    %v1421 = vtanh.pop %v1420
    %1423 = vrot.lane.b32.xlu0 %v1421, 64
    %v1424 = vpop.permute.xlu0 %1423
    %v1426 = vmul.f32 %v1409, %v1424
    %1428 = vrot.lane.b32.xlu0 %v1426, 32
    %v1429 = vpop.permute.xlu0 %1428
    %s1431 = scalar_lea.vmem [#allocation2], 32
    %1432 = vst.msk [vmem:[%s1431] sm:$0xff] %vm49, %v1429
    %s1433 = scalar_lea.vmem %s0, 40
    %v1434 = vld [vmem:[%s1433] sm:$0xff]
    %1435 = vmatprep.subr.mxu0 0.0
    %1436 = vmatpush1.msra.mxu0 0.0
    %1437 = vmatprep.subr.mxu0 0.0
    %1438 = vmatpush1.msra.mxu0 0.0
    %1439 = vmatprep.subr.mxu0 0.0
    %1440 = vmatpush1.msra.mxu0 0.0
    %1441 = vmatprep.subr.mxu0 0.0
    %1442 = vmatpush1.msra.mxu0 0.0
    %1443 = vmatprep.subr.mxu0 0.0
    %1444 = vmatpush1.msra.mxu0 0.0
    %1445 = vmatprep.subr.mxu0 0.0
    %1446 = vmatpush1.msra.mxu0 0.0
    %1447 = vmatprep.subr.mxu0 0.0
    %1448 = vmatpush1.msra.mxu0 0.0
    %1449 = vmatprep.subr.mxu0 0.0
    %1450 = vmatpush1.msra.mxu0 0.0
    %1451 = vmatprep.subr.mxu0 0.0
    %1452 = vmatpush1.msra.mxu0 0.0
    %1453 = vmatprep.subr.mxu0 0.0
    %1454 = vmatpush1.msra.mxu0 0.0
    %1455 = vmatprep.subr.mxu0 0.0
    %1456 = vmatpush1.msra.mxu0 0.0
    %1457 = vmatprep.subr.mxu0 0.0
    %1458 = vmatpush1.msra.mxu0 0.0
    %1459 = vmatprep.subr.mxu0 0.0
    %1460 = vmatpush1.msra.mxu0 %v33
    %1461 = vmatprep.subr.mxu0 0.0
    %1462 = vmatpush1.msra.mxu0 %v32
    %1463 = vmatprep.subr.mxu0 0.0
    %1464 = vmatpush1.msra.mxu0 %v31
    %1465 = vmatprep.subr.mxu0 0.0
    %1466 = vmatpush1.msra.mxu0 %v30
    %1467 = vmatprep.subr.mxu0 0.0
    %1468 = vmatpush2.msra.mxu0 0.0
    %1469 = vmatprep.subr.mxu0 0.0
    %1470 = vmatpush2.msra.mxu0 0.0
    %1471 = vmatprep.subr.mxu0 0.0
    %1472 = vmatpush2.msra.mxu0 0.0
    %1473 = vmatprep.subr.mxu0 0.0
    %1474 = vmatpush2.msra.mxu0 0.0
    %1475 = vmatprep.subr.mxu0 0.0
    %1476 = vmatpush2.msra.mxu0 0.0
    %1477 = vmatprep.subr.mxu0 0.0
    %1478 = vmatpush2.msra.mxu0 0.0
    %1479 = vmatprep.subr.mxu0 0.0
    %1480 = vmatpush2.msra.mxu0 0.0
    %1481 = vmatprep.subr.mxu0 0.0
    %1482 = vmatpush2.msra.mxu0 0.0
    %1483 = vmatprep.subr.mxu0 0.0
    %1484 = vmatpush2.msra.mxu0 0.0
    %1485 = vmatprep.subr.mxu0 0.0
    %1486 = vmatpush2.msra.mxu0 0.0
    %1487 = vmatprep.subr.mxu0 0.0
    %1488 = vmatpush2.msra.mxu0 0.0
    %1489 = vmatprep.subr.mxu0 0.0
    %1490 = vmatpush2.msra.mxu0 0.0
    %1491 = vmatprep.subr.mxu0 0.0
    %1492 = vmatpush2.msra.mxu0 0.0
    %1493 = vmatprep.subr.mxu0 0.0
    %1494 = vmatpush2.msra.mxu0 0.0
    %1495 = vmatprep.subr.mxu0 0.0
    %1496 = vmatpush2.msra.mxu0 0.0
    %1497 = vmatprep.subr.mxu0 0.0
    %1498 = vmatpush2.msra.mxu0 0.0
    %1499 = vmatprep.mubr.f32.mxu0 0.0
    %1500 = vmatmul.mubr.f32.gmra.mxu0 %v1329
    %v1501 = vpop.f32.mrf.mxu0
    %v1502 = vadd.f32 0.0, %v1501
    %v1503 = vpop.f32.mrf.mxu0
    %1504 = vdwg.mxu0
    %v1505 = vadd.f32 %v1434, %v1502
    %v1506 = vtanh.pop %v1505
    %v1507 = vxor.u32 %v1505, 2147483648
    %v1508 = vmul.f32 %v1507, 1.442695
    %v1509 = vpow.pop %v1508
    %v1510 = vadd.f32 %v1509, 1.0
    %v1511 = vrcp.pop %v1510
    %v1512 = vmul.f32 1.0, %v1511
    %v1513 = vsel %vm47, %v1506, %v1512
    %v1514 = vmul.f32 %v1513, %v1247
    %1516 = vrot.lane.b32.xlu0 %v1513, 64
    %v1517 = vpop.permute.xlu0 %1516
    %v1519 = vmul.f32 %v1513, %v1517
    %1521 = vrot.lane.b32.xlu0 %v1519, 32
    %v1522 = vpop.permute.xlu0 %1521
    %v1524 = vadd.f32 %v1514, %v1522
    %v1525 = vtanh.pop %v1524
    %1527 = vrot.lane.b32.xlu0 %v1525, 64
    %v1528 = vpop.permute.xlu0 %1527
    %v1530 = vmul.f32 %v1513, %v1528
    %v1531 = vsel %vm49, %v1429, 0
    %1533 = vmatprep.subr.mxu0 0.0
    %1534 = vmatpush1.msra.mxu0 0.0
    %1535 = vmatprep.subr.mxu0 0.0
    %1536 = vmatpush1.msra.mxu0 0.0
    %1537 = vmatprep.subr.mxu0 0.0
    %1538 = vmatpush1.msra.mxu0 0.0
    %1539 = vmatprep.subr.mxu0 0.0
    %1540 = vmatpush1.msra.mxu0 0.0
    %1541 = vmatprep.subr.mxu0 0.0
    %1542 = vmatpush1.msra.mxu0 0.0
    %1543 = vmatprep.subr.mxu0 0.0
    %1544 = vmatpush1.msra.mxu0 0.0
    %1545 = vmatprep.subr.mxu0 0.0
    %1546 = vmatpush1.msra.mxu0 0.0
    %1547 = vmatprep.subr.mxu0 0.0
    %1548 = vmatpush1.msra.mxu0 0.0
    %1549 = vmatprep.subr.mxu0 0.0
    %1550 = vmatpush1.msra.mxu0 0.0
    %1551 = vmatprep.subr.mxu0 0.0
    %1552 = vmatpush1.msra.mxu0 0.0
    %1553 = vmatprep.subr.mxu0 0.0
    %1554 = vmatpush1.msra.mxu0 0.0
    %1555 = vmatprep.subr.mxu0 0.0
    %1556 = vmatpush1.msra.mxu0 0.0
    %1557 = vmatprep.subr.mxu0 0.0
    %1558 = vmatpush1.msra.mxu0 %v41
    %1559 = vmatprep.subr.mxu0 0.0
    %1560 = vmatpush1.msra.mxu0 %v40
    %1561 = vmatprep.subr.mxu0 0.0
    %1562 = vmatpush1.msra.mxu0 %v39
    %1563 = vmatprep.subr.mxu0 0.0
    %1564 = vmatpush1.msra.mxu0 %v38
    %1565 = vmatprep.subr.mxu0 0.0
    %1566 = vmatpush2.msra.mxu0 0.0
    %1567 = vmatprep.subr.mxu0 0.0
    %1568 = vmatpush2.msra.mxu0 0.0
    %1569 = vmatprep.subr.mxu0 0.0
    %1570 = vmatpush2.msra.mxu0 0.0
    %1571 = vmatprep.subr.mxu0 0.0
    %1572 = vmatpush2.msra.mxu0 0.0
    %1573 = vmatprep.subr.mxu0 0.0
    %1574 = vmatpush2.msra.mxu0 0.0
    %1575 = vmatprep.subr.mxu0 0.0
    %1576 = vmatpush2.msra.mxu0 0.0
    %1577 = vmatprep.subr.mxu0 0.0
    %1578 = vmatpush2.msra.mxu0 0.0
    %1579 = vmatprep.subr.mxu0 0.0
    %1580 = vmatpush2.msra.mxu0 0.0
    %1581 = vmatprep.subr.mxu0 0.0
    %1582 = vmatpush2.msra.mxu0 0.0
    %1583 = vmatprep.subr.mxu0 0.0
    %1584 = vmatpush2.msra.mxu0 0.0
    %1585 = vmatprep.subr.mxu0 0.0
    %1586 = vmatpush2.msra.mxu0 0.0
    %1587 = vmatprep.subr.mxu0 0.0
    %1588 = vmatpush2.msra.mxu0 0.0
    %1589 = vmatprep.subr.mxu0 0.0
    %1590 = vmatpush2.msra.mxu0 0.0
    %1591 = vmatprep.subr.mxu0 0.0
    %1592 = vmatpush2.msra.mxu0 0.0
    %1593 = vmatprep.subr.mxu0 0.0
    %1594 = vmatpush2.msra.mxu0 0.0
    %1595 = vmatprep.subr.mxu0 0.0
    %1596 = vmatpush2.msra.mxu0 0.0
    %1597 = vmatprep.mubr.f32.mxu0 0.0
    %1598 = vmatmul.mubr.f32.gmra.mxu0 %v1531
    %v1599 = vpop.f32.mrf.mxu0
    %v1600 = vadd.f32 0.0, %v1599
    %v1601 = vpop.f32.mrf.mxu0
    %1602 = vdwg.mxu0
    %1604 = vrot.lane.b32.xlu0 %v1530, 32
    %v1605 = vpop.permute.xlu0 %1604
    %v1606 = vsel %vm49, %v1605, 0
    %1608 = vmatprep.subr.mxu0 0.0
    %1609 = vmatpush1.msra.mxu0 0.0
    %1610 = vmatprep.subr.mxu0 0.0
    %1611 = vmatpush1.msra.mxu0 0.0
    %1612 = vmatprep.subr.mxu0 0.0
    %1613 = vmatpush1.msra.mxu0 0.0
    %1614 = vmatprep.subr.mxu0 0.0
    %1615 = vmatpush1.msra.mxu0 0.0
    %1616 = vmatprep.subr.mxu0 0.0
    %1617 = vmatpush1.msra.mxu0 0.0
    %1618 = vmatprep.subr.mxu0 0.0
    %1619 = vmatpush1.msra.mxu0 0.0
    %1620 = vmatprep.subr.mxu0 0.0
    %1621 = vmatpush1.msra.mxu0 0.0
    %1622 = vmatprep.subr.mxu0 0.0
    %1623 = vmatpush1.msra.mxu0 0.0
    %1624 = vmatprep.subr.mxu0 0.0
    %1625 = vmatpush1.msra.mxu0 0.0
    %1626 = vmatprep.subr.mxu0 0.0
    %1627 = vmatpush1.msra.mxu0 0.0
    %1628 = vmatprep.subr.mxu0 0.0
    %1629 = vmatpush1.msra.mxu0 0.0
    %1630 = vmatprep.subr.mxu0 0.0
    %1631 = vmatpush1.msra.mxu0 0.0
    %1632 = vmatprep.subr.mxu0 0.0
    %1633 = vmatpush1.msra.mxu0 %v37
    %1634 = vmatprep.subr.mxu0 0.0
    %1635 = vmatpush1.msra.mxu0 %v36
    %1636 = vmatprep.subr.mxu0 0.0
    %1637 = vmatpush1.msra.mxu0 %v35
    %1638 = vmatprep.subr.mxu0 0.0
    %1639 = vmatpush1.msra.mxu0 %v34
    %1640 = vmatprep.subr.mxu0 0.0
    %1641 = vmatpush2.msra.mxu0 0.0
    %1642 = vmatprep.subr.mxu0 0.0
    %1643 = vmatpush2.msra.mxu0 0.0
    %1644 = vmatprep.subr.mxu0 0.0
    %1645 = vmatpush2.msra.mxu0 0.0
    %1646 = vmatprep.subr.mxu0 0.0
    %1647 = vmatpush2.msra.mxu0 0.0
    %1648 = vmatprep.subr.mxu0 0.0
    %1649 = vmatpush2.msra.mxu0 0.0
    %1650 = vmatprep.subr.mxu0 0.0
    %1651 = vmatpush2.msra.mxu0 0.0
    %1652 = vmatprep.subr.mxu0 0.0
    %1653 = vmatpush2.msra.mxu0 0.0
    %1654 = vmatprep.subr.mxu0 0.0
    %1655 = vmatpush2.msra.mxu0 0.0
    %1656 = vmatprep.subr.mxu0 0.0
    %1657 = vmatpush2.msra.mxu0 0.0
    %1658 = vmatprep.subr.mxu0 0.0
    %1659 = vmatpush2.msra.mxu0 0.0
    %1660 = vmatprep.subr.mxu0 0.0
    %1661 = vmatpush2.msra.mxu0 0.0
    %1662 = vmatprep.subr.mxu0 0.0
    %1663 = vmatpush2.msra.mxu0 0.0
    %1664 = vmatprep.subr.mxu0 0.0
    %1665 = vmatpush2.msra.mxu0 0.0
    %1666 = vmatprep.subr.mxu0 0.0
    %1667 = vmatpush2.msra.mxu0 0.0
    %1668 = vmatprep.subr.mxu0 0.0
    %1669 = vmatpush2.msra.mxu0 0.0
    %1670 = vmatprep.subr.mxu0 0.0
    %1671 = vmatpush2.msra.mxu0 0.0
    %1672 = vmatprep.mubr.f32.mxu0 0.0
    %1673 = vmatmul.mubr.f32.gmra.mxu0 %v1606
    %v1674 = vpop.f32.mrf.mxu0
    %v1675 = vadd.f32 %v1600, %v1674
    %v1676 = vpop.f32.mrf.mxu0
    %1677 = vdwg.mxu0
    %v1678 = vadd.f32 %v1675, %v42
    %v1679 = vtanh.pop %v1678
    %v1680 = vxor.u32 %v1678, 2147483648
    %v1681 = vmul.f32 %v1680, 1.442695
    %v1682 = vpow.pop %v1681
    %v1683 = vadd.f32 %v1682, 1.0
    %v1684 = vrcp.pop %v1683
    %v1685 = vmul.f32 1.0, %v1684
    %v1686 = vsel %vm47, %v1679, %v1685
    %v1687 = vmul.f32 %v1686, %v1420
    %1689 = vrot.lane.b32.xlu0 %v1686, 64
    %v1690 = vpop.permute.xlu0 %1689
    %v1692 = vmul.f32 %v1686, %v1690
    %1694 = vrot.lane.b32.xlu0 %v1692, 32
    %v1695 = vpop.permute.xlu0 %1694
    %v1697 = vadd.f32 %v1687, %v1695
    %v1698 = vtanh.pop %v1697
    %1700 = vrot.lane.b32.xlu0 %v1698, 64
    %v1701 = vpop.permute.xlu0 %1700
    %v1703 = vmul.f32 %v1686, %v1701
    %1705 = vrot.lane.b32.xlu0 %v1703, 32
    %v1706 = vpop.permute.xlu0 %1705
    %s1708 = scalar_lea.vmem [#allocation2], 40
    %1709 = vst.msk [vmem:[%s1708] sm:$0xff] %vm49, %v1706
    %s1710 = scalar_lea.vmem %s0, 48
    %v1711 = vld [vmem:[%s1710] sm:$0xff]
    %1712 = vmatprep.subr.mxu0 0.0
    %1713 = vmatpush1.msra.mxu0 0.0
    %1714 = vmatprep.subr.mxu0 0.0
    %1715 = vmatpush1.msra.mxu0 0.0
    %1716 = vmatprep.subr.mxu0 0.0
    %1717 = vmatpush1.msra.mxu0 0.0
    %1718 = vmatprep.subr.mxu0 0.0
    %1719 = vmatpush1.msra.mxu0 0.0
    %1720 = vmatprep.subr.mxu0 0.0
    %1721 = vmatpush1.msra.mxu0 0.0
    %1722 = vmatprep.subr.mxu0 0.0
    %1723 = vmatpush1.msra.mxu0 0.0
    %1724 = vmatprep.subr.mxu0 0.0
    %1725 = vmatpush1.msra.mxu0 0.0
    %1726 = vmatprep.subr.mxu0 0.0
    %1727 = vmatpush1.msra.mxu0 0.0
    %1728 = vmatprep.subr.mxu0 0.0
    %1729 = vmatpush1.msra.mxu0 0.0
    %1730 = vmatprep.subr.mxu0 0.0
    %1731 = vmatpush1.msra.mxu0 0.0
    %1732 = vmatprep.subr.mxu0 0.0
    %1733 = vmatpush1.msra.mxu0 0.0
    %1734 = vmatprep.subr.mxu0 0.0
    %1735 = vmatpush1.msra.mxu0 0.0
    %1736 = vmatprep.subr.mxu0 0.0
    %1737 = vmatpush1.msra.mxu0 %v33
    %1738 = vmatprep.subr.mxu0 0.0
    %1739 = vmatpush1.msra.mxu0 %v32
    %1740 = vmatprep.subr.mxu0 0.0
    %1741 = vmatpush1.msra.mxu0 %v31
    %1742 = vmatprep.subr.mxu0 0.0
    %1743 = vmatpush1.msra.mxu0 %v30
    %1744 = vmatprep.subr.mxu0 0.0
    %1745 = vmatpush2.msra.mxu0 0.0
    %1746 = vmatprep.subr.mxu0 0.0
    %1747 = vmatpush2.msra.mxu0 0.0
    %1748 = vmatprep.subr.mxu0 0.0
    %1749 = vmatpush2.msra.mxu0 0.0
    %1750 = vmatprep.subr.mxu0 0.0
    %1751 = vmatpush2.msra.mxu0 0.0
    %1752 = vmatprep.subr.mxu0 0.0
    %1753 = vmatpush2.msra.mxu0 0.0
    %1754 = vmatprep.subr.mxu0 0.0
    %1755 = vmatpush2.msra.mxu0 0.0
    %1756 = vmatprep.subr.mxu0 0.0
    %1757 = vmatpush2.msra.mxu0 0.0
    %1758 = vmatprep.subr.mxu0 0.0
    %1759 = vmatpush2.msra.mxu0 0.0
    %1760 = vmatprep.subr.mxu0 0.0
    %1761 = vmatpush2.msra.mxu0 0.0
    %1762 = vmatprep.subr.mxu0 0.0
    %1763 = vmatpush2.msra.mxu0 0.0
    %1764 = vmatprep.subr.mxu0 0.0
    %1765 = vmatpush2.msra.mxu0 0.0
    %1766 = vmatprep.subr.mxu0 0.0
    %1767 = vmatpush2.msra.mxu0 0.0
    %1768 = vmatprep.subr.mxu0 0.0
    %1769 = vmatpush2.msra.mxu0 0.0
    %1770 = vmatprep.subr.mxu0 0.0
    %1771 = vmatpush2.msra.mxu0 0.0
    %1772 = vmatprep.subr.mxu0 0.0
    %1773 = vmatpush2.msra.mxu0 0.0
    %1774 = vmatprep.subr.mxu0 0.0
    %1775 = vmatpush2.msra.mxu0 0.0
    %1776 = vmatprep.mubr.f32.mxu0 0.0
    %1777 = vmatmul.mubr.f32.gmra.mxu0 %v1606
    %v1778 = vpop.f32.mrf.mxu0
    %v1779 = vadd.f32 0.0, %v1778
    %v1780 = vpop.f32.mrf.mxu0
    %1781 = vdwg.mxu0
    %v1782 = vadd.f32 %v1711, %v1779
    %v1783 = vtanh.pop %v1782
    %v1784 = vxor.u32 %v1782, 2147483648
    %v1785 = vmul.f32 %v1784, 1.442695
    %v1786 = vpow.pop %v1785
    %v1787 = vadd.f32 %v1786, 1.0
    %v1788 = vrcp.pop %v1787
    %v1789 = vmul.f32 1.0, %v1788
    %v1790 = vsel %vm47, %v1783, %v1789
    %v1791 = vmul.f32 %v1790, %v1524
    %1793 = vrot.lane.b32.xlu0 %v1790, 64
    %v1794 = vpop.permute.xlu0 %1793
    %v1796 = vmul.f32 %v1790, %v1794
    %1798 = vrot.lane.b32.xlu0 %v1796, 32
    %v1799 = vpop.permute.xlu0 %1798
    %v1801 = vadd.f32 %v1791, %v1799
    %v1802 = vtanh.pop %v1801
    %1804 = vrot.lane.b32.xlu0 %v1802, 64
    %v1805 = vpop.permute.xlu0 %1804
    %v1807 = vmul.f32 %v1790, %v1805
    %v1808 = vsel %vm49, %v1706, 0
    %1810 = vmatprep.subr.mxu0 0.0
    %1811 = vmatpush1.msra.mxu0 0.0
    %1812 = vmatprep.subr.mxu0 0.0
    %1813 = vmatpush1.msra.mxu0 0.0
    %1814 = vmatprep.subr.mxu0 0.0
    %1815 = vmatpush1.msra.mxu0 0.0
    %1816 = vmatprep.subr.mxu0 0.0
    %1817 = vmatpush1.msra.mxu0 0.0
    %1818 = vmatprep.subr.mxu0 0.0
    %1819 = vmatpush1.msra.mxu0 0.0
    %1820 = vmatprep.subr.mxu0 0.0
    %1821 = vmatpush1.msra.mxu0 0.0
    %1822 = vmatprep.subr.mxu0 0.0
    %1823 = vmatpush1.msra.mxu0 0.0
    %1824 = vmatprep.subr.mxu0 0.0
    %1825 = vmatpush1.msra.mxu0 0.0
    %1826 = vmatprep.subr.mxu0 0.0
    %1827 = vmatpush1.msra.mxu0 0.0
    %1828 = vmatprep.subr.mxu0 0.0
    %1829 = vmatpush1.msra.mxu0 0.0
    %1830 = vmatprep.subr.mxu0 0.0
    %1831 = vmatpush1.msra.mxu0 0.0
    %1832 = vmatprep.subr.mxu0 0.0
    %1833 = vmatpush1.msra.mxu0 0.0
    %1834 = vmatprep.subr.mxu0 0.0
    %1835 = vmatpush1.msra.mxu0 %v41
    %1836 = vmatprep.subr.mxu0 0.0
    %1837 = vmatpush1.msra.mxu0 %v40
    %1838 = vmatprep.subr.mxu0 0.0
    %1839 = vmatpush1.msra.mxu0 %v39
    %1840 = vmatprep.subr.mxu0 0.0
    %1841 = vmatpush1.msra.mxu0 %v38
    %1842 = vmatprep.subr.mxu0 0.0
    %1843 = vmatpush2.msra.mxu0 0.0
    %1844 = vmatprep.subr.mxu0 0.0
    %1845 = vmatpush2.msra.mxu0 0.0
    %1846 = vmatprep.subr.mxu0 0.0
    %1847 = vmatpush2.msra.mxu0 0.0
    %1848 = vmatprep.subr.mxu0 0.0
    %1849 = vmatpush2.msra.mxu0 0.0
    %1850 = vmatprep.subr.mxu0 0.0
    %1851 = vmatpush2.msra.mxu0 0.0
    %1852 = vmatprep.subr.mxu0 0.0
    %1853 = vmatpush2.msra.mxu0 0.0
    %1854 = vmatprep.subr.mxu0 0.0
    %1855 = vmatpush2.msra.mxu0 0.0
    %1856 = vmatprep.subr.mxu0 0.0
    %1857 = vmatpush2.msra.mxu0 0.0
    %1858 = vmatprep.subr.mxu0 0.0
    %1859 = vmatpush2.msra.mxu0 0.0
    %1860 = vmatprep.subr.mxu0 0.0
    %1861 = vmatpush2.msra.mxu0 0.0
    %1862 = vmatprep.subr.mxu0 0.0
    %1863 = vmatpush2.msra.mxu0 0.0
    %1864 = vmatprep.subr.mxu0 0.0
    %1865 = vmatpush2.msra.mxu0 0.0
    %1866 = vmatprep.subr.mxu0 0.0
    %1867 = vmatpush2.msra.mxu0 0.0
    %1868 = vmatprep.subr.mxu0 0.0
    %1869 = vmatpush2.msra.mxu0 0.0
    %1870 = vmatprep.subr.mxu0 0.0
    %1871 = vmatpush2.msra.mxu0 0.0
    %1872 = vmatprep.subr.mxu0 0.0
    %1873 = vmatpush2.msra.mxu0 0.0
    %1874 = vmatprep.mubr.f32.mxu0 0.0
    %1875 = vmatmul.mubr.f32.gmra.mxu0 %v1808
    %v1876 = vpop.f32.mrf.mxu0
    %v1877 = vadd.f32 0.0, %v1876
    %v1878 = vpop.f32.mrf.mxu0
    %1879 = vdwg.mxu0
    %1881 = vrot.lane.b32.xlu0 %v1807, 32
    %v1882 = vpop.permute.xlu0 %1881
    %v1883 = vsel %vm49, %v1882, 0
    %1885 = vmatprep.subr.mxu0 0.0
    %1886 = vmatpush1.msra.mxu0 0.0
    %1887 = vmatprep.subr.mxu0 0.0
    %1888 = vmatpush1.msra.mxu0 0.0
    %1889 = vmatprep.subr.mxu0 0.0
    %1890 = vmatpush1.msra.mxu0 0.0
    %1891 = vmatprep.subr.mxu0 0.0
    %1892 = vmatpush1.msra.mxu0 0.0
    %1893 = vmatprep.subr.mxu0 0.0
    %1894 = vmatpush1.msra.mxu0 0.0
    %1895 = vmatprep.subr.mxu0 0.0
    %1896 = vmatpush1.msra.mxu0 0.0
    %1897 = vmatprep.subr.mxu0 0.0
    %1898 = vmatpush1.msra.mxu0 0.0
    %1899 = vmatprep.subr.mxu0 0.0
    %1900 = vmatpush1.msra.mxu0 0.0
    %1901 = vmatprep.subr.mxu0 0.0
    %1902 = vmatpush1.msra.mxu0 0.0
    %1903 = vmatprep.subr.mxu0 0.0
    %1904 = vmatpush1.msra.mxu0 0.0
    %1905 = vmatprep.subr.mxu0 0.0
    %1906 = vmatpush1.msra.mxu0 0.0
    %1907 = vmatprep.subr.mxu0 0.0
    %1908 = vmatpush1.msra.mxu0 0.0
    %1909 = vmatprep.subr.mxu0 0.0
    %1910 = vmatpush1.msra.mxu0 %v37
    %1911 = vmatprep.subr.mxu0 0.0
    %1912 = vmatpush1.msra.mxu0 %v36
    %1913 = vmatprep.subr.mxu0 0.0
    %1914 = vmatpush1.msra.mxu0 %v35
    %1915 = vmatprep.subr.mxu0 0.0
    %1916 = vmatpush1.msra.mxu0 %v34
    %1917 = vmatprep.subr.mxu0 0.0
    %1918 = vmatpush2.msra.mxu0 0.0
    %1919 = vmatprep.subr.mxu0 0.0
    %1920 = vmatpush2.msra.mxu0 0.0
    %1921 = vmatprep.subr.mxu0 0.0
    %1922 = vmatpush2.msra.mxu0 0.0
    %1923 = vmatprep.subr.mxu0 0.0
    %1924 = vmatpush2.msra.mxu0 0.0
    %1925 = vmatprep.subr.mxu0 0.0
    %1926 = vmatpush2.msra.mxu0 0.0
    %1927 = vmatprep.subr.mxu0 0.0
    %1928 = vmatpush2.msra.mxu0 0.0
    %1929 = vmatprep.subr.mxu0 0.0
    %1930 = vmatpush2.msra.mxu0 0.0
    %1931 = vmatprep.subr.mxu0 0.0
    %1932 = vmatpush2.msra.mxu0 0.0
    %1933 = vmatprep.subr.mxu0 0.0
    %1934 = vmatpush2.msra.mxu0 0.0
    %1935 = vmatprep.subr.mxu0 0.0
    %1936 = vmatpush2.msra.mxu0 0.0
    %1937 = vmatprep.subr.mxu0 0.0
    %1938 = vmatpush2.msra.mxu0 0.0
    %1939 = vmatprep.subr.mxu0 0.0
    %1940 = vmatpush2.msra.mxu0 0.0
    %1941 = vmatprep.subr.mxu0 0.0
    %1942 = vmatpush2.msra.mxu0 0.0
    %1943 = vmatprep.subr.mxu0 0.0
    %1944 = vmatpush2.msra.mxu0 0.0
    %1945 = vmatprep.subr.mxu0 0.0
    %1946 = vmatpush2.msra.mxu0 0.0
    %1947 = vmatprep.subr.mxu0 0.0
    %1948 = vmatpush2.msra.mxu0 0.0
    %1949 = vmatprep.mubr.f32.mxu0 0.0
    %1950 = vmatmul.mubr.f32.gmra.mxu0 %v1883
    %v1951 = vpop.f32.mrf.mxu0
    %v1952 = vadd.f32 %v1877, %v1951
    %v1953 = vpop.f32.mrf.mxu0
    %1954 = vdwg.mxu0
    %v1955 = vadd.f32 %v1952, %v42
    %v1956 = vtanh.pop %v1955
    %v1957 = vxor.u32 %v1955, 2147483648
    %v1958 = vmul.f32 %v1957, 1.442695
    %v1959 = vpow.pop %v1958
    %v1960 = vadd.f32 %v1959, 1.0
    %v1961 = vrcp.pop %v1960
    %v1962 = vmul.f32 1.0, %v1961
    %v1963 = vsel %vm47, %v1956, %v1962
    %v1964 = vmul.f32 %v1963, %v1697
    %1966 = vrot.lane.b32.xlu0 %v1963, 64
    %v1967 = vpop.permute.xlu0 %1966
    %v1969 = vmul.f32 %v1963, %v1967
    %1971 = vrot.lane.b32.xlu0 %v1969, 32
    %v1972 = vpop.permute.xlu0 %1971
    %v1974 = vadd.f32 %v1964, %v1972
    %v1975 = vtanh.pop %v1974
    %1977 = vrot.lane.b32.xlu0 %v1975, 64
    %v1978 = vpop.permute.xlu0 %1977
    %v1980 = vmul.f32 %v1963, %v1978
    %1982 = vrot.lane.b32.xlu0 %v1980, 32
    %v1983 = vpop.permute.xlu0 %1982
    %s1985 = scalar_lea.vmem [#allocation2], 48
    %1986 = vst.msk [vmem:[%s1985] sm:$0xff] %vm49, %v1983
    %s1987 = scalar_lea.vmem %s0, 56
    %v1988 = vld [vmem:[%s1987] sm:$0xff]
    %1989 = vmatprep.subr.mxu0 0.0
    %1990 = vmatpush1.msra.mxu0 0.0
    %1991 = vmatprep.subr.mxu0 0.0
    %1992 = vmatpush1.msra.mxu0 0.0
    %1993 = vmatprep.subr.mxu0 0.0
    %1994 = vmatpush1.msra.mxu0 0.0
    %1995 = vmatprep.subr.mxu0 0.0
    %1996 = vmatpush1.msra.mxu0 0.0
    %1997 = vmatprep.subr.mxu0 0.0
    %1998 = vmatpush1.msra.mxu0 0.0
    %1999 = vmatprep.subr.mxu0 0.0
    %2000 = vmatpush1.msra.mxu0 0.0
    %2001 = vmatprep.subr.mxu0 0.0
    %2002 = vmatpush1.msra.mxu0 0.0
    %2003 = vmatprep.subr.mxu0 0.0
    %2004 = vmatpush1.msra.mxu0 0.0
    %2005 = vmatprep.subr.mxu0 0.0
    %2006 = vmatpush1.msra.mxu0 0.0
    %2007 = vmatprep.subr.mxu0 0.0
    %2008 = vmatpush1.msra.mxu0 0.0
    %2009 = vmatprep.subr.mxu0 0.0
    %2010 = vmatpush1.msra.mxu0 0.0
    %2011 = vmatprep.subr.mxu0 0.0
    %2012 = vmatpush1.msra.mxu0 0.0
    %2013 = vmatprep.subr.mxu0 0.0
    %2014 = vmatpush1.msra.mxu0 %v33
    %2015 = vmatprep.subr.mxu0 0.0
    %2016 = vmatpush1.msra.mxu0 %v32
    %2017 = vmatprep.subr.mxu0 0.0
    %2018 = vmatpush1.msra.mxu0 %v31
    %2019 = vmatprep.subr.mxu0 0.0
    %2020 = vmatpush1.msra.mxu0 %v30
    %2021 = vmatprep.subr.mxu0 0.0
    %2022 = vmatpush2.msra.mxu0 0.0
    %2023 = vmatprep.subr.mxu0 0.0
    %2024 = vmatpush2.msra.mxu0 0.0
    %2025 = vmatprep.subr.mxu0 0.0
    %2026 = vmatpush2.msra.mxu0 0.0
    %2027 = vmatprep.subr.mxu0 0.0
    %2028 = vmatpush2.msra.mxu0 0.0
    %2029 = vmatprep.subr.mxu0 0.0
    %2030 = vmatpush2.msra.mxu0 0.0
    %2031 = vmatprep.subr.mxu0 0.0
    %2032 = vmatpush2.msra.mxu0 0.0
    %2033 = vmatprep.subr.mxu0 0.0
    %2034 = vmatpush2.msra.mxu0 0.0
    %2035 = vmatprep.subr.mxu0 0.0
    %2036 = vmatpush2.msra.mxu0 0.0
    %2037 = vmatprep.subr.mxu0 0.0
    %2038 = vmatpush2.msra.mxu0 0.0
    %2039 = vmatprep.subr.mxu0 0.0
    %2040 = vmatpush2.msra.mxu0 0.0
    %2041 = vmatprep.subr.mxu0 0.0
    %2042 = vmatpush2.msra.mxu0 0.0
    %2043 = vmatprep.subr.mxu0 0.0
    %2044 = vmatpush2.msra.mxu0 0.0
    %2045 = vmatprep.subr.mxu0 0.0
    %2046 = vmatpush2.msra.mxu0 0.0
    %2047 = vmatprep.subr.mxu0 0.0
    %2048 = vmatpush2.msra.mxu0 0.0
    %2049 = vmatprep.subr.mxu0 0.0
    %2050 = vmatpush2.msra.mxu0 0.0
    %2051 = vmatprep.subr.mxu0 0.0
    %2052 = vmatpush2.msra.mxu0 0.0
    %2053 = vmatprep.mubr.f32.mxu0 0.0
    %2054 = vmatmul.mubr.f32.gmra.mxu0 %v1883
    %v2055 = vpop.f32.mrf.mxu0
    %v2056 = vadd.f32 0.0, %v2055
    %v2057 = vpop.f32.mrf.mxu0
    %2058 = vdwg.mxu0
    %v2059 = vadd.f32 %v1988, %v2056
    %v2060 = vtanh.pop %v2059
    %v2061 = vxor.u32 %v2059, 2147483648
    %v2062 = vmul.f32 %v2061, 1.442695
    %v2063 = vpow.pop %v2062
    %v2064 = vadd.f32 %v2063, 1.0
    %v2065 = vrcp.pop %v2064
    %v2066 = vmul.f32 1.0, %v2065
    %v2067 = vsel %vm47, %v2060, %v2066
    %v2068 = vmul.f32 %v2067, %v1801
    %2070 = vrot.lane.b32.xlu0 %v2067, 64
    %v2071 = vpop.permute.xlu0 %2070
    %v2073 = vmul.f32 %v2067, %v2071
    %2075 = vrot.lane.b32.xlu0 %v2073, 32
    %v2076 = vpop.permute.xlu0 %2075
    %v2078 = vadd.f32 %v2068, %v2076
    %v2079 = vtanh.pop %v2078
    %2081 = vrot.lane.b32.xlu0 %v2079, 64
    %v2082 = vpop.permute.xlu0 %2081
    %v2084 = vmul.f32 %v2067, %v2082
    %v2085 = vsel %vm49, %v1983, 0
    %2087 = vmatprep.subr.mxu0 0.0
    %2088 = vmatpush1.msra.mxu0 0.0
    %2089 = vmatprep.subr.mxu0 0.0
    %2090 = vmatpush1.msra.mxu0 0.0
    %2091 = vmatprep.subr.mxu0 0.0
    %2092 = vmatpush1.msra.mxu0 0.0
    %2093 = vmatprep.subr.mxu0 0.0
    %2094 = vmatpush1.msra.mxu0 0.0
    %2095 = vmatprep.subr.mxu0 0.0
    %2096 = vmatpush1.msra.mxu0 0.0
    %2097 = vmatprep.subr.mxu0 0.0
    %2098 = vmatpush1.msra.mxu0 0.0
    %2099 = vmatprep.subr.mxu0 0.0
    %2100 = vmatpush1.msra.mxu0 0.0
    %2101 = vmatprep.subr.mxu0 0.0
    %2102 = vmatpush1.msra.mxu0 0.0
    %2103 = vmatprep.subr.mxu0 0.0
    %2104 = vmatpush1.msra.mxu0 0.0
    %2105 = vmatprep.subr.mxu0 0.0
    %2106 = vmatpush1.msra.mxu0 0.0
    %2107 = vmatprep.subr.mxu0 0.0
    %2108 = vmatpush1.msra.mxu0 0.0
    %2109 = vmatprep.subr.mxu0 0.0
    %2110 = vmatpush1.msra.mxu0 0.0
    %2111 = vmatprep.subr.mxu0 0.0
    %2112 = vmatpush1.msra.mxu0 %v41
    %2113 = vmatprep.subr.mxu0 0.0
    %2114 = vmatpush1.msra.mxu0 %v40
    %2115 = vmatprep.subr.mxu0 0.0
    %2116 = vmatpush1.msra.mxu0 %v39
    %2117 = vmatprep.subr.mxu0 0.0
    %2118 = vmatpush1.msra.mxu0 %v38
    %2119 = vmatprep.subr.mxu0 0.0
    %2120 = vmatpush2.msra.mxu0 0.0
    %2121 = vmatprep.subr.mxu0 0.0
    %2122 = vmatpush2.msra.mxu0 0.0
    %2123 = vmatprep.subr.mxu0 0.0
    %2124 = vmatpush2.msra.mxu0 0.0
    %2125 = vmatprep.subr.mxu0 0.0
    %2126 = vmatpush2.msra.mxu0 0.0
    %2127 = vmatprep.subr.mxu0 0.0
    %2128 = vmatpush2.msra.mxu0 0.0
    %2129 = vmatprep.subr.mxu0 0.0
    %2130 = vmatpush2.msra.mxu0 0.0
    %2131 = vmatprep.subr.mxu0 0.0
    %2132 = vmatpush2.msra.mxu0 0.0
    %2133 = vmatprep.subr.mxu0 0.0
    %2134 = vmatpush2.msra.mxu0 0.0
    %2135 = vmatprep.subr.mxu0 0.0
    %2136 = vmatpush2.msra.mxu0 0.0
    %2137 = vmatprep.subr.mxu0 0.0
    %2138 = vmatpush2.msra.mxu0 0.0
    %2139 = vmatprep.subr.mxu0 0.0
    %2140 = vmatpush2.msra.mxu0 0.0
    %2141 = vmatprep.subr.mxu0 0.0
    %2142 = vmatpush2.msra.mxu0 0.0
    %2143 = vmatprep.subr.mxu0 0.0
    %2144 = vmatpush2.msra.mxu0 0.0
    %2145 = vmatprep.subr.mxu0 0.0
    %2146 = vmatpush2.msra.mxu0 0.0
    %2147 = vmatprep.subr.mxu0 0.0
    %2148 = vmatpush2.msra.mxu0 0.0
    %2149 = vmatprep.subr.mxu0 0.0
    %2150 = vmatpush2.msra.mxu0 0.0
    %2151 = vmatprep.mubr.f32.mxu0 0.0
    %2152 = vmatmul.mubr.f32.gmra.mxu0 %v2085
    %v2153 = vpop.f32.mrf.mxu0
    %v2154 = vadd.f32 0.0, %v2153
    %v2155 = vpop.f32.mrf.mxu0
    %2156 = vdwg.mxu0
    %2158 = vrot.lane.b32.xlu0 %v2084, 32
    %v2159 = vpop.permute.xlu0 %2158
    %v2160 = vsel %vm49, %v2159, 0
    %2162 = vmatprep.subr.mxu0 0.0
    %2163 = vmatpush1.msra.mxu0 0.0
    %2164 = vmatprep.subr.mxu0 0.0
    %2165 = vmatpush1.msra.mxu0 0.0
    %2166 = vmatprep.subr.mxu0 0.0
    %2167 = vmatpush1.msra.mxu0 0.0
    %2168 = vmatprep.subr.mxu0 0.0
    %2169 = vmatpush1.msra.mxu0 0.0
    %2170 = vmatprep.subr.mxu0 0.0
    %2171 = vmatpush1.msra.mxu0 0.0
    %2172 = vmatprep.subr.mxu0 0.0
    %2173 = vmatpush1.msra.mxu0 0.0
    %2174 = vmatprep.subr.mxu0 0.0
    %2175 = vmatpush1.msra.mxu0 0.0
    %2176 = vmatprep.subr.mxu0 0.0
    %2177 = vmatpush1.msra.mxu0 0.0
    %2178 = vmatprep.subr.mxu0 0.0
    %2179 = vmatpush1.msra.mxu0 0.0
    %2180 = vmatprep.subr.mxu0 0.0
    %2181 = vmatpush1.msra.mxu0 0.0
    %2182 = vmatprep.subr.mxu0 0.0
    %2183 = vmatpush1.msra.mxu0 0.0
    %2184 = vmatprep.subr.mxu0 0.0
    %2185 = vmatpush1.msra.mxu0 0.0
    %2186 = vmatprep.subr.mxu0 0.0
    %2187 = vmatpush1.msra.mxu0 %v37
    %2188 = vmatprep.subr.mxu0 0.0
    %2189 = vmatpush1.msra.mxu0 %v36
    %2190 = vmatprep.subr.mxu0 0.0
    %2191 = vmatpush1.msra.mxu0 %v35
    %2192 = vmatprep.subr.mxu0 0.0
    %2193 = vmatpush1.msra.mxu0 %v34
    %2194 = vmatprep.subr.mxu0 0.0
    %2195 = vmatpush2.msra.mxu0 0.0
    %2196 = vmatprep.subr.mxu0 0.0
    %2197 = vmatpush2.msra.mxu0 0.0
    %2198 = vmatprep.subr.mxu0 0.0
    %2199 = vmatpush2.msra.mxu0 0.0
    %2200 = vmatprep.subr.mxu0 0.0
    %2201 = vmatpush2.msra.mxu0 0.0
    %2202 = vmatprep.subr.mxu0 0.0
    %2203 = vmatpush2.msra.mxu0 0.0
    %2204 = vmatprep.subr.mxu0 0.0
    %2205 = vmatpush2.msra.mxu0 0.0
    %2206 = vmatprep.subr.mxu0 0.0
    %2207 = vmatpush2.msra.mxu0 0.0
    %2208 = vmatprep.subr.mxu0 0.0
    %2209 = vmatpush2.msra.mxu0 0.0
    %2210 = vmatprep.subr.mxu0 0.0
    %2211 = vmatpush2.msra.mxu0 0.0
    %2212 = vmatprep.subr.mxu0 0.0
    %2213 = vmatpush2.msra.mxu0 0.0
    %2214 = vmatprep.subr.mxu0 0.0
    %2215 = vmatpush2.msra.mxu0 0.0
    %2216 = vmatprep.subr.mxu0 0.0
    %2217 = vmatpush2.msra.mxu0 0.0
    %2218 = vmatprep.subr.mxu0 0.0
    %2219 = vmatpush2.msra.mxu0 0.0
    %2220 = vmatprep.subr.mxu0 0.0
    %2221 = vmatpush2.msra.mxu0 0.0
    %2222 = vmatprep.subr.mxu0 0.0
    %2223 = vmatpush2.msra.mxu0 0.0
    %2224 = vmatprep.subr.mxu0 0.0
    %2225 = vmatpush2.msra.mxu0 0.0
    %2226 = vmatprep.mubr.f32.mxu0 0.0
    %2227 = vmatmul.mubr.f32.gmra.mxu0 %v2160
    %v2228 = vpop.f32.mrf.mxu0
    %v2229 = vadd.f32 %v2154, %v2228
    %v2230 = vpop.f32.mrf.mxu0
    %2231 = vdwg.mxu0
    %v2232 = vadd.f32 %v2229, %v42
    %v2233 = vtanh.pop %v2232
    %v2234 = vxor.u32 %v2232, 2147483648
    %v2235 = vmul.f32 %v2234, 1.442695
    %v2236 = vpow.pop %v2235
    %v2237 = vadd.f32 %v2236, 1.0
    %v2238 = vrcp.pop %v2237
    %v2239 = vmul.f32 1.0, %v2238
    %v2240 = vsel %vm47, %v2233, %v2239
    %v2241 = vmul.f32 %v2240, %v1974
    %2243 = vrot.lane.b32.xlu0 %v2240, 64
    %v2244 = vpop.permute.xlu0 %2243
    %v2246 = vmul.f32 %v2240, %v2244
    %2248 = vrot.lane.b32.xlu0 %v2246, 32
    %v2249 = vpop.permute.xlu0 %2248
    %v2251 = vadd.f32 %v2241, %v2249
    %v2252 = vtanh.pop %v2251
    %2254 = vrot.lane.b32.xlu0 %v2252, 64
    %v2255 = vpop.permute.xlu0 %2254
    %v2257 = vmul.f32 %v2240, %v2255
    %2259 = vrot.lane.b32.xlu0 %v2257, 32
    %v2260 = vpop.permute.xlu0 %2259
    %s2262 = scalar_lea.vmem [#allocation2], 56
    %2263 = vst.msk [vmem:[%s2262] sm:$0xff] %vm49, %v2260
    %s2264 = scalar_lea.vmem %s0, 64
    %v2265 = vld [vmem:[%s2264] sm:$0xff]
    %2266 = vmatprep.subr.mxu0 0.0
    %2267 = vmatpush1.msra.mxu0 0.0
    %2268 = vmatprep.subr.mxu0 0.0
    %2269 = vmatpush1.msra.mxu0 0.0
    %2270 = vmatprep.subr.mxu0 0.0
    %2271 = vmatpush1.msra.mxu0 0.0
    %2272 = vmatprep.subr.mxu0 0.0
    %2273 = vmatpush1.msra.mxu0 0.0
    %2274 = vmatprep.subr.mxu0 0.0
    %2275 = vmatpush1.msra.mxu0 0.0
    %2276 = vmatprep.subr.mxu0 0.0
    %2277 = vmatpush1.msra.mxu0 0.0
    %2278 = vmatprep.subr.mxu0 0.0
    %2279 = vmatpush1.msra.mxu0 0.0
    %2280 = vmatprep.subr.mxu0 0.0
    %2281 = vmatpush1.msra.mxu0 0.0
    %2282 = vmatprep.subr.mxu0 0.0
    %2283 = vmatpush1.msra.mxu0 0.0
    %2284 = vmatprep.subr.mxu0 0.0
    %2285 = vmatpush1.msra.mxu0 0.0
    %2286 = vmatprep.subr.mxu0 0.0
    %2287 = vmatpush1.msra.mxu0 0.0
    %2288 = vmatprep.subr.mxu0 0.0
    %2289 = vmatpush1.msra.mxu0 0.0
    %2290 = vmatprep.subr.mxu0 0.0
    %2291 = vmatpush1.msra.mxu0 %v33
    %2292 = vmatprep.subr.mxu0 0.0
    %2293 = vmatpush1.msra.mxu0 %v32
    %2294 = vmatprep.subr.mxu0 0.0
    %2295 = vmatpush1.msra.mxu0 %v31
    %2296 = vmatprep.subr.mxu0 0.0
    %2297 = vmatpush1.msra.mxu0 %v30
    %2298 = vmatprep.subr.mxu0 0.0
    %2299 = vmatpush2.msra.mxu0 0.0
    %2300 = vmatprep.subr.mxu0 0.0
    %2301 = vmatpush2.msra.mxu0 0.0
    %2302 = vmatprep.subr.mxu0 0.0
    %2303 = vmatpush2.msra.mxu0 0.0
    %2304 = vmatprep.subr.mxu0 0.0
    %2305 = vmatpush2.msra.mxu0 0.0
    %2306 = vmatprep.subr.mxu0 0.0
    %2307 = vmatpush2.msra.mxu0 0.0
    %2308 = vmatprep.subr.mxu0 0.0
    %2309 = vmatpush2.msra.mxu0 0.0
    %2310 = vmatprep.subr.mxu0 0.0
    %2311 = vmatpush2.msra.mxu0 0.0
    %2312 = vmatprep.subr.mxu0 0.0
    %2313 = vmatpush2.msra.mxu0 0.0
    %2314 = vmatprep.subr.mxu0 0.0
    %2315 = vmatpush2.msra.mxu0 0.0
    %2316 = vmatprep.subr.mxu0 0.0
    %2317 = vmatpush2.msra.mxu0 0.0
    %2318 = vmatprep.subr.mxu0 0.0
    %2319 = vmatpush2.msra.mxu0 0.0
    %2320 = vmatprep.subr.mxu0 0.0
    %2321 = vmatpush2.msra.mxu0 0.0
    %2322 = vmatprep.subr.mxu0 0.0
    %2323 = vmatpush2.msra.mxu0 0.0
    %2324 = vmatprep.subr.mxu0 0.0
    %2325 = vmatpush2.msra.mxu0 0.0
    %2326 = vmatprep.subr.mxu0 0.0
    %2327 = vmatpush2.msra.mxu0 0.0
    %2328 = vmatprep.subr.mxu0 0.0
    %2329 = vmatpush2.msra.mxu0 0.0
    %2330 = vmatprep.mubr.f32.mxu0 0.0
    %2331 = vmatmul.mubr.f32.gmra.mxu0 %v2160
    %v2332 = vpop.f32.mrf.mxu0
    %v2333 = vadd.f32 0.0, %v2332
    %v2334 = vpop.f32.mrf.mxu0
    %2335 = vdwg.mxu0
    %v2336 = vadd.f32 %v2265, %v2333
    %v2337 = vtanh.pop %v2336
    %v2338 = vxor.u32 %v2336, 2147483648
    %v2339 = vmul.f32 %v2338, 1.442695
    %v2340 = vpow.pop %v2339
    %v2341 = vadd.f32 %v2340, 1.0
    %v2342 = vrcp.pop %v2341
    %v2343 = vmul.f32 1.0, %v2342
    %v2344 = vsel %vm47, %v2337, %v2343
    %v2345 = vmul.f32 %v2344, %v2078
    %2347 = vrot.lane.b32.xlu0 %v2344, 64
    %v2348 = vpop.permute.xlu0 %2347
    %v2350 = vmul.f32 %v2344, %v2348
    %2352 = vrot.lane.b32.xlu0 %v2350, 32
    %v2353 = vpop.permute.xlu0 %2352
    %v2355 = vadd.f32 %v2345, %v2353
    %v2356 = vtanh.pop %v2355
    %2358 = vrot.lane.b32.xlu0 %v2356, 64
    %v2359 = vpop.permute.xlu0 %2358
    %v2361 = vmul.f32 %v2344, %v2359
    %v2362 = vsel %vm49, %v2260, 0
    %2364 = vmatprep.subr.mxu0 0.0
    %2365 = vmatpush1.msra.mxu0 0.0
    %2366 = vmatprep.subr.mxu0 0.0
    %2367 = vmatpush1.msra.mxu0 0.0
    %2368 = vmatprep.subr.mxu0 0.0
    %2369 = vmatpush1.msra.mxu0 0.0
    %2370 = vmatprep.subr.mxu0 0.0
    %2371 = vmatpush1.msra.mxu0 0.0
    %2372 = vmatprep.subr.mxu0 0.0
    %2373 = vmatpush1.msra.mxu0 0.0
    %2374 = vmatprep.subr.mxu0 0.0
    %2375 = vmatpush1.msra.mxu0 0.0
    %2376 = vmatprep.subr.mxu0 0.0
    %2377 = vmatpush1.msra.mxu0 0.0
    %2378 = vmatprep.subr.mxu0 0.0
    %2379 = vmatpush1.msra.mxu0 0.0
    %2380 = vmatprep.subr.mxu0 0.0
    %2381 = vmatpush1.msra.mxu0 0.0
    %2382 = vmatprep.subr.mxu0 0.0
    %2383 = vmatpush1.msra.mxu0 0.0
    %2384 = vmatprep.subr.mxu0 0.0
    %2385 = vmatpush1.msra.mxu0 0.0
    %2386 = vmatprep.subr.mxu0 0.0
    %2387 = vmatpush1.msra.mxu0 0.0
    %2388 = vmatprep.subr.mxu0 0.0
    %2389 = vmatpush1.msra.mxu0 %v41
    %2390 = vmatprep.subr.mxu0 0.0
    %2391 = vmatpush1.msra.mxu0 %v40
    %2392 = vmatprep.subr.mxu0 0.0
    %2393 = vmatpush1.msra.mxu0 %v39
    %2394 = vmatprep.subr.mxu0 0.0
    %2395 = vmatpush1.msra.mxu0 %v38
    %2396 = vmatprep.subr.mxu0 0.0
    %2397 = vmatpush2.msra.mxu0 0.0
    %2398 = vmatprep.subr.mxu0 0.0
    %2399 = vmatpush2.msra.mxu0 0.0
    %2400 = vmatprep.subr.mxu0 0.0
    %2401 = vmatpush2.msra.mxu0 0.0
    %2402 = vmatprep.subr.mxu0 0.0
    %2403 = vmatpush2.msra.mxu0 0.0
    %2404 = vmatprep.subr.mxu0 0.0
    %2405 = vmatpush2.msra.mxu0 0.0
    %2406 = vmatprep.subr.mxu0 0.0
    %2407 = vmatpush2.msra.mxu0 0.0
    %2408 = vmatprep.subr.mxu0 0.0
    %2409 = vmatpush2.msra.mxu0 0.0
    %2410 = vmatprep.subr.mxu0 0.0
    %2411 = vmatpush2.msra.mxu0 0.0
    %2412 = vmatprep.subr.mxu0 0.0
    %2413 = vmatpush2.msra.mxu0 0.0
    %2414 = vmatprep.subr.mxu0 0.0
    %2415 = vmatpush2.msra.mxu0 0.0
    %2416 = vmatprep.subr.mxu0 0.0
    %2417 = vmatpush2.msra.mxu0 0.0
    %2418 = vmatprep.subr.mxu0 0.0
    %2419 = vmatpush2.msra.mxu0 0.0
    %2420 = vmatprep.subr.mxu0 0.0
    %2421 = vmatpush2.msra.mxu0 0.0
    %2422 = vmatprep.subr.mxu0 0.0
    %2423 = vmatpush2.msra.mxu0 0.0
    %2424 = vmatprep.subr.mxu0 0.0
    %2425 = vmatpush2.msra.mxu0 0.0
    %2426 = vmatprep.subr.mxu0 0.0
    %2427 = vmatpush2.msra.mxu0 0.0
    %2428 = vmatprep.mubr.f32.mxu0 0.0
    %2429 = vmatmul.mubr.f32.gmra.mxu0 %v2362
    %v2430 = vpop.f32.mrf.mxu0
    %v2431 = vadd.f32 0.0, %v2430
    %v2432 = vpop.f32.mrf.mxu0
    %2433 = vdwg.mxu0
    %2435 = vrot.lane.b32.xlu0 %v2361, 32
    %v2436 = vpop.permute.xlu0 %2435
    %v2437 = vsel %vm49, %v2436, 0
    %2439 = vmatprep.subr.mxu0 0.0
    %2440 = vmatpush1.msra.mxu0 0.0
    %2441 = vmatprep.subr.mxu0 0.0
    %2442 = vmatpush1.msra.mxu0 0.0
    %2443 = vmatprep.subr.mxu0 0.0
    %2444 = vmatpush1.msra.mxu0 0.0
    %2445 = vmatprep.subr.mxu0 0.0
    %2446 = vmatpush1.msra.mxu0 0.0
    %2447 = vmatprep.subr.mxu0 0.0
    %2448 = vmatpush1.msra.mxu0 0.0
    %2449 = vmatprep.subr.mxu0 0.0
    %2450 = vmatpush1.msra.mxu0 0.0
    %2451 = vmatprep.subr.mxu0 0.0
    %2452 = vmatpush1.msra.mxu0 0.0
    %2453 = vmatprep.subr.mxu0 0.0
    %2454 = vmatpush1.msra.mxu0 0.0
    %2455 = vmatprep.subr.mxu0 0.0
    %2456 = vmatpush1.msra.mxu0 0.0
    %2457 = vmatprep.subr.mxu0 0.0
    %2458 = vmatpush1.msra.mxu0 0.0
    %2459 = vmatprep.subr.mxu0 0.0
    %2460 = vmatpush1.msra.mxu0 0.0
    %2461 = vmatprep.subr.mxu0 0.0
    %2462 = vmatpush1.msra.mxu0 0.0
    %2463 = vmatprep.subr.mxu0 0.0
    %2464 = vmatpush1.msra.mxu0 %v37
    %2465 = vmatprep.subr.mxu0 0.0
    %2466 = vmatpush1.msra.mxu0 %v36
    %2467 = vmatprep.subr.mxu0 0.0
    %2468 = vmatpush1.msra.mxu0 %v35
    %2469 = vmatprep.subr.mxu0 0.0
    %2470 = vmatpush1.msra.mxu0 %v34
    %2471 = vmatprep.subr.mxu0 0.0
    %2472 = vmatpush2.msra.mxu0 0.0
    %2473 = vmatprep.subr.mxu0 0.0
    %2474 = vmatpush2.msra.mxu0 0.0
    %2475 = vmatprep.subr.mxu0 0.0
    %2476 = vmatpush2.msra.mxu0 0.0
    %2477 = vmatprep.subr.mxu0 0.0
    %2478 = vmatpush2.msra.mxu0 0.0
    %2479 = vmatprep.subr.mxu0 0.0
    %2480 = vmatpush2.msra.mxu0 0.0
    %2481 = vmatprep.subr.mxu0 0.0
    %2482 = vmatpush2.msra.mxu0 0.0
    %2483 = vmatprep.subr.mxu0 0.0
    %2484 = vmatpush2.msra.mxu0 0.0
    %2485 = vmatprep.subr.mxu0 0.0
    %2486 = vmatpush2.msra.mxu0 0.0
    %2487 = vmatprep.subr.mxu0 0.0
    %2488 = vmatpush2.msra.mxu0 0.0
    %2489 = vmatprep.subr.mxu0 0.0
    %2490 = vmatpush2.msra.mxu0 0.0
    %2491 = vmatprep.subr.mxu0 0.0
    %2492 = vmatpush2.msra.mxu0 0.0
    %2493 = vmatprep.subr.mxu0 0.0
    %2494 = vmatpush2.msra.mxu0 0.0
    %2495 = vmatprep.subr.mxu0 0.0
    %2496 = vmatpush2.msra.mxu0 0.0
    %2497 = vmatprep.subr.mxu0 0.0
    %2498 = vmatpush2.msra.mxu0 0.0
    %2499 = vmatprep.subr.mxu0 0.0
    %2500 = vmatpush2.msra.mxu0 0.0
    %2501 = vmatprep.subr.mxu0 0.0
    %2502 = vmatpush2.msra.mxu0 0.0
    %2503 = vmatprep.mubr.f32.mxu0 0.0
    %2504 = vmatmul.mubr.f32.gmra.mxu0 %v2437
    %v2505 = vpop.f32.mrf.mxu0
    %v2506 = vadd.f32 %v2431, %v2505
    %v2507 = vpop.f32.mrf.mxu0
    %2508 = vdwg.mxu0
    %v2509 = vadd.f32 %v2506, %v42
    %v2510 = vtanh.pop %v2509
    %v2511 = vxor.u32 %v2509, 2147483648
    %v2512 = vmul.f32 %v2511, 1.442695
    %v2513 = vpow.pop %v2512
    %v2514 = vadd.f32 %v2513, 1.0
    %v2515 = vrcp.pop %v2514
    %v2516 = vmul.f32 1.0, %v2515
    %v2517 = vsel %vm47, %v2510, %v2516
    %v2518 = vmul.f32 %v2517, %v2251
    %2520 = vrot.lane.b32.xlu0 %v2517, 64
    %v2521 = vpop.permute.xlu0 %2520
    %v2523 = vmul.f32 %v2517, %v2521
    %2525 = vrot.lane.b32.xlu0 %v2523, 32
    %v2526 = vpop.permute.xlu0 %2525
    %v2528 = vadd.f32 %v2518, %v2526
    %v2529 = vtanh.pop %v2528
    %2531 = vrot.lane.b32.xlu0 %v2529, 64
    %v2532 = vpop.permute.xlu0 %2531
    %v2534 = vmul.f32 %v2517, %v2532
    %2536 = vrot.lane.b32.xlu0 %v2534, 32
    %v2537 = vpop.permute.xlu0 %2536
    %s2539 = scalar_lea.vmem [#allocation2], 64
    %2540 = vst.msk [vmem:[%s2539] sm:$0xff] %vm49, %v2537
  $region33: #{decoder_rnn_forward.1} parent=0 // pred_fallthru
    _
  %v2541 = vld [vmem:[#allocation2 + $0x8] sm:$0xff]
  %v2542 = vld [vmem:[#allocation2 + $0x10] sm:$0xff]
  %v2543 = vld [vmem:[#allocation2 + $0x18] sm:$0xff]
  %v2544 = vld [vmem:[#allocation2 + $0x20] sm:$0xff]
  %v2545 = vld [vmem:[#allocation2 + $0x28] sm:$0xff]
  %v2546 = vld [vmem:[#allocation2 + $0x30] sm:$0xff]
  %v2547 = vld [vmem:[#allocation2 + $0x38] sm:$0xff]
  %v2548 = vld [vmem:[#allocation2 + $0x40] sm:$0xff]
  %v2549 = vld [vmem:[%s5] sm:$0xff]
  %v2550 = vld [vmem:[%s5 + $0x8] sm:$0xff]
  %v2551 = vld [vmem:[%s5 + $0x10] sm:$0xff]
  %v2552 = vld [vmem:[%s5 + $0x18] sm:$0xff]
  %v2553 = vld [vmem:[%s6] sm:$0x1]
  %v2555 = vlaneseq
  %v2556 = vshrl.u32 %v2555, 7
  %v2557 = vsub.s32 0, %v2556
  %v2558 = vrot.slane %v2553, %v2557
  %vm2560 = vcmask 261120
  %v2562 = vsel %vm2560, %v2541, 0
  %v2565 = vsel %vm2560, %v2542, 0
  %v2568 = vsel %vm2560, %v2543, 0
  %v2571 = vsel %vm2560, %v2544, 0
  %v2574 = vsel %vm2560, %v2545, 0
  %v2577 = vsel %vm2560, %v2546, 0
  %v2580 = vsel %vm2560, %v2547, 0
  %v2583 = vsel %vm2560, %v2548, 0
  %2585 = vmatprep.subr.mxu0 0.0
  %2586 = vmatpush1.msra.mxu0 0.0
  %2587 = vmatprep.subr.mxu0 0.0
  %2588 = vmatpush1.msra.mxu0 0.0
  %2589 = vmatprep.subr.mxu0 0.0
  %2590 = vmatpush1.msra.mxu0 0.0
  %2591 = vmatprep.subr.mxu0 0.0
  %2592 = vmatpush1.msra.mxu0 0.0
  %2593 = vmatprep.subr.mxu0 0.0
  %2594 = vmatpush1.msra.mxu0 0.0
  %2595 = vmatprep.subr.mxu0 0.0
  %2596 = vmatpush1.msra.mxu0 0.0
  %2597 = vmatprep.subr.mxu0 0.0
  %2598 = vmatpush1.msra.mxu0 0.0
  %2599 = vmatprep.subr.mxu0 0.0
  %2600 = vmatpush1.msra.mxu0 0.0
  %2601 = vmatprep.subr.mxu0 0.0
  %2602 = vmatpush1.msra.mxu0 0.0
  %2603 = vmatprep.subr.mxu0 0.0
  %2604 = vmatpush1.msra.mxu0 0.0
  %2605 = vmatprep.subr.mxu0 0.0
  %2606 = vmatpush1.msra.mxu0 0.0
  %2607 = vmatprep.subr.mxu0 0.0
  %2608 = vmatpush1.msra.mxu0 0.0
  %2609 = vmatprep.subr.mxu0 0.0
  %2610 = vmatpush1.msra.mxu0 %v2552
  %2611 = vmatprep.subr.mxu0 0.0
  %2612 = vmatpush1.msra.mxu0 %v2551
  %2613 = vmatprep.subr.mxu0 0.0
  %2614 = vmatpush1.msra.mxu0 %v2550
  %2615 = vmatprep.subr.mxu0 0.0
  %2616 = vmatpush1.msra.mxu0 %v2549
  %2617 = vmatprep.subr.mxu0 0.0
  %2618 = vmatpush2.msra.mxu0 0.0
  %2619 = vmatprep.subr.mxu0 0.0
  %2620 = vmatpush2.msra.mxu0 0.0
  %2621 = vmatprep.subr.mxu0 0.0
  %2622 = vmatpush2.msra.mxu0 0.0
  %2623 = vmatprep.subr.mxu0 0.0
  %2624 = vmatpush2.msra.mxu0 0.0
  %2625 = vmatprep.subr.mxu0 0.0
  %2626 = vmatpush2.msra.mxu0 0.0
  %2627 = vmatprep.subr.mxu0 0.0
  %2628 = vmatpush2.msra.mxu0 0.0
  %2629 = vmatprep.subr.mxu0 0.0
  %2630 = vmatpush2.msra.mxu0 0.0
  %2631 = vmatprep.subr.mxu0 0.0
  %2632 = vmatpush2.msra.mxu0 0.0
  %2633 = vmatprep.subr.mxu0 0.0
  %2634 = vmatpush2.msra.mxu0 0.0
  %2635 = vmatprep.subr.mxu0 0.0
  %2636 = vmatpush2.msra.mxu0 0.0
  %2637 = vmatprep.subr.mxu0 0.0
  %2638 = vmatpush2.msra.mxu0 0.0
  %2639 = vmatprep.subr.mxu0 0.0
  %2640 = vmatpush2.msra.mxu0 0.0
  %2641 = vmatprep.subr.mxu0 0.0
  %2642 = vmatpush2.msra.mxu0 0.0
  %2643 = vmatprep.subr.mxu0 0.0
  %2644 = vmatpush2.msra.mxu0 0.0
  %2645 = vmatprep.subr.mxu0 0.0
  %2646 = vmatpush2.msra.mxu0 0.0
  %2647 = vmatprep.subr.mxu0 0.0
  %2648 = vmatpush2.msra.mxu0 0.0
  %2649 = vmatprep.mubr.f32.mxu0 0.0
  %2650 = vmatmul.mubr.f32.gmra.mxu0 %v2562
  %v2651 = vpop.f32.mrf.mxu0
  %v2652 = vadd.f32 %v2558, %v2651
  %v2653 = vpop.f32.mrf.mxu0
  %2654 = vmatprep.mubr.f32.mxu0 0.0
  %2655 = vmatmul.mubr.f32.gmra.mxu0 %v2565
  %v2656 = vpop.f32.mrf.mxu0
  %v2657 = vadd.f32 %v2558, %v2656
  %v2658 = vpop.f32.mrf.mxu0
  %2659 = vmatprep.mubr.f32.mxu0 0.0
  %2660 = vmatmul.mubr.f32.gmra.mxu0 %v2568
  %v2661 = vpop.f32.mrf.mxu0
  %v2662 = vadd.f32 %v2558, %v2661
  %v2663 = vpop.f32.mrf.mxu0
  %2664 = vmatprep.mubr.f32.mxu0 0.0
  %2665 = vmatmul.mubr.f32.gmra.mxu0 %v2571
  %v2666 = vpop.f32.mrf.mxu0
  %v2667 = vadd.f32 %v2558, %v2666
  %v2668 = vpop.f32.mrf.mxu0
  %2669 = vmatprep.mubr.f32.mxu0 0.0
  %2670 = vmatmul.mubr.f32.gmra.mxu0 %v2574
  %v2671 = vpop.f32.mrf.mxu0
  %v2672 = vadd.f32 %v2558, %v2671
  %v2673 = vpop.f32.mrf.mxu0
  %2674 = vmatprep.mubr.f32.mxu0 0.0
  %2675 = vmatmul.mubr.f32.gmra.mxu0 %v2577
  %v2676 = vpop.f32.mrf.mxu0
  %v2677 = vadd.f32 %v2558, %v2676
  %v2678 = vpop.f32.mrf.mxu0
  %2679 = vmatprep.mubr.f32.mxu0 0.0
  %2680 = vmatmul.mubr.f32.gmra.mxu0 %v2580
  %v2681 = vpop.f32.mrf.mxu0
  %v2682 = vadd.f32 %v2558, %v2681
  %v2683 = vpop.f32.mrf.mxu0
  %2684 = vmatprep.mubr.f32.mxu0 0.0
  %2685 = vmatmul.mubr.f32.gmra.mxu0 %v2583
  %v2686 = vpop.f32.mrf.mxu0
  %v2687 = vadd.f32 %v2558, %v2686
  %v2688 = vpop.f32.mrf.mxu0
  %2689 = vdwg.mxu0
  %2690 = vst [vmem:[%s7] sm:$0xff] %v2652
  %2691 = vst [vmem:[%s7 + $0x8] sm:$0xff] %v2657
  %2692 = vst [vmem:[%s7 + $0x10] sm:$0xff] %v2662
  %2693 = vst [vmem:[%s7 + $0x18] sm:$0xff] %v2667
  %2694 = vst [vmem:[%s7 + $0x20] sm:$0xff] %v2672
  %2695 = vst [vmem:[%s7 + $0x28] sm:$0xff] %v2677
  %2696 = vst [vmem:[%s7 + $0x30] sm:$0xff] %v2682
  %2697 = vst [vmem:[%s7 + $0x38] sm:$0xff] %v2687
  // Predicated region
  $region34: #{decoder_rnn_forward.1} parent=0 // pred_check
    _
  $region35: #{decoder_rnn_forward.1} parent=0 // pred_check_branch
    %2699 = sbr.rel (0) target = $region37
  $region36: #{decoder_rnn_forward.1} parent=0 // pred_region
    _
  $region37: #{decoder_rnn_forward.1} parent=0 // pred_fallthru
    _
  // Predicated region
  $region38: #{decoder_rnn_forward.1} parent=0 // pred_check
    _
  $region39: #{decoder_rnn_forward.1} parent=0 // pred_check_branch
    %2701 = sbr.rel (0) target = $region41
  $region40: #{decoder_rnn_forward.1} parent=0 // pred_region
    _
  $region41: #{decoder_rnn_forward.1} parent=0 // pred_fallthru
    _

</llo_original>
